<compile_context>
chip_gen: v7x
topology: tpu7x:2x2x1
jax: 0.10.0
libtpu: 0.0.40
codegen_flags: <defaults>
</compile_context>

<pallas_src>
import jax
import jax.numpy as jnp
from jax.experimental import pallas as pl
from jax.experimental.pallas import tpu as pltpu

C_IN = 1024
C_MID = 512
C_OUT = 3
C_OUT_PAD = 8            # second-matmul rows padded to one sublane group
BN_EPS = 1e-5
T_HW_MAX = 1024          # max pixels per tile (lane axis); multiple of 128


def _head_kernel(x_ref, w1_ref, s1_ref, b1_ref, w2_ref, b2_ref, o_ref):
    # x_ref : (1, C_IN, t_hw) f32   -- NCHW-native tile, pixels on the lane axis
    # w1_ref: (C_MID, C_IN) bf16    -- 1x1 conv #1 weight in W @ x layout
    # s1_ref, b1_ref: (C_MID, 1) f32 -- conv1 bias + eval-mode BN folded (scale/shift)
    # w2_ref: (C_OUT_PAD, C_MID) bf16 -- 1x1 conv #2 weight, zero-padded to 8 rows
    # b2_ref: (C_OUT, 1) f32
    # o_ref : (1, C_OUT, t_hw) f32  -- NCHW output tile (lane-dense store)
    x = x_ref[0].astype(jnp.bfloat16)                                    # cast in-register
    h = jnp.dot(w1_ref[...], x, preferred_element_type=jnp.float32)     # (C_MID, t_hw)
    h = h * s1_ref[...] + b1_ref[...]                                    # Conv1 bias + BN (eval)
    h = jnp.maximum(h, 0.0)                                              # ReLU
    o = jnp.dot(w2_ref[...], h.astype(jnp.bfloat16),
                preferred_element_type=jnp.float32)                      # (C_OUT_PAD, t_hw)
    o_ref[0] = (o[:C_OUT, :] + b2_ref[...]).astype(o_ref.dtype)


def _choose_hw_tile(hw):
    """Pixel tile: full H*W if it fits, else a lane-aligned 1024-pixel tile."""
    if hw <= T_HW_MAX:
        return hw                       # full-extent block (any size is legal)
    return T_HW_MAX                     # multiple of 128; ragged last tile is fine


@jax.jit
def yolov10_head(x_nchw, params):
    """x_nchw: (N, 1024, H, W) float32 -> (N, 3, H, W) float32 (replacement head)."""
    w1, b1, gamma, beta, mean, var, w2, b2 = params
    N, C, H, W = x_nchw.shape
    assert C == C_IN
    HW = H * W
    t_hw = _choose_hw_tile(HW)
    n_hw = pl.cdiv(HW, t_hw)

    # Free reshape: merge contiguous trailing spatial dims; stays NCHW.
    x3d = x_nchw.reshape(N, C_IN, HW)

    # Fold Conv1 bias + eval-mode BatchNorm into one f32 scale/shift (per channel):
    #   y = gamma * ((x@W1 + b1) - mean) / sqrt(var + eps) + beta = (x@W1)*s + b
    inv_std = 1.0 / jnp.sqrt(var + BN_EPS)
    s1_eff = (gamma * inv_std).reshape(C_MID, 1).astype(jnp.float32)
    b1_eff = ((b1 - mean) * gamma * inv_std + beta).reshape(C_MID, 1).astype(jnp.float32)

    # Conv weights (C_out, C_in, 1, 1) -> W @ x layout (C_out, C_in), bf16 for the MXU.
    w1_m = w1.reshape(C_MID, C_IN).astype(jnp.bfloat16)                  # (512, 1024)
    w2_m = jnp.zeros((C_OUT_PAD, C_MID), jnp.bfloat16).at[:C_OUT].set(
        w2.reshape(C_OUT, C_MID).astype(jnp.bfloat16))                   # (8, 512)
    b2_m = b2.reshape(C_OUT, 1).astype(jnp.float32)

    M = N * HW
    cost = pl.CostEstimate(
        flops=2 * M * C_IN * C_MID + 2 * M * C_MID * C_OUT_PAD,
        transcendentals=0,
        bytes_accessed=(4 * M * C_IN                # x read (f32)
                        + 2 * C_IN * C_MID          # w1 (bf16)
                        + 2 * C_OUT_PAD * C_MID     # w2 (bf16)
                        + 4 * M * C_OUT),           # output write (f32)
    )

    out3d = pl.pallas_call(
        _head_kernel,
        out_shape=jax.ShapeDtypeStruct((N, C_OUT, HW), jnp.float32),
        grid_spec=pltpu.PrefetchScalarGridSpec(
            num_scalar_prefetch=0,
            grid=(N, n_hw),
            in_specs=[
                pl.BlockSpec((1, C_IN, t_hw), lambda i, j: (i, 0, j)),
                pl.BlockSpec((C_MID, C_IN), lambda i, j: (0, 0)),
                pl.BlockSpec((C_MID, 1), lambda i, j: (0, 0)),
                pl.BlockSpec((C_MID, 1), lambda i, j: (0, 0)),
                pl.BlockSpec((C_OUT_PAD, C_MID), lambda i, j: (0, 0)),
                pl.BlockSpec((C_OUT, 1), lambda i, j: (0, 0)),
            ],
            out_specs=pl.BlockSpec((1, C_OUT, t_hw), lambda i, j: (i, 0, j)),
        ),
        compiler_params=pltpu.CompilerParams(
            dimension_semantics=("parallel", "parallel"),
        ),
        cost_estimate=cost,
    )(x3d, w1_m, s1_eff, b1_eff, w2_m, b2_m)

    # Free reshape back to (N, 3, H, W); already NCHW, no transpose/slice passes.
    return out3d.reshape(N, C_OUT, H, W)


def init_params(key):
    """Deterministic synthetic parameters matching the module's __init__ shapes."""
    ks = jax.random.split(key, 8)
    w1 = jax.random.normal(ks[0], (C_MID, C_IN, 1, 1), jnp.float32) * 0.02
    b1 = jax.random.normal(ks[1], (C_MID,), jnp.float32) * 0.02
    gamma = 1.0 + 0.1 * jax.random.normal(ks[2], (C_MID,), jnp.float32)
    beta = 0.1 * jax.random.normal(ks[3], (C_MID,), jnp.float32)
    mean = 0.1 * jax.random.normal(ks[4], (C_MID,), jnp.float32)
    var = jnp.abs(jax.random.normal(ks[5], (C_MID,), jnp.float32)) + 0.5
    w2 = jax.random.normal(ks[6], (C_OUT, C_MID, 1, 1), jnp.float32) * 0.02
    b2 = jax.random.normal(ks[7], (C_OUT,), jnp.float32) * 0.02
    return (w1, b1, gamma, beta, mean, var, w2, b2)


def reference_head(x_nchw, params):
    """Plain-JAX f32 reference of the same head (for correctness check)."""
    w1, b1, gamma, beta, mean, var, w2, b2 = params
    N, C, H, W = x_nchw.shape
    x2d = jnp.transpose(x_nchw, (0, 2, 3, 1)).reshape(-1, C_IN)
    h = x2d @ jnp.transpose(w1.reshape(C_MID, C_IN)) + b1
    h = (h - mean) / jnp.sqrt(var + BN_EPS) * gamma + beta
    h = jnp.maximum(h, 0.0)
    o = h @ jnp.transpose(w2.reshape(C_OUT, C_MID)) + b2
    return jnp.transpose(o.reshape(N, H, W, C_OUT), (0, 3, 1, 2))


if __name__ == "__main__":
    key = jax.random.PRNGKey(0)
    k_x, k_p = jax.random.split(key)

    # Small feature-map input consistent with the replaced head (1024 channels).
    N, H, W = 2, 8, 8
    x = jax.random.normal(k_x, (N, C_IN, H, W), jnp.float32)
    params = init_params(k_p)

    out = jax.block_until_ready(yolov10_head(x, params))
    ref = jax.block_until_ready(reference_head(x, params))

    assert out.shape == (N, C_OUT, H, W)
    # Both matmuls take bf16 inputs (f32 accumulation) -> relaxed tolerance vs
    # the f32 reference; this precision tradeoff is intentional (documented).
    assert jnp.allclose(out, ref, atol=5e-2, rtol=5e-2)

    print("KERNEL_OK")
</pallas_src>

<mosaic_0001>
module attributes {stable_mosaic.version = 11 : i64} {
  func.func @_head_kernel(%arg0: i32, %arg1: i32, %arg2: memref<1x1024x64xf32, #tpu.memory_space<vmem>>, %arg3: memref<512x1024xbf16, #tpu.memory_space<vmem>>, %arg4: memref<512x1xf32, #tpu.memory_space<vmem>>, %arg5: memref<512x1xf32, #tpu.memory_space<vmem>>, %arg6: memref<8x512xbf16, #tpu.memory_space<vmem>>, %arg7: memref<3x1xf32, #tpu.memory_space<vmem>>, %arg8: memref<1x3x64xf32, #tpu.memory_space<vmem>>) attributes {dimension_semantics = [#tpu.dimension_semantics<parallel>, #tpu.dimension_semantics<parallel>], iteration_bounds = array<i64: 2, 1>, scalar_prefetch = 0 : i64, scratch_operands = 0 : i64, tpu.core_type = #tpu.core_type<tc>, window_params = [{transform_indices = @transform_0, window_bounds = array<i64: 1, 1024, 64>}, {pipeline_mode = #tpu.pipeline_mode<synchronous>, transform_indices = @transform_1, window_bounds = array<i64: 512, 1024>}, {pipeline_mode = #tpu.pipeline_mode<synchronous>, transform_indices = @transform_2, window_bounds = array<i64: 512, 1>}, {pipeline_mode = #tpu.pipeline_mode<synchronous>, transform_indices = @transform_3, window_bounds = array<i64: 512, 1>}, {pipeline_mode = #tpu.pipeline_mode<synchronous>, transform_indices = @transform_4, window_bounds = array<i64: 8, 512>}, {pipeline_mode = #tpu.pipeline_mode<synchronous>, transform_indices = @transform_5, window_bounds = array<i64: 3, 1>}, {transform_indices = @transform_6, window_bounds = array<i64: 1, 3, 64>}]} {
    %c0 = arith.constant 0 : index
    %c0_0 = arith.constant 0 : index
    %c0_1 = arith.constant 0 : index
    %0 = vector.load %arg2[%c0, %c0_0, %c0_1] : memref<1x1024x64xf32, #tpu.memory_space<vmem>>, vector<1x1024x64xf32>
    %1 = vector.shape_cast %0 : vector<1x1024x64xf32> to vector<1024x64xf32>
    %2 = arith.truncf %1 : vector<1024x64xf32> to vector<1024x64xbf16>
    %c0_2 = arith.constant 0 : index
    %c0_3 = arith.constant 0 : index
    %3 = vector.load %arg3[%c0_2, %c0_3] : memref<512x1024xbf16, #tpu.memory_space<vmem>>, vector<512x1024xbf16>
    %cst = arith.constant dense<0.000000e+00> : vector<512x64xf32>
    %4 = tpu.matmul %3, %2, %cst {dimension_numbers = #tpu.dot_dimension_numbers<[1], [0], [0], [1], [0, 0, 1, 1], [], []>} : vector<512x1024xbf16>, vector<1024x64xbf16>, vector<512x64xf32> -> vector<512x64xf32>
    %c0_4 = arith.constant 0 : index
    %c0_5 = arith.constant 0 : index
    %5 = vector.load %arg4[%c0_4, %c0_5] : memref<512x1xf32, #tpu.memory_space<vmem>>, vector<512x1xf32>
    %6 = vector.broadcast %5 : vector<512x1xf32> to vector<512x64xf32>
    %7 = arith.mulf %4, %6 : vector<512x64xf32>
    %c0_6 = arith.constant 0 : index
    %c0_7 = arith.constant 0 : index
    %8 = vector.load %arg5[%c0_6, %c0_7] : memref<512x1xf32, #tpu.memory_space<vmem>>, vector<512x1xf32>
    %9 = vector.broadcast %8 : vector<512x1xf32> to vector<512x64xf32>
    %10 = arith.addf %7, %9 : vector<512x64xf32>
    %cst_8 = arith.constant 0.000000e+00 : f32
    %11 = vector.broadcast %cst_8 : f32 to vector<512x64xf32>
    %12 = arith.maximumf %10, %11 : vector<512x64xf32>
    %c0_9 = arith.constant 0 : index
    %c0_10 = arith.constant 0 : index
    %13 = vector.load %arg6[%c0_9, %c0_10] : memref<8x512xbf16, #tpu.memory_space<vmem>>, vector<8x512xbf16>
    %14 = arith.truncf %12 : vector<512x64xf32> to vector<512x64xbf16>
    %cst_11 = arith.constant dense<0.000000e+00> : vector<8x64xf32>
    %15 = tpu.matmul %13, %14, %cst_11 {dimension_numbers = #tpu.dot_dimension_numbers<[1], [0], [0], [1], [0, 0, 1, 1], [], []>} : vector<8x512xbf16>, vector<512x64xbf16>, vector<8x64xf32> -> vector<8x64xf32>
    %16 = vector.extract_strided_slice %15 {offsets = [0, 0], sizes = [3, 64], strides = [1, 1]} : vector<8x64xf32> to vector<3x64xf32>
    %c0_12 = arith.constant 0 : index
    %c0_13 = arith.constant 0 : index
    %17 = vector.load %arg7[%c0_12, %c0_13] : memref<3x1xf32, #tpu.memory_space<vmem>>, vector<3x1xf32>
    %18 = vector.broadcast %17 : vector<3x1xf32> to vector<3x64xf32>
    %19 = arith.addf %16, %18 : vector<3x64xf32>
    %c0_14 = arith.constant 0 : index
    %c0_15 = arith.constant 0 : index
    %c0_16 = arith.constant 0 : index
    %20 = vector.load %arg8[%c0_14, %c0_15, %c0_16] : memref<1x3x64xf32, #tpu.memory_space<vmem>>, vector<1x3x64xf32>
    %21 = vector.shape_cast %20 : vector<1x3x64xf32> to vector<3x64xf32>
    %22 = vector.shape_cast %19 : vector<3x64xf32> to vector<1x3x64xf32>
    tpu.vector_store %arg8[%c0_14, %c0_15, %c0_16], %22 {strides = array<i32>} : memref<1x3x64xf32, #tpu.memory_space<vmem>>, vector<1x3x64xf32>,
    return
  }
  func.func @transform_0(%arg0: i32, %arg1: i32) -> (i32, i32, i32) {
    %c0_i32 = arith.constant 0 : i32
    %c0_i32_0 = arith.constant 0 : i32
    return %arg0, %c0_i32, %arg1 : i32, i32, i32
  }
  func.func @transform_1(%arg0: i32, %arg1: i32) -> (i32, i32) {
    %c0_i32 = arith.constant 0 : i32
    %c0_i32_0 = arith.constant 0 : i32
    %c0_i32_1 = arith.constant 0 : i32
    return %c0_i32, %c0_i32_0 : i32, i32
  }
  func.func @transform_2(%arg0: i32, %arg1: i32) -> (i32, i32) {
    %c0_i32 = arith.constant 0 : i32
    %c0_i32_0 = arith.constant 0 : i32
    %c0_i32_1 = arith.constant 0 : i32
    return %c0_i32, %c0_i32_0 : i32, i32
  }
  func.func @transform_3(%arg0: i32, %arg1: i32) -> (i32, i32) {
    %c0_i32 = arith.constant 0 : i32
    %c0_i32_0 = arith.constant 0 : i32
    %c0_i32_1 = arith.constant 0 : i32
    return %c0_i32, %c0_i32_0 : i32, i32
  }
  func.func @transform_4(%arg0: i32, %arg1: i32) -> (i32, i32) {
    %c0_i32 = arith.constant 0 : i32
    %c0_i32_0 = arith.constant 0 : i32
    %c0_i32_1 = arith.constant 0 : i32
    return %c0_i32, %c0_i32_0 : i32, i32
  }
  func.func @transform_5(%arg0: i32, %arg1: i32) -> (i32, i32) {
    %c0_i32 = arith.constant 0 : i32
    %c0_i32_0 = arith.constant 0 : i32
    %c0_i32_1 = arith.constant 0 : i32
    return %c0_i32, %c0_i32_0 : i32, i32
  }
  func.func @transform_6(%arg0: i32, %arg1: i32) -> (i32, i32, i32) {
    %c0_i32 = arith.constant 0 : i32
    %c0_i32_0 = arith.constant 0 : i32
    return %arg0, %c0_i32, %arg1 : i32, i32, i32
  }
}

</mosaic_0001>

<llo_original>
// kernel: yolov10_head.1
$region0: #{yolov10_head.1}
  #allocation0 [shape = 'u32[]', space=smem, size = 0x4, offset = 0x4, fixed_abs, tag = 'smem constant byte address 0x4 - core index']
  #allocation1 [shape = 'u32[144,128]{1,0:T(1,128)}', space=vmem, size = 0x12000, scoped, tag = 'internal scratch']
  %s0 = inlined_call_operand.vmem [shape: f32[2,1024,64], index: 0, kind: input, shape index: {}]
  %s1 = inlined_call_operand.vmem [shape: bf16[512,1024], index: 1, kind: input, shape index: {}]
  %s2 = inlined_call_operand.vmem [shape: f32[512,1], index: 2, kind: input, shape index: {}]
  %s3 = inlined_call_operand.vmem [shape: f32[512,1], index: 3, kind: input, shape index: {}]
  %s4 = inlined_call_operand.vmem [shape: bf16[8,512], index: 4, kind: input, shape index: {}]
  %s5 = inlined_call_operand.vmem [shape: f32[3,1], index: 5, kind: input, shape index: {}]
  %s6 = inlined_call_operand.vmem [shape: f32[2,3,64], index: 6, kind: output, shape index: {}]
  %s7 = sld [smem:[#allocation0]]
  $region57: #{yolov10_head.1} parent=0
    _
  %s9 = ssub.s32 1, %s7
  %s10 = scalar_select 0, %s9, %s7
  loop: start=0, step=1, limit=4
  $region2: #{yolov10_head.1} parent=0 // loop_pre_header
    _
  $region3: #{yolov10_head.1} parent=0 // loop_header
    %s12 = sphi 0, %s16
    %p13 = scmp.ge.s32.totalorder %s12, 4
    %s19 = sphi 0, %s31
    %s20 = sphi 0, %s27
    %s21 = sphi 0, %s19
    %s22 = sphi 0, %s20
    %s23 = sphi 0, %s21
    %s24 = sphi 0, %s22
    %s36 = sphi 0, %s38
    %s39 = sphi 0, %s36
    %s40 = sphi 0, %s39
    %s56 = sphi 0, %s40
    %s60 = sphi 0, %s60
    %s62 = sphi 0, %s60
    %s63 = sphi 0, %s62
    %s77 = sphi 0, %s63
    %s81 = sphi 0, %s81
    %s83 = sphi 0, %s81
    %s84 = sphi 0, %s83
    %s98 = sphi 0, %s84
    %s102 = sphi 0, %s102
    %s104 = sphi 0, %s102
    %s105 = sphi 0, %s104
    %s119 = sphi 0, %s105
    %s123 = sphi 0, %s123
    %s125 = sphi 0, %s123
    %s126 = sphi 0, %s125
    %s140 = sphi 0, %s126
    %s144 = sphi 0, %s144
    %s146 = sphi 0, %s144
    %s147 = sphi 0, %s146
    %s161 = sphi 0, %s147
    %s169 = sphi 0, %s171
    %s172 = sphi 0, %s169
    %s173 = sphi 0, %s172
    %s189 = sphi 0, %s173
  $region4: #{yolov10_head.1} parent=0 // loop_header_branch
    %15 = sbr.rel (%p13) target = $region8
  $region5: #{yolov10_head.1} parent=0 // loop_body
    %s17 = ssub.s32 %s12, 1
    %s18 = ssub.s32 %s12, 2
    %s25 = sadd.s32 1, %s20
    %p26 = scmp.ge.s32.totalorder %s25, 1
    %s27 = scalar_select %p26, 0, %s25
    %s28 = sadd.s32 1, %s19
    %s29 = scalar_select %p26, %s28, %s19
    %p30 = scmp.ge.s32.totalorder %s29, 2
    %s31 = scalar_select %p30, 0, %s29
    %s32 = ssub.s32 %s19, %s31
    %s33 = ssub.s32 %s20, %s27
    %s34 = sor.u32 %s32, %s33
    %p35 = scmp.eq.s32.totalorder %s34, 0
    %s37 = sadd.s32 %s36, 1
    %s38 = scalar_select %p35, %s36, %s37
    %p41 = pneg %p35
    %p42 = scmp.eq.s32.totalorder %s12, 1
    %p43 = por %p41, %p42
    %p44 = scmp.ne.s32.totalorder %s36, %s39
    %p45 = scmp.eq.s32.totalorder %s12, 0
    %p46 = por %p44, %p45
    %p47 = scmp.ne.s32.totalorder %s36, %s39
    %p48 = scmp.eq.s32.totalorder %s17, 1
    %p49 = por %p47, %p48
    %p50 = scmp.ne.s32.totalorder %s39, %s40
    %p51 = scmp.eq.s32.totalorder %s17, 0
    %p52 = por %p50, %p51
    %p53 = scmp.ne.s32.totalorder %s39, %s40
    %p54 = scmp.eq.s32.totalorder %s18, 1
    %p55 = por %p53, %p54
    %p57 = scmp.ne.s32.totalorder %s40, %s56
    %p58 = scmp.eq.s32.totalorder %s18, 0
    %p59 = por %p57, %p58
    %s61 = sadd.s32 %s60, 1
    %p64 = scmp.eq.s32.totalorder %s12, 1
    %p65 = scmp.ne.s32.totalorder %s60, %s62
    %p66 = scmp.eq.s32.totalorder %s12, 0
    %p67 = por %p65, %p66
    %p68 = scmp.ne.s32.totalorder %s60, %s62
    %p69 = scmp.eq.s32.totalorder %s17, 1
    %p70 = por %p68, %p69
    %p71 = scmp.ne.s32.totalorder %s62, %s63
    %p72 = scmp.eq.s32.totalorder %s17, 0
    %p73 = por %p71, %p72
    %p74 = scmp.ne.s32.totalorder %s62, %s63
    %p75 = scmp.eq.s32.totalorder %s18, 1
    %p76 = por %p74, %p75
    %p78 = scmp.ne.s32.totalorder %s63, %s77
    %p79 = scmp.eq.s32.totalorder %s18, 0
    %p80 = por %p78, %p79
    %s82 = sadd.s32 %s81, 1
    %p85 = scmp.eq.s32.totalorder %s12, 1
    %p86 = scmp.ne.s32.totalorder %s81, %s83
    %p87 = scmp.eq.s32.totalorder %s12, 0
    %p88 = por %p86, %p87
    %p89 = scmp.ne.s32.totalorder %s81, %s83
    %p90 = scmp.eq.s32.totalorder %s17, 1
    %p91 = por %p89, %p90
    %p92 = scmp.ne.s32.totalorder %s83, %s84
    %p93 = scmp.eq.s32.totalorder %s17, 0
    %p94 = por %p92, %p93
    %p95 = scmp.ne.s32.totalorder %s83, %s84
    %p96 = scmp.eq.s32.totalorder %s18, 1
    %p97 = por %p95, %p96
    %p99 = scmp.ne.s32.totalorder %s84, %s98
    %p100 = scmp.eq.s32.totalorder %s18, 0
    %p101 = por %p99, %p100
    %s103 = sadd.s32 %s102, 1
    %p106 = scmp.eq.s32.totalorder %s12, 1
    %p107 = scmp.ne.s32.totalorder %s102, %s104
    %p108 = scmp.eq.s32.totalorder %s12, 0
    %p109 = por %p107, %p108
    %p110 = scmp.ne.s32.totalorder %s102, %s104
    %p111 = scmp.eq.s32.totalorder %s17, 1
    %p112 = por %p110, %p111
    %p113 = scmp.ne.s32.totalorder %s104, %s105
    %p114 = scmp.eq.s32.totalorder %s17, 0
    %p115 = por %p113, %p114
    %p116 = scmp.ne.s32.totalorder %s104, %s105
    %p117 = scmp.eq.s32.totalorder %s18, 1
    %p118 = por %p116, %p117
    %p120 = scmp.ne.s32.totalorder %s105, %s119
    %p121 = scmp.eq.s32.totalorder %s18, 0
    %p122 = por %p120, %p121
    %s124 = sadd.s32 %s123, 1
    %p127 = scmp.eq.s32.totalorder %s12, 1
    %p128 = scmp.ne.s32.totalorder %s123, %s125
    %p129 = scmp.eq.s32.totalorder %s12, 0
    %p130 = por %p128, %p129
    %p131 = scmp.ne.s32.totalorder %s123, %s125
    %p132 = scmp.eq.s32.totalorder %s17, 1
    %p133 = por %p131, %p132
    %p134 = scmp.ne.s32.totalorder %s125, %s126
    %p135 = scmp.eq.s32.totalorder %s17, 0
    %p136 = por %p134, %p135
    %p137 = scmp.ne.s32.totalorder %s125, %s126
    %p138 = scmp.eq.s32.totalorder %s18, 1
    %p139 = por %p137, %p138
    %p141 = scmp.ne.s32.totalorder %s126, %s140
    %p142 = scmp.eq.s32.totalorder %s18, 0
    %p143 = por %p141, %p142
    %s145 = sadd.s32 %s144, 1
    %p148 = scmp.eq.s32.totalorder %s12, 1
    %p149 = scmp.ne.s32.totalorder %s144, %s146
    %p150 = scmp.eq.s32.totalorder %s12, 0
    %p151 = por %p149, %p150
    %p152 = scmp.ne.s32.totalorder %s144, %s146
    %p153 = scmp.eq.s32.totalorder %s17, 1
    %p154 = por %p152, %p153
    %p155 = scmp.ne.s32.totalorder %s146, %s147
    %p156 = scmp.eq.s32.totalorder %s17, 0
    %p157 = por %p155, %p156
    %p158 = scmp.ne.s32.totalorder %s146, %s147
    %p159 = scmp.eq.s32.totalorder %s18, 1
    %p160 = por %p158, %p159
    %p162 = scmp.ne.s32.totalorder %s147, %s161
    %p163 = scmp.eq.s32.totalorder %s18, 0
    %p164 = por %p162, %p163
    %s165 = ssub.s32 %s19, %s31
    %s166 = ssub.s32 %s20, %s27
    %s167 = sor.u32 %s165, %s166
    %p168 = scmp.eq.s32.totalorder %s167, 0
    %s170 = sadd.s32 %s169, 1
    %s171 = scalar_select %p168, %s169, %s170
    %p174 = pneg %p168
    %p175 = scmp.eq.s32.totalorder %s12, 1
    %p176 = por %p174, %p175
    %p177 = scmp.ne.s32.totalorder %s169, %s172
    %p178 = scmp.eq.s32.totalorder %s12, 0
    %p179 = por %p177, %p178
    %p180 = scmp.ne.s32.totalorder %s169, %s172
    %p181 = scmp.eq.s32.totalorder %s17, 1
    %p182 = por %p180, %p181
    %p183 = scmp.ne.s32.totalorder %s172, %s173
    %p184 = scmp.eq.s32.totalorder %s17, 0
    %p185 = por %p183, %p184
    %p186 = scmp.ne.s32.totalorder %s172, %s173
    %p187 = scmp.eq.s32.totalorder %s18, 1
    %p188 = por %p186, %p187
    %p190 = scmp.ne.s32.totalorder %s173, %s189
    %p191 = scmp.eq.s32.totalorder %s18, 0
    %p192 = por %p190, %p191
    %p193 = scmp.le.s32.totalorder 1, %s12
    %p194 = scmp.lt.s32.totalorder %s12, 3
    %p195 = pnand %p193, %p194
    %p196 = pneg %p195
    // Predicated region
    $region9: #{yolov10_head.1} parent=5 // pred_check
      _
    $region10: #{yolov10_head.1} parent=5 // pred_check_branch
      %198 = sbr.rel (%p195) target = $region12
    $region11: #{yolov10_head.1} parent=5 // pred_region
      %s199 = ssub.s32 %s12, 1
      // Predicated region
      $region13: #{yolov10_head.1} parent=11 // pred_check
        %p200 = pneg %p73
      $region14: #{yolov10_head.1} parent=11 // pred_check_branch
        %202 = sbr.rel (%p200) target = $region16
      $region15: #{yolov10_head.1} parent=11 // pred_region
        _
      $region16: #{yolov10_head.1} parent=11 // pred_fallthru
        _
      // Predicated region
      $region17: #{yolov10_head.1} parent=11 // pred_check
        %p203 = pneg %p94
      $region18: #{yolov10_head.1} parent=11 // pred_check_branch
        %205 = sbr.rel (%p203) target = $region20
      $region19: #{yolov10_head.1} parent=11 // pred_region
        _
      $region20: #{yolov10_head.1} parent=11 // pred_fallthru
        _
      // Predicated region
      $region21: #{yolov10_head.1} parent=11 // pred_check
        %p206 = pneg %p115
      $region22: #{yolov10_head.1} parent=11 // pred_check_branch
        %208 = sbr.rel (%p206) target = $region24
      $region23: #{yolov10_head.1} parent=11 // pred_region
        _
      $region24: #{yolov10_head.1} parent=11 // pred_fallthru
        _
      // Predicated region
      $region25: #{yolov10_head.1} parent=11 // pred_check
        %p209 = pneg %p136
      $region26: #{yolov10_head.1} parent=11 // pred_check_branch
        %211 = sbr.rel (%p209) target = $region28
      $region27: #{yolov10_head.1} parent=11 // pred_region
        _
      $region28: #{yolov10_head.1} parent=11 // pred_fallthru
        _
      // Predicated region
      $region29: #{yolov10_head.1} parent=11 // pred_check
        %p212 = pneg %p157
      $region30: #{yolov10_head.1} parent=11 // pred_check_branch
        %214 = sbr.rel (%p212) target = $region32
      $region31: #{yolov10_head.1} parent=11 // pred_region
        _
      $region32: #{yolov10_head.1} parent=11 // pred_fallthru
        _
    $region12: #{yolov10_head.1} parent=5 // pred_fallthru
      _
    %p215 = scmp.lt.s32.totalorder %s12, 2
    // Predicated region
    $region33: #{yolov10_head.1} parent=5 // pred_check
      %p216 = pneg %p215
    $region34: #{yolov10_head.1} parent=5 // pred_check_branch
      %218 = sbr.rel (%p216) target = $region36
    $region35: #{yolov10_head.1} parent=5 // pred_region
      // Predicated region
      $region37: #{yolov10_head.1} parent=35 // pred_check
        %p219 = pneg %p46
      $region38: #{yolov10_head.1} parent=35 // pred_check_branch
        %221 = sbr.rel (%p219) target = $region40
      $region39: #{yolov10_head.1} parent=35 // pred_region
        %p222 = scmp.lt.s32.totalorder %s19, 1
        %s223 = scalar_select %p222, %s19, 1
        %p224 = scmp.lt.s32.totalorder %s20, 0
        %s225 = scalar_select %p224, %s20, 0
        %s226 = smul.addr %s223, 128
        %s227 = sadd.s32 %s225, %s226
        %s228 = smul.addr %s227, 8
        %s229 = scalar_lea.vmem %s0, %s228
      $region40: #{yolov10_head.1} parent=35 // pred_fallthru
        _
    $region36: #{yolov10_head.1} parent=5 // pred_fallthru
      _
    %p230 = scmp.le.s32.totalorder 1, %s12
    %p231 = scmp.lt.s32.totalorder %s12, 3
    %p232 = pnand %p230, %p231
    %p233 = pneg %p232
    // Predicated region
    $region41: #{yolov10_head.1} parent=5 // pred_check
      _
    $region42: #{yolov10_head.1} parent=5 // pred_check_branch
      %235 = sbr.rel (%p232) target = $region44
    $region43: #{yolov10_head.1} parent=5 // pred_region
      %s236 = ssub.s32 %s12, 1
      %p237 = scmp.lt.s32.totalorder %s21, 1
      %s238 = scalar_select %p237, %s21, 1
      %p239 = scmp.lt.s32.totalorder %s22, 0
      %s240 = scalar_select %p239, %s22, 0
      %s241 = smul.addr %s238, 128
      %s242 = sadd.s32 %s240, %s241
      %s243 = smul.addr %s242, 8
      %s244 = scalar_lea.vmem %s0, %s243
      %p245 = pneg %p52
      %p246 = pneg %p49
      %p247 = pneg %p73
      %p248 = pneg %p70
      %p249 = pneg %p94
      %p250 = pneg %p91
      %p251 = pneg %p115
      %p252 = pneg %p112
      %p253 = pneg %p136
      %p254 = pneg %p133
      %p255 = pneg %p157
      %p256 = pneg %p154
      %p257 = pneg %p185
      %p258 = pneg %p182
      %p259 = scmp.lt.s32.totalorder %s21, 1
      %s260 = scalar_select %p259, %s21, 1
      %p261 = scmp.lt.s32.totalorder %s22, 0
      %s262 = scalar_select %p261, %s22, 0
      %s263 = sadd.s32 %s262, %s260
      %s264 = smul.addr %s263, 4
      %s265 = scalar_lea.vmem %s6, %s264
      %p266 = scmp.lt.s32.totalorder %s21, 1
      %s267 = scalar_select %p266, %s21, 1
      %p268 = scmp.lt.s32.totalorder %s22, 0
      %s269 = scalar_select %p268, %s22, 0
      %s270 = smul.addr %s267, 128
      %s271 = sadd.s32 %s269, %s270
      %s272 = smul.addr %s271, 8
      %s273 = scalar_lea.vmem %s0, %s272
      %p274 = scmp.lt.s32.totalorder %s21, 1
      %s275 = scalar_select %p274, %s21, 1
      %p276 = scmp.lt.s32.totalorder %s22, 0
      %s277 = scalar_select %p276, %s22, 0
      %s278 = sadd.s32 %s277, %s275
      %s279 = smul.addr %s278, 4
      %s280 = scalar_lea.vmem %s6, %s279
      %v282 = vld [vmem:[%s273] sm:$0xff]
      %v283 = vld [vmem:[%s273 + $0x8] sm:$0xff]
      %v284 = vld [vmem:[%s273 + $0x10] sm:$0xff]
      %v285 = vld [vmem:[%s273 + $0x18] sm:$0xff]
      %v286 = vld [vmem:[%s273 + $0x20] sm:$0xff]
      %v287 = vld [vmem:[%s273 + $0x28] sm:$0xff]
      %v288 = vld [vmem:[%s273 + $0x30] sm:$0xff]
      %v289 = vld [vmem:[%s273 + $0x38] sm:$0xff]
      %v290 = vld [vmem:[%s273 + $0x40] sm:$0xff]
      %v291 = vld [vmem:[%s273 + $0x48] sm:$0xff]
      %v292 = vld [vmem:[%s273 + $0x50] sm:$0xff]
      %v293 = vld [vmem:[%s273 + $0x58] sm:$0xff]
      %v294 = vld [vmem:[%s273 + $0x60] sm:$0xff]
      %v295 = vld [vmem:[%s273 + $0x68] sm:$0xff]
      %v296 = vld [vmem:[%s273 + $0x70] sm:$0xff]
      %v297 = vld [vmem:[%s273 + $0x78] sm:$0xff]
      %v298 = vld [vmem:[%s273 + $0x80] sm:$0xff]
      %v299 = vld [vmem:[%s273 + $0x88] sm:$0xff]
      %v300 = vld [vmem:[%s273 + $0x90] sm:$0xff]
      %v301 = vld [vmem:[%s273 + $0x98] sm:$0xff]
      %v302 = vld [vmem:[%s273 + $0xa0] sm:$0xff]
      %v303 = vld [vmem:[%s273 + $0xa8] sm:$0xff]
      %v304 = vld [vmem:[%s273 + $0xb0] sm:$0xff]
      %v305 = vld [vmem:[%s273 + $0xb8] sm:$0xff]
      %v306 = vld [vmem:[%s273 + $0xc0] sm:$0xff]
      %v307 = vld [vmem:[%s273 + $0xc8] sm:$0xff]
      %v308 = vld [vmem:[%s273 + $0xd0] sm:$0xff]
      %v309 = vld [vmem:[%s273 + $0xd8] sm:$0xff]
      %v310 = vld [vmem:[%s273 + $0xe0] sm:$0xff]
      %v311 = vld [vmem:[%s273 + $0xe8] sm:$0xff]
      %v312 = vld [vmem:[%s273 + $0xf0] sm:$0xff]
      %v313 = vld [vmem:[%s273 + $0xf8] sm:$0xff]
      %v314 = vld [vmem:[%s273 + $0x100] sm:$0xff]
      %v315 = vld [vmem:[%s273 + $0x108] sm:$0xff]
      %v316 = vld [vmem:[%s273 + $0x110] sm:$0xff]
      %v317 = vld [vmem:[%s273 + $0x118] sm:$0xff]
      %v318 = vld [vmem:[%s273 + $0x120] sm:$0xff]
      %v319 = vld [vmem:[%s273 + $0x128] sm:$0xff]
      %v320 = vld [vmem:[%s273 + $0x130] sm:$0xff]
      %v321 = vld [vmem:[%s273 + $0x138] sm:$0xff]
      %v322 = vld [vmem:[%s273 + $0x140] sm:$0xff]
      %v323 = vld [vmem:[%s273 + $0x148] sm:$0xff]
      %v324 = vld [vmem:[%s273 + $0x150] sm:$0xff]
      %v325 = vld [vmem:[%s273 + $0x158] sm:$0xff]
      %v326 = vld [vmem:[%s273 + $0x160] sm:$0xff]
      %v327 = vld [vmem:[%s273 + $0x168] sm:$0xff]
      %v328 = vld [vmem:[%s273 + $0x170] sm:$0xff]
      %v329 = vld [vmem:[%s273 + $0x178] sm:$0xff]
      %v330 = vld [vmem:[%s273 + $0x180] sm:$0xff]
      %v331 = vld [vmem:[%s273 + $0x188] sm:$0xff]
      %v332 = vld [vmem:[%s273 + $0x190] sm:$0xff]
      %v333 = vld [vmem:[%s273 + $0x198] sm:$0xff]
      %v334 = vld [vmem:[%s273 + $0x1a0] sm:$0xff]
      %v335 = vld [vmem:[%s273 + $0x1a8] sm:$0xff]
      %v336 = vld [vmem:[%s273 + $0x1b0] sm:$0xff]
      %v337 = vld [vmem:[%s273 + $0x1b8] sm:$0xff]
      %v338 = vld [vmem:[%s273 + $0x1c0] sm:$0xff]
      %v339 = vld [vmem:[%s273 + $0x1c8] sm:$0xff]
      %v340 = vld [vmem:[%s273 + $0x1d0] sm:$0xff]
      %v341 = vld [vmem:[%s273 + $0x1d8] sm:$0xff]
      %v342 = vld [vmem:[%s273 + $0x1e0] sm:$0xff]
      %v343 = vld [vmem:[%s273 + $0x1e8] sm:$0xff]
      %v344 = vld [vmem:[%s273 + $0x1f0] sm:$0xff]
      %v345 = vld [vmem:[%s273 + $0x1f8] sm:$0xff]
      %v346 = vld [vmem:[%s273 + $0x200] sm:$0xff]
      %v347 = vld [vmem:[%s273 + $0x208] sm:$0xff]
      %v348 = vld [vmem:[%s273 + $0x210] sm:$0xff]
      %v349 = vld [vmem:[%s273 + $0x218] sm:$0xff]
      %v350 = vld [vmem:[%s273 + $0x220] sm:$0xff]
      %v351 = vld [vmem:[%s273 + $0x228] sm:$0xff]
      %v352 = vld [vmem:[%s273 + $0x230] sm:$0xff]
      %v353 = vld [vmem:[%s273 + $0x238] sm:$0xff]
      %v354 = vld [vmem:[%s273 + $0x240] sm:$0xff]
      %v355 = vld [vmem:[%s273 + $0x248] sm:$0xff]
      %v356 = vld [vmem:[%s273 + $0x250] sm:$0xff]
      %v357 = vld [vmem:[%s273 + $0x258] sm:$0xff]
      %v358 = vld [vmem:[%s273 + $0x260] sm:$0xff]
      %v359 = vld [vmem:[%s273 + $0x268] sm:$0xff]
      %v360 = vld [vmem:[%s273 + $0x270] sm:$0xff]
      %v361 = vld [vmem:[%s273 + $0x278] sm:$0xff]
      %v362 = vld [vmem:[%s273 + $0x280] sm:$0xff]
      %v363 = vld [vmem:[%s273 + $0x288] sm:$0xff]
      %v364 = vld [vmem:[%s273 + $0x290] sm:$0xff]
      %v365 = vld [vmem:[%s273 + $0x298] sm:$0xff]
      %v366 = vld [vmem:[%s273 + $0x2a0] sm:$0xff]
      %v367 = vld [vmem:[%s273 + $0x2a8] sm:$0xff]
      %v368 = vld [vmem:[%s273 + $0x2b0] sm:$0xff]
      %v369 = vld [vmem:[%s273 + $0x2b8] sm:$0xff]
      %v370 = vld [vmem:[%s273 + $0x2c0] sm:$0xff]
      %v371 = vld [vmem:[%s273 + $0x2c8] sm:$0xff]
      %v372 = vld [vmem:[%s273 + $0x2d0] sm:$0xff]
      %v373 = vld [vmem:[%s273 + $0x2d8] sm:$0xff]
      %v374 = vld [vmem:[%s273 + $0x2e0] sm:$0xff]
      %v375 = vld [vmem:[%s273 + $0x2e8] sm:$0xff]
      %v376 = vld [vmem:[%s273 + $0x2f0] sm:$0xff]
      %v377 = vld [vmem:[%s273 + $0x2f8] sm:$0xff]
      %v378 = vld [vmem:[%s273 + $0x300] sm:$0xff]
      %v379 = vld [vmem:[%s273 + $0x308] sm:$0xff]
      %v380 = vld [vmem:[%s273 + $0x310] sm:$0xff]
      %v381 = vld [vmem:[%s273 + $0x318] sm:$0xff]
      %v382 = vld [vmem:[%s273 + $0x320] sm:$0xff]
      %v383 = vld [vmem:[%s273 + $0x328] sm:$0xff]
      %v384 = vld [vmem:[%s273 + $0x330] sm:$0xff]
      %v385 = vld [vmem:[%s273 + $0x338] sm:$0xff]
      %v386 = vld [vmem:[%s273 + $0x340] sm:$0xff]
      %v387 = vld [vmem:[%s273 + $0x348] sm:$0xff]
      %v388 = vld [vmem:[%s273 + $0x350] sm:$0xff]
      %v389 = vld [vmem:[%s273 + $0x358] sm:$0xff]
      %v390 = vld [vmem:[%s273 + $0x360] sm:$0xff]
      %v391 = vld [vmem:[%s273 + $0x368] sm:$0xff]
      %v392 = vld [vmem:[%s273 + $0x370] sm:$0xff]
      %v393 = vld [vmem:[%s273 + $0x378] sm:$0xff]
      %v394 = vld [vmem:[%s273 + $0x380] sm:$0xff]
      %v395 = vld [vmem:[%s273 + $0x388] sm:$0xff]
      %v396 = vld [vmem:[%s273 + $0x390] sm:$0xff]
      %v397 = vld [vmem:[%s273 + $0x398] sm:$0xff]
      %v398 = vld [vmem:[%s273 + $0x3a0] sm:$0xff]
      %v399 = vld [vmem:[%s273 + $0x3a8] sm:$0xff]
      %v400 = vld [vmem:[%s273 + $0x3b0] sm:$0xff]
      %v401 = vld [vmem:[%s273 + $0x3b8] sm:$0xff]
      %v402 = vld [vmem:[%s273 + $0x3c0] sm:$0xff]
      %v403 = vld [vmem:[%s273 + $0x3c8] sm:$0xff]
      %v404 = vld [vmem:[%s273 + $0x3d0] sm:$0xff]
      %v405 = vld [vmem:[%s273 + $0x3d8] sm:$0xff]
      %v406 = vld [vmem:[%s273 + $0x3e0] sm:$0xff]
      %v407 = vld [vmem:[%s273 + $0x3e8] sm:$0xff]
      %v408 = vld [vmem:[%s273 + $0x3f0] sm:$0xff]
      %v409 = vld [vmem:[%s273 + $0x3f8] sm:$0xff]
      %v410 = vpack.c.bf16 %v283, %v282
      %v411 = vpack.c.bf16 %v285, %v284
      %v412 = vpack.c.bf16 %v287, %v286
      %v413 = vpack.c.bf16 %v289, %v288
      %v414 = vpack.c.bf16 %v291, %v290
      %v415 = vpack.c.bf16 %v293, %v292
      %v416 = vpack.c.bf16 %v295, %v294
      %v417 = vpack.c.bf16 %v297, %v296
      %v418 = vpack.c.bf16 %v299, %v298
      %v419 = vpack.c.bf16 %v301, %v300
      %v420 = vpack.c.bf16 %v303, %v302
      %v421 = vpack.c.bf16 %v305, %v304
      %v422 = vpack.c.bf16 %v307, %v306
      %v423 = vpack.c.bf16 %v309, %v308
      %v424 = vpack.c.bf16 %v311, %v310
      %v425 = vpack.c.bf16 %v313, %v312
      %v426 = vpack.c.bf16 %v315, %v314
      %v427 = vpack.c.bf16 %v317, %v316
      %v428 = vpack.c.bf16 %v319, %v318
      %v429 = vpack.c.bf16 %v321, %v320
      %v430 = vpack.c.bf16 %v323, %v322
      %v431 = vpack.c.bf16 %v325, %v324
      %v432 = vpack.c.bf16 %v327, %v326
      %v433 = vpack.c.bf16 %v329, %v328
      %v434 = vpack.c.bf16 %v331, %v330
      %v435 = vpack.c.bf16 %v333, %v332
      %v436 = vpack.c.bf16 %v335, %v334
      %v437 = vpack.c.bf16 %v337, %v336
      %v438 = vpack.c.bf16 %v339, %v338
      %v439 = vpack.c.bf16 %v341, %v340
      %v440 = vpack.c.bf16 %v343, %v342
      %v441 = vpack.c.bf16 %v345, %v344
      %v442 = vpack.c.bf16 %v347, %v346
      %v443 = vpack.c.bf16 %v349, %v348
      %v444 = vpack.c.bf16 %v351, %v350
      %v445 = vpack.c.bf16 %v353, %v352
      %v446 = vpack.c.bf16 %v355, %v354
      %v447 = vpack.c.bf16 %v357, %v356
      %v448 = vpack.c.bf16 %v359, %v358
      %v449 = vpack.c.bf16 %v361, %v360
      %v450 = vpack.c.bf16 %v363, %v362
      %v451 = vpack.c.bf16 %v365, %v364
      %v452 = vpack.c.bf16 %v367, %v366
      %v453 = vpack.c.bf16 %v369, %v368
      %v454 = vpack.c.bf16 %v371, %v370
      %v455 = vpack.c.bf16 %v373, %v372
      %v456 = vpack.c.bf16 %v375, %v374
      %v457 = vpack.c.bf16 %v377, %v376
      %v458 = vpack.c.bf16 %v379, %v378
      %v459 = vpack.c.bf16 %v381, %v380
      %v460 = vpack.c.bf16 %v383, %v382
      %v461 = vpack.c.bf16 %v385, %v384
      %v462 = vpack.c.bf16 %v387, %v386
      %v463 = vpack.c.bf16 %v389, %v388
      %v464 = vpack.c.bf16 %v391, %v390
      %v465 = vpack.c.bf16 %v393, %v392
      %v466 = vpack.c.bf16 %v395, %v394
      %v467 = vpack.c.bf16 %v397, %v396
      %v468 = vpack.c.bf16 %v399, %v398
      %v469 = vpack.c.bf16 %v401, %v400
      %v470 = vpack.c.bf16 %v403, %v402
      %v471 = vpack.c.bf16 %v405, %v404
      %v472 = vpack.c.bf16 %v407, %v406
      %v473 = vpack.c.bf16 %v409, %v408
      %v474 = vld [vmem:[%s1] sm:$0xff]
      %v475 = vld [vmem:[%s1 + $0x8] sm:$0xff]
      %v476 = vld [vmem:[%s1 + $0x10] sm:$0xff]
      %v477 = vld [vmem:[%s1 + $0x18] sm:$0xff]
      %v478 = vld [vmem:[%s1 + $0x20] sm:$0xff]
      %v479 = vld [vmem:[%s1 + $0x28] sm:$0xff]
      %v480 = vld [vmem:[%s1 + $0x30] sm:$0xff]
      %v481 = vld [vmem:[%s1 + $0x38] sm:$0xff]
      %v482 = vld [vmem:[%s1 + $0x40] sm:$0xff]
      %v483 = vld [vmem:[%s1 + $0x48] sm:$0xff]
      %v484 = vld [vmem:[%s1 + $0x50] sm:$0xff]
      %v485 = vld [vmem:[%s1 + $0x58] sm:$0xff]
      %v486 = vld [vmem:[%s1 + $0x60] sm:$0xff]
      %v487 = vld [vmem:[%s1 + $0x68] sm:$0xff]
      %v488 = vld [vmem:[%s1 + $0x70] sm:$0xff]
      %v489 = vld [vmem:[%s1 + $0x78] sm:$0xff]
      %v490 = vld [vmem:[%s1 + $0x80] sm:$0xff]
      %v491 = vld [vmem:[%s1 + $0x88] sm:$0xff]
      %v492 = vld [vmem:[%s1 + $0x90] sm:$0xff]
      %v493 = vld [vmem:[%s1 + $0x98] sm:$0xff]
      %v494 = vld [vmem:[%s1 + $0xa0] sm:$0xff]
      %v495 = vld [vmem:[%s1 + $0xa8] sm:$0xff]
      %v496 = vld [vmem:[%s1 + $0xb0] sm:$0xff]
      %v497 = vld [vmem:[%s1 + $0xb8] sm:$0xff]
      %v498 = vld [vmem:[%s1 + $0xc0] sm:$0xff]
      %v499 = vld [vmem:[%s1 + $0xc8] sm:$0xff]
      %v500 = vld [vmem:[%s1 + $0xd0] sm:$0xff]
      %v501 = vld [vmem:[%s1 + $0xd8] sm:$0xff]
      %v502 = vld [vmem:[%s1 + $0xe0] sm:$0xff]
      %v503 = vld [vmem:[%s1 + $0xe8] sm:$0xff]
      %v504 = vld [vmem:[%s1 + $0xf0] sm:$0xff]
      %v505 = vld [vmem:[%s1 + $0xf8] sm:$0xff]
      %v506 = vld [vmem:[%s1 + $0x100] sm:$0xff]
      %v507 = vld [vmem:[%s1 + $0x108] sm:$0xff]
      %v508 = vld [vmem:[%s1 + $0x110] sm:$0xff]
      %v509 = vld [vmem:[%s1 + $0x118] sm:$0xff]
      %v510 = vld [vmem:[%s1 + $0x120] sm:$0xff]
      %v511 = vld [vmem:[%s1 + $0x128] sm:$0xff]
      %v512 = vld [vmem:[%s1 + $0x130] sm:$0xff]
      %v513 = vld [vmem:[%s1 + $0x138] sm:$0xff]
      %v514 = vld [vmem:[%s1 + $0x140] sm:$0xff]
      %v515 = vld [vmem:[%s1 + $0x148] sm:$0xff]
      %v516 = vld [vmem:[%s1 + $0x150] sm:$0xff]
      %v517 = vld [vmem:[%s1 + $0x158] sm:$0xff]
      %v518 = vld [vmem:[%s1 + $0x160] sm:$0xff]
      %v519 = vld [vmem:[%s1 + $0x168] sm:$0xff]
      %v520 = vld [vmem:[%s1 + $0x170] sm:$0xff]
      %v521 = vld [vmem:[%s1 + $0x178] sm:$0xff]
      %v522 = vld [vmem:[%s1 + $0x180] sm:$0xff]
      %v523 = vld [vmem:[%s1 + $0x188] sm:$0xff]
      %v524 = vld [vmem:[%s1 + $0x190] sm:$0xff]
      %v525 = vld [vmem:[%s1 + $0x198] sm:$0xff]
      %v526 = vld [vmem:[%s1 + $0x1a0] sm:$0xff]
      %v527 = vld [vmem:[%s1 + $0x1a8] sm:$0xff]
      %v528 = vld [vmem:[%s1 + $0x1b0] sm:$0xff]
      %v529 = vld [vmem:[%s1 + $0x1b8] sm:$0xff]
      %v530 = vld [vmem:[%s1 + $0x1c0] sm:$0xff]
      %v531 = vld [vmem:[%s1 + $0x1c8] sm:$0xff]
      %v532 = vld [vmem:[%s1 + $0x1d0] sm:$0xff]
      %v533 = vld [vmem:[%s1 + $0x1d8] sm:$0xff]
      %v534 = vld [vmem:[%s1 + $0x1e0] sm:$0xff]
      %v535 = vld [vmem:[%s1 + $0x1e8] sm:$0xff]
      %v536 = vld [vmem:[%s1 + $0x1f0] sm:$0xff]
      %v537 = vld [vmem:[%s1 + $0x1f8] sm:$0xff]
      %v538 = vld [vmem:[%s1 + $0x200] sm:$0xff]
      %v539 = vld [vmem:[%s1 + $0x208] sm:$0xff]
      %v540 = vld [vmem:[%s1 + $0x210] sm:$0xff]
      %v541 = vld [vmem:[%s1 + $0x218] sm:$0xff]
      %v542 = vld [vmem:[%s1 + $0x220] sm:$0xff]
      %v543 = vld [vmem:[%s1 + $0x228] sm:$0xff]
      %v544 = vld [vmem:[%s1 + $0x230] sm:$0xff]
      %v545 = vld [vmem:[%s1 + $0x238] sm:$0xff]
      %v546 = vld [vmem:[%s1 + $0x240] sm:$0xff]
      %v547 = vld [vmem:[%s1 + $0x248] sm:$0xff]
      %v548 = vld [vmem:[%s1 + $0x250] sm:$0xff]
      %v549 = vld [vmem:[%s1 + $0x258] sm:$0xff]
      %v550 = vld [vmem:[%s1 + $0x260] sm:$0xff]
      %v551 = vld [vmem:[%s1 + $0x268] sm:$0xff]
      %v552 = vld [vmem:[%s1 + $0x270] sm:$0xff]
      %v553 = vld [vmem:[%s1 + $0x278] sm:$0xff]
      %v554 = vld [vmem:[%s1 + $0x280] sm:$0xff]
      %v555 = vld [vmem:[%s1 + $0x288] sm:$0xff]
      %v556 = vld [vmem:[%s1 + $0x290] sm:$0xff]
      %v557 = vld [vmem:[%s1 + $0x298] sm:$0xff]
      %v558 = vld [vmem:[%s1 + $0x2a0] sm:$0xff]
      %v559 = vld [vmem:[%s1 + $0x2a8] sm:$0xff]
      %v560 = vld [vmem:[%s1 + $0x2b0] sm:$0xff]
      %v561 = vld [vmem:[%s1 + $0x2b8] sm:$0xff]
      %v562 = vld [vmem:[%s1 + $0x2c0] sm:$0xff]
      %v563 = vld [vmem:[%s1 + $0x2c8] sm:$0xff]
      %v564 = vld [vmem:[%s1 + $0x2d0] sm:$0xff]
      %v565 = vld [vmem:[%s1 + $0x2d8] sm:$0xff]
      %v566 = vld [vmem:[%s1 + $0x2e0] sm:$0xff]
      %v567 = vld [vmem:[%s1 + $0x2e8] sm:$0xff]
      %v568 = vld [vmem:[%s1 + $0x2f0] sm:$0xff]
      %v569 = vld [vmem:[%s1 + $0x2f8] sm:$0xff]
      %v570 = vld [vmem:[%s1 + $0x300] sm:$0xff]
      %v571 = vld [vmem:[%s1 + $0x308] sm:$0xff]
      %v572 = vld [vmem:[%s1 + $0x310] sm:$0xff]
      %v573 = vld [vmem:[%s1 + $0x318] sm:$0xff]
      %v574 = vld [vmem:[%s1 + $0x320] sm:$0xff]
      %v575 = vld [vmem:[%s1 + $0x328] sm:$0xff]
      %v576 = vld [vmem:[%s1 + $0x330] sm:$0xff]
      %v577 = vld [vmem:[%s1 + $0x338] sm:$0xff]
      %v578 = vld [vmem:[%s1 + $0x340] sm:$0xff]
      %v579 = vld [vmem:[%s1 + $0x348] sm:$0xff]
      %v580 = vld [vmem:[%s1 + $0x350] sm:$0xff]
      %v581 = vld [vmem:[%s1 + $0x358] sm:$0xff]
      %v582 = vld [vmem:[%s1 + $0x360] sm:$0xff]
      %v583 = vld [vmem:[%s1 + $0x368] sm:$0xff]
      %v584 = vld [vmem:[%s1 + $0x370] sm:$0xff]
      %v585 = vld [vmem:[%s1 + $0x378] sm:$0xff]
      %v586 = vld [vmem:[%s1 + $0x380] sm:$0xff]
      %v587 = vld [vmem:[%s1 + $0x388] sm:$0xff]
      %v588 = vld [vmem:[%s1 + $0x390] sm:$0xff]
      %v589 = vld [vmem:[%s1 + $0x398] sm:$0xff]
      %v590 = vld [vmem:[%s1 + $0x3a0] sm:$0xff]
      %v591 = vld [vmem:[%s1 + $0x3a8] sm:$0xff]
      %v592 = vld [vmem:[%s1 + $0x3b0] sm:$0xff]
      %v593 = vld [vmem:[%s1 + $0x3b8] sm:$0xff]
      %v594 = vld [vmem:[%s1 + $0x3c0] sm:$0xff]
      %v595 = vld [vmem:[%s1 + $0x3c8] sm:$0xff]
      %v596 = vld [vmem:[%s1 + $0x3d0] sm:$0xff]
      %v597 = vld [vmem:[%s1 + $0x3d8] sm:$0xff]
      %v598 = vld [vmem:[%s1 + $0x3e0] sm:$0xff]
      %v599 = vld [vmem:[%s1 + $0x3e8] sm:$0xff]
      %v600 = vld [vmem:[%s1 + $0x3f0] sm:$0xff]
      %v601 = vld [vmem:[%s1 + $0x3f8] sm:$0xff]
      %v602 = vld [vmem:[%s1 + $0x400] sm:$0xff]
      %v603 = vld [vmem:[%s1 + $0x408] sm:$0xff]
      %v604 = vld [vmem:[%s1 + $0x410] sm:$0xff]
      %v605 = vld [vmem:[%s1 + $0x418] sm:$0xff]
      %v606 = vld [vmem:[%s1 + $0x420] sm:$0xff]
      %v607 = vld [vmem:[%s1 + $0x428] sm:$0xff]
      %v608 = vld [vmem:[%s1 + $0x430] sm:$0xff]
      %v609 = vld [vmem:[%s1 + $0x438] sm:$0xff]
      %v610 = vld [vmem:[%s1 + $0x440] sm:$0xff]
      %v611 = vld [vmem:[%s1 + $0x448] sm:$0xff]
      %v612 = vld [vmem:[%s1 + $0x450] sm:$0xff]
      %v613 = vld [vmem:[%s1 + $0x458] sm:$0xff]
      %v614 = vld [vmem:[%s1 + $0x460] sm:$0xff]
      %v615 = vld [vmem:[%s1 + $0x468] sm:$0xff]
      %v616 = vld [vmem:[%s1 + $0x470] sm:$0xff]
      %v617 = vld [vmem:[%s1 + $0x478] sm:$0xff]
      %v618 = vld [vmem:[%s1 + $0x480] sm:$0xff]
      %v619 = vld [vmem:[%s1 + $0x488] sm:$0xff]
      %v620 = vld [vmem:[%s1 + $0x490] sm:$0xff]
      %v621 = vld [vmem:[%s1 + $0x498] sm:$0xff]
      %v622 = vld [vmem:[%s1 + $0x4a0] sm:$0xff]
      %v623 = vld [vmem:[%s1 + $0x4a8] sm:$0xff]
      %v624 = vld [vmem:[%s1 + $0x4b0] sm:$0xff]
      %v625 = vld [vmem:[%s1 + $0x4b8] sm:$0xff]
      %v626 = vld [vmem:[%s1 + $0x4c0] sm:$0xff]
      %v627 = vld [vmem:[%s1 + $0x4c8] sm:$0xff]
      %v628 = vld [vmem:[%s1 + $0x4d0] sm:$0xff]
      %v629 = vld [vmem:[%s1 + $0x4d8] sm:$0xff]
      %v630 = vld [vmem:[%s1 + $0x4e0] sm:$0xff]
      %v631 = vld [vmem:[%s1 + $0x4e8] sm:$0xff]
      %v632 = vld [vmem:[%s1 + $0x4f0] sm:$0xff]
      %v633 = vld [vmem:[%s1 + $0x4f8] sm:$0xff]
      %v634 = vld [vmem:[%s1 + $0x500] sm:$0xff]
      %v635 = vld [vmem:[%s1 + $0x508] sm:$0xff]
      %v636 = vld [vmem:[%s1 + $0x510] sm:$0xff]
      %v637 = vld [vmem:[%s1 + $0x518] sm:$0xff]
      %v638 = vld [vmem:[%s1 + $0x520] sm:$0xff]
      %v639 = vld [vmem:[%s1 + $0x528] sm:$0xff]
      %v640 = vld [vmem:[%s1 + $0x530] sm:$0xff]
      %v641 = vld [vmem:[%s1 + $0x538] sm:$0xff]
      %v642 = vld [vmem:[%s1 + $0x540] sm:$0xff]
      %v643 = vld [vmem:[%s1 + $0x548] sm:$0xff]
      %v644 = vld [vmem:[%s1 + $0x550] sm:$0xff]
      %v645 = vld [vmem:[%s1 + $0x558] sm:$0xff]
      %v646 = vld [vmem:[%s1 + $0x560] sm:$0xff]
      %v647 = vld [vmem:[%s1 + $0x568] sm:$0xff]
      %v648 = vld [vmem:[%s1 + $0x570] sm:$0xff]
      %v649 = vld [vmem:[%s1 + $0x578] sm:$0xff]
      %v650 = vld [vmem:[%s1 + $0x580] sm:$0xff]
      %v651 = vld [vmem:[%s1 + $0x588] sm:$0xff]
      %v652 = vld [vmem:[%s1 + $0x590] sm:$0xff]
      %v653 = vld [vmem:[%s1 + $0x598] sm:$0xff]
      %v654 = vld [vmem:[%s1 + $0x5a0] sm:$0xff]
      %v655 = vld [vmem:[%s1 + $0x5a8] sm:$0xff]
      %v656 = vld [vmem:[%s1 + $0x5b0] sm:$0xff]
      %v657 = vld [vmem:[%s1 + $0x5b8] sm:$0xff]
      %v658 = vld [vmem:[%s1 + $0x5c0] sm:$0xff]
      %v659 = vld [vmem:[%s1 + $0x5c8] sm:$0xff]
      %v660 = vld [vmem:[%s1 + $0x5d0] sm:$0xff]
      %v661 = vld [vmem:[%s1 + $0x5d8] sm:$0xff]
      %v662 = vld [vmem:[%s1 + $0x5e0] sm:$0xff]
      %v663 = vld [vmem:[%s1 + $0x5e8] sm:$0xff]
      %v664 = vld [vmem:[%s1 + $0x5f0] sm:$0xff]
      %v665 = vld [vmem:[%s1 + $0x5f8] sm:$0xff]
      %v666 = vld [vmem:[%s1 + $0x600] sm:$0xff]
      %v667 = vld [vmem:[%s1 + $0x608] sm:$0xff]
      %v668 = vld [vmem:[%s1 + $0x610] sm:$0xff]
      %v669 = vld [vmem:[%s1 + $0x618] sm:$0xff]
      %v670 = vld [vmem:[%s1 + $0x620] sm:$0xff]
      %v671 = vld [vmem:[%s1 + $0x628] sm:$0xff]
      %v672 = vld [vmem:[%s1 + $0x630] sm:$0xff]
      %v673 = vld [vmem:[%s1 + $0x638] sm:$0xff]
      %v674 = vld [vmem:[%s1 + $0x640] sm:$0xff]
      %v675 = vld [vmem:[%s1 + $0x648] sm:$0xff]
      %v676 = vld [vmem:[%s1 + $0x650] sm:$0xff]
      %v677 = vld [vmem:[%s1 + $0x658] sm:$0xff]
      %v678 = vld [vmem:[%s1 + $0x660] sm:$0xff]
      %v679 = vld [vmem:[%s1 + $0x668] sm:$0xff]
      %v680 = vld [vmem:[%s1 + $0x670] sm:$0xff]
      %v681 = vld [vmem:[%s1 + $0x678] sm:$0xff]
      %v682 = vld [vmem:[%s1 + $0x680] sm:$0xff]
      %v683 = vld [vmem:[%s1 + $0x688] sm:$0xff]
      %v684 = vld [vmem:[%s1 + $0x690] sm:$0xff]
      %v685 = vld [vmem:[%s1 + $0x698] sm:$0xff]
      %v686 = vld [vmem:[%s1 + $0x6a0] sm:$0xff]
      %v687 = vld [vmem:[%s1 + $0x6a8] sm:$0xff]
      %v688 = vld [vmem:[%s1 + $0x6b0] sm:$0xff]
      %v689 = vld [vmem:[%s1 + $0x6b8] sm:$0xff]
      %v690 = vld [vmem:[%s1 + $0x6c0] sm:$0xff]
      %v691 = vld [vmem:[%s1 + $0x6c8] sm:$0xff]
      %v692 = vld [vmem:[%s1 + $0x6d0] sm:$0xff]
      %v693 = vld [vmem:[%s1 + $0x6d8] sm:$0xff]
      %v694 = vld [vmem:[%s1 + $0x6e0] sm:$0xff]
      %v695 = vld [vmem:[%s1 + $0x6e8] sm:$0xff]
      %v696 = vld [vmem:[%s1 + $0x6f0] sm:$0xff]
      %v697 = vld [vmem:[%s1 + $0x6f8] sm:$0xff]
      %v698 = vld [vmem:[%s1 + $0x700] sm:$0xff]
      %v699 = vld [vmem:[%s1 + $0x708] sm:$0xff]
      %v700 = vld [vmem:[%s1 + $0x710] sm:$0xff]
      %v701 = vld [vmem:[%s1 + $0x718] sm:$0xff]
      %v702 = vld [vmem:[%s1 + $0x720] sm:$0xff]
      %v703 = vld [vmem:[%s1 + $0x728] sm:$0xff]
      %v704 = vld [vmem:[%s1 + $0x730] sm:$0xff]
      %v705 = vld [vmem:[%s1 + $0x738] sm:$0xff]
      %v706 = vld [vmem:[%s1 + $0x740] sm:$0xff]
      %v707 = vld [vmem:[%s1 + $0x748] sm:$0xff]
      %v708 = vld [vmem:[%s1 + $0x750] sm:$0xff]
      %v709 = vld [vmem:[%s1 + $0x758] sm:$0xff]
      %v710 = vld [vmem:[%s1 + $0x760] sm:$0xff]
      %v711 = vld [vmem:[%s1 + $0x768] sm:$0xff]
      %v712 = vld [vmem:[%s1 + $0x770] sm:$0xff]
      %v713 = vld [vmem:[%s1 + $0x778] sm:$0xff]
      %v714 = vld [vmem:[%s1 + $0x780] sm:$0xff]
      %v715 = vld [vmem:[%s1 + $0x788] sm:$0xff]
      %v716 = vld [vmem:[%s1 + $0x790] sm:$0xff]
      %v717 = vld [vmem:[%s1 + $0x798] sm:$0xff]
      %v718 = vld [vmem:[%s1 + $0x7a0] sm:$0xff]
      %v719 = vld [vmem:[%s1 + $0x7a8] sm:$0xff]
      %v720 = vld [vmem:[%s1 + $0x7b0] sm:$0xff]
      %v721 = vld [vmem:[%s1 + $0x7b8] sm:$0xff]
      %v722 = vld [vmem:[%s1 + $0x7c0] sm:$0xff]
      %v723 = vld [vmem:[%s1 + $0x7c8] sm:$0xff]
      %v724 = vld [vmem:[%s1 + $0x7d0] sm:$0xff]
      %v725 = vld [vmem:[%s1 + $0x7d8] sm:$0xff]
      %v726 = vld [vmem:[%s1 + $0x7e0] sm:$0xff]
      %v727 = vld [vmem:[%s1 + $0x7e8] sm:$0xff]
      %v728 = vld [vmem:[%s1 + $0x7f0] sm:$0xff]
      %v729 = vld [vmem:[%s1 + $0x7f8] sm:$0xff]
      %v986 = vunpack.c.l.b16 %v474
      %v987 = vunpack.c.h.b16 %v474
      %v988 = vunpack.c.l.b16 %v475
      %v989 = vunpack.c.h.b16 %v475
      %v990 = vunpack.c.l.b16 %v476
      %v991 = vunpack.c.h.b16 %v476
      %v992 = vunpack.c.l.b16 %v477
      %v993 = vunpack.c.h.b16 %v477
      %v994 = vunpack.c.l.b16 %v478
      %v995 = vunpack.c.h.b16 %v478
      %v996 = vunpack.c.l.b16 %v479
      %v997 = vunpack.c.h.b16 %v479
      %v998 = vunpack.c.l.b16 %v480
      %v999 = vunpack.c.h.b16 %v480
      %v1000 = vunpack.c.l.b16 %v481
      %v1001 = vunpack.c.h.b16 %v481
      %v1002 = vunpack.c.l.b16 %v482
      %v1003 = vunpack.c.h.b16 %v482
      %v1004 = vunpack.c.l.b16 %v483
      %v1005 = vunpack.c.h.b16 %v483
      %v1006 = vunpack.c.l.b16 %v484
      %v1007 = vunpack.c.h.b16 %v484
      %v1008 = vunpack.c.l.b16 %v485
      %v1009 = vunpack.c.h.b16 %v485
      %v1010 = vunpack.c.l.b16 %v486
      %v1011 = vunpack.c.h.b16 %v486
      %v1012 = vunpack.c.l.b16 %v487
      %v1013 = vunpack.c.h.b16 %v487
      %v1014 = vunpack.c.l.b16 %v488
      %v1015 = vunpack.c.h.b16 %v488
      %v1016 = vunpack.c.l.b16 %v489
      %v1017 = vunpack.c.h.b16 %v489
      %v1018 = vunpack.c.l.b16 %v490
      %v1019 = vunpack.c.h.b16 %v490
      %v1020 = vunpack.c.l.b16 %v491
      %v1021 = vunpack.c.h.b16 %v491
      %v1022 = vunpack.c.l.b16 %v492
      %v1023 = vunpack.c.h.b16 %v492
      %v1024 = vunpack.c.l.b16 %v493
      %v1025 = vunpack.c.h.b16 %v493
      %v1026 = vunpack.c.l.b16 %v494
      %v1027 = vunpack.c.h.b16 %v494
      %v1028 = vunpack.c.l.b16 %v495
      %v1029 = vunpack.c.h.b16 %v495
      %v1030 = vunpack.c.l.b16 %v496
      %v1031 = vunpack.c.h.b16 %v496
      %v1032 = vunpack.c.l.b16 %v497
      %v1033 = vunpack.c.h.b16 %v497
      %v1034 = vunpack.c.l.b16 %v498
      %v1035 = vunpack.c.h.b16 %v498
      %v1036 = vunpack.c.l.b16 %v499
      %v1037 = vunpack.c.h.b16 %v499
      %v1038 = vunpack.c.l.b16 %v500
      %v1039 = vunpack.c.h.b16 %v500
      %v1040 = vunpack.c.l.b16 %v501
      %v1041 = vunpack.c.h.b16 %v501
      %v1042 = vunpack.c.l.b16 %v502
      %v1043 = vunpack.c.h.b16 %v502
      %v1044 = vunpack.c.l.b16 %v503
      %v1045 = vunpack.c.h.b16 %v503
      %v1046 = vunpack.c.l.b16 %v504
      %v1047 = vunpack.c.h.b16 %v504
      %v1048 = vunpack.c.l.b16 %v505
      %v1049 = vunpack.c.h.b16 %v505
      %v1050 = vunpack.c.l.b16 %v506
      %v1051 = vunpack.c.h.b16 %v506
      %v1052 = vunpack.c.l.b16 %v507
      %v1053 = vunpack.c.h.b16 %v507
      %v1054 = vunpack.c.l.b16 %v508
      %v1055 = vunpack.c.h.b16 %v508
      %v1056 = vunpack.c.l.b16 %v509
      %v1057 = vunpack.c.h.b16 %v509
      %v1058 = vunpack.c.l.b16 %v510
      %v1059 = vunpack.c.h.b16 %v510
      %v1060 = vunpack.c.l.b16 %v511
      %v1061 = vunpack.c.h.b16 %v511
      %v1062 = vunpack.c.l.b16 %v512
      %v1063 = vunpack.c.h.b16 %v512
      %v1064 = vunpack.c.l.b16 %v513
      %v1065 = vunpack.c.h.b16 %v513
      %v1066 = vunpack.c.l.b16 %v514
      %v1067 = vunpack.c.h.b16 %v514
      %v1068 = vunpack.c.l.b16 %v515
      %v1069 = vunpack.c.h.b16 %v515
      %v1070 = vunpack.c.l.b16 %v516
      %v1071 = vunpack.c.h.b16 %v516
      %v1072 = vunpack.c.l.b16 %v517
      %v1073 = vunpack.c.h.b16 %v517
      %v1074 = vunpack.c.l.b16 %v518
      %v1075 = vunpack.c.h.b16 %v518
      %v1076 = vunpack.c.l.b16 %v519
      %v1077 = vunpack.c.h.b16 %v519
      %v1078 = vunpack.c.l.b16 %v520
      %v1079 = vunpack.c.h.b16 %v520
      %v1080 = vunpack.c.l.b16 %v521
      %v1081 = vunpack.c.h.b16 %v521
      %v1082 = vunpack.c.l.b16 %v522
      %v1083 = vunpack.c.h.b16 %v522
      %v1084 = vunpack.c.l.b16 %v523
      %v1085 = vunpack.c.h.b16 %v523
      %v1086 = vunpack.c.l.b16 %v524
      %v1087 = vunpack.c.h.b16 %v524
      %v1088 = vunpack.c.l.b16 %v525
      %v1089 = vunpack.c.h.b16 %v525
      %v1090 = vunpack.c.l.b16 %v526
      %v1091 = vunpack.c.h.b16 %v526
      %v1092 = vunpack.c.l.b16 %v527
      %v1093 = vunpack.c.h.b16 %v527
      %v1094 = vunpack.c.l.b16 %v528
      %v1095 = vunpack.c.h.b16 %v528
      %v1096 = vunpack.c.l.b16 %v529
      %v1097 = vunpack.c.h.b16 %v529
      %v1098 = vunpack.c.l.b16 %v530
      %v1099 = vunpack.c.h.b16 %v530
      %v1100 = vunpack.c.l.b16 %v531
      %v1101 = vunpack.c.h.b16 %v531
      %v1102 = vunpack.c.l.b16 %v532
      %v1103 = vunpack.c.h.b16 %v532
      %v1104 = vunpack.c.l.b16 %v533
      %v1105 = vunpack.c.h.b16 %v533
      %v1106 = vunpack.c.l.b16 %v534
      %v1107 = vunpack.c.h.b16 %v534
      %v1108 = vunpack.c.l.b16 %v535
      %v1109 = vunpack.c.h.b16 %v535
      %v1110 = vunpack.c.l.b16 %v536
      %v1111 = vunpack.c.h.b16 %v536
      %v1112 = vunpack.c.l.b16 %v537
      %v1113 = vunpack.c.h.b16 %v537
      %v1114 = vunpack.c.l.b16 %v538
      %v1115 = vunpack.c.h.b16 %v538
      %v1116 = vunpack.c.l.b16 %v539
      %v1117 = vunpack.c.h.b16 %v539
      %v1118 = vunpack.c.l.b16 %v540
      %v1119 = vunpack.c.h.b16 %v540
      %v1120 = vunpack.c.l.b16 %v541
      %v1121 = vunpack.c.h.b16 %v541
      %v1122 = vunpack.c.l.b16 %v542
      %v1123 = vunpack.c.h.b16 %v542
      %v1124 = vunpack.c.l.b16 %v543
      %v1125 = vunpack.c.h.b16 %v543
      %v1126 = vunpack.c.l.b16 %v544
      %v1127 = vunpack.c.h.b16 %v544
      %v1128 = vunpack.c.l.b16 %v545
      %v1129 = vunpack.c.h.b16 %v545
      %v1130 = vunpack.c.l.b16 %v546
      %v1131 = vunpack.c.h.b16 %v546
      %v1132 = vunpack.c.l.b16 %v547
      %v1133 = vunpack.c.h.b16 %v547
      %v1134 = vunpack.c.l.b16 %v548
      %v1135 = vunpack.c.h.b16 %v548
      %v1136 = vunpack.c.l.b16 %v549
      %v1137 = vunpack.c.h.b16 %v549
      %v1138 = vunpack.c.l.b16 %v550
      %v1139 = vunpack.c.h.b16 %v550
      %v1140 = vunpack.c.l.b16 %v551
      %v1141 = vunpack.c.h.b16 %v551
      %v1142 = vunpack.c.l.b16 %v552
      %v1143 = vunpack.c.h.b16 %v552
      %v1144 = vunpack.c.l.b16 %v553
      %v1145 = vunpack.c.h.b16 %v553
      %v1146 = vunpack.c.l.b16 %v554
      %v1147 = vunpack.c.h.b16 %v554
      %v1148 = vunpack.c.l.b16 %v555
      %v1149 = vunpack.c.h.b16 %v555
      %v1150 = vunpack.c.l.b16 %v556
      %v1151 = vunpack.c.h.b16 %v556
      %v1152 = vunpack.c.l.b16 %v557
      %v1153 = vunpack.c.h.b16 %v557
      %v1154 = vunpack.c.l.b16 %v558
      %v1155 = vunpack.c.h.b16 %v558
      %v1156 = vunpack.c.l.b16 %v559
      %v1157 = vunpack.c.h.b16 %v559
      %v1158 = vunpack.c.l.b16 %v560
      %v1159 = vunpack.c.h.b16 %v560
      %v1160 = vunpack.c.l.b16 %v561
      %v1161 = vunpack.c.h.b16 %v561
      %v1162 = vunpack.c.l.b16 %v562
      %v1163 = vunpack.c.h.b16 %v562
      %v1164 = vunpack.c.l.b16 %v563
      %v1165 = vunpack.c.h.b16 %v563
      %v1166 = vunpack.c.l.b16 %v564
      %v1167 = vunpack.c.h.b16 %v564
      %v1168 = vunpack.c.l.b16 %v565
      %v1169 = vunpack.c.h.b16 %v565
      %v1170 = vunpack.c.l.b16 %v566
      %v1171 = vunpack.c.h.b16 %v566
      %v1172 = vunpack.c.l.b16 %v567
      %v1173 = vunpack.c.h.b16 %v567
      %v1174 = vunpack.c.l.b16 %v568
      %v1175 = vunpack.c.h.b16 %v568
      %v1176 = vunpack.c.l.b16 %v569
      %v1177 = vunpack.c.h.b16 %v569
      %v1178 = vunpack.c.l.b16 %v570
      %v1179 = vunpack.c.h.b16 %v570
      %v1180 = vunpack.c.l.b16 %v571
      %v1181 = vunpack.c.h.b16 %v571
      %v1182 = vunpack.c.l.b16 %v572
      %v1183 = vunpack.c.h.b16 %v572
      %v1184 = vunpack.c.l.b16 %v573
      %v1185 = vunpack.c.h.b16 %v573
      %v1186 = vunpack.c.l.b16 %v574
      %v1187 = vunpack.c.h.b16 %v574
      %v1188 = vunpack.c.l.b16 %v575
      %v1189 = vunpack.c.h.b16 %v575
      %v1190 = vunpack.c.l.b16 %v576
      %v1191 = vunpack.c.h.b16 %v576
      %v1192 = vunpack.c.l.b16 %v577
      %v1193 = vunpack.c.h.b16 %v577
      %v1194 = vunpack.c.l.b16 %v578
      %v1195 = vunpack.c.h.b16 %v578
      %v1196 = vunpack.c.l.b16 %v579
      %v1197 = vunpack.c.h.b16 %v579
      %v1198 = vunpack.c.l.b16 %v580
      %v1199 = vunpack.c.h.b16 %v580
      %v1200 = vunpack.c.l.b16 %v581
      %v1201 = vunpack.c.h.b16 %v581
      %v1202 = vunpack.c.l.b16 %v582
      %v1203 = vunpack.c.h.b16 %v582
      %v1204 = vunpack.c.l.b16 %v583
      %v1205 = vunpack.c.h.b16 %v583
      %v1206 = vunpack.c.l.b16 %v584
      %v1207 = vunpack.c.h.b16 %v584
      %v1208 = vunpack.c.l.b16 %v585
      %v1209 = vunpack.c.h.b16 %v585
      %v1210 = vunpack.c.l.b16 %v586
      %v1211 = vunpack.c.h.b16 %v586
      %v1212 = vunpack.c.l.b16 %v587
      %v1213 = vunpack.c.h.b16 %v587
      %v1214 = vunpack.c.l.b16 %v588
      %v1215 = vunpack.c.h.b16 %v588
      %v1216 = vunpack.c.l.b16 %v589
      %v1217 = vunpack.c.h.b16 %v589
      %v1218 = vunpack.c.l.b16 %v590
      %v1219 = vunpack.c.h.b16 %v590
      %v1220 = vunpack.c.l.b16 %v591
      %v1221 = vunpack.c.h.b16 %v591
      %v1222 = vunpack.c.l.b16 %v592
      %v1223 = vunpack.c.h.b16 %v592
      %v1224 = vunpack.c.l.b16 %v593
      %v1225 = vunpack.c.h.b16 %v593
      %v1226 = vunpack.c.l.b16 %v594
      %v1227 = vunpack.c.h.b16 %v594
      %v1228 = vunpack.c.l.b16 %v595
      %v1229 = vunpack.c.h.b16 %v595
      %v1230 = vunpack.c.l.b16 %v596
      %v1231 = vunpack.c.h.b16 %v596
      %v1232 = vunpack.c.l.b16 %v597
      %v1233 = vunpack.c.h.b16 %v597
      %v1234 = vunpack.c.l.b16 %v598
      %v1235 = vunpack.c.h.b16 %v598
      %v1236 = vunpack.c.l.b16 %v599
      %v1237 = vunpack.c.h.b16 %v599
      %v1238 = vunpack.c.l.b16 %v600
      %v1239 = vunpack.c.h.b16 %v600
      %v1240 = vunpack.c.l.b16 %v601
      %v1241 = vunpack.c.h.b16 %v601
      %v1242 = vunpack.c.l.b16 %v602
      %v1243 = vunpack.c.h.b16 %v602
      %v1244 = vunpack.c.l.b16 %v603
      %v1245 = vunpack.c.h.b16 %v603
      %v1246 = vunpack.c.l.b16 %v604
      %v1247 = vunpack.c.h.b16 %v604
      %v1248 = vunpack.c.l.b16 %v605
      %v1249 = vunpack.c.h.b16 %v605
      %v1250 = vunpack.c.l.b16 %v606
      %v1251 = vunpack.c.h.b16 %v606
      %v1252 = vunpack.c.l.b16 %v607
      %v1253 = vunpack.c.h.b16 %v607
      %v1254 = vunpack.c.l.b16 %v608
      %v1255 = vunpack.c.h.b16 %v608
      %v1256 = vunpack.c.l.b16 %v609
      %v1257 = vunpack.c.h.b16 %v609
      %v1258 = vunpack.c.l.b16 %v610
      %v1259 = vunpack.c.h.b16 %v610
      %v1260 = vunpack.c.l.b16 %v611
      %v1261 = vunpack.c.h.b16 %v611
      %v1262 = vunpack.c.l.b16 %v612
      %v1263 = vunpack.c.h.b16 %v612
      %v1264 = vunpack.c.l.b16 %v613
      %v1265 = vunpack.c.h.b16 %v613
      %v1266 = vunpack.c.l.b16 %v614
      %v1267 = vunpack.c.h.b16 %v614
      %v1268 = vunpack.c.l.b16 %v615
      %v1269 = vunpack.c.h.b16 %v615
      %v1270 = vunpack.c.l.b16 %v616
      %v1271 = vunpack.c.h.b16 %v616
      %v1272 = vunpack.c.l.b16 %v617
      %v1273 = vunpack.c.h.b16 %v617
      %v1274 = vunpack.c.l.b16 %v618
      %v1275 = vunpack.c.h.b16 %v618
      %v1276 = vunpack.c.l.b16 %v619
      %v1277 = vunpack.c.h.b16 %v619
      %v1278 = vunpack.c.l.b16 %v620
      %v1279 = vunpack.c.h.b16 %v620
      %v1280 = vunpack.c.l.b16 %v621
      %v1281 = vunpack.c.h.b16 %v621
      %v1282 = vunpack.c.l.b16 %v622
      %v1283 = vunpack.c.h.b16 %v622
      %v1284 = vunpack.c.l.b16 %v623
      %v1285 = vunpack.c.h.b16 %v623
      %v1286 = vunpack.c.l.b16 %v624
      %v1287 = vunpack.c.h.b16 %v624
      %v1288 = vunpack.c.l.b16 %v625
      %v1289 = vunpack.c.h.b16 %v625
      %v1290 = vunpack.c.l.b16 %v626
      %v1291 = vunpack.c.h.b16 %v626
      %v1292 = vunpack.c.l.b16 %v627
      %v1293 = vunpack.c.h.b16 %v627
      %v1294 = vunpack.c.l.b16 %v628
      %v1295 = vunpack.c.h.b16 %v628
      %v1296 = vunpack.c.l.b16 %v629
      %v1297 = vunpack.c.h.b16 %v629
      %v1298 = vunpack.c.l.b16 %v630
      %v1299 = vunpack.c.h.b16 %v630
      %v1300 = vunpack.c.l.b16 %v631
      %v1301 = vunpack.c.h.b16 %v631
      %v1302 = vunpack.c.l.b16 %v632
      %v1303 = vunpack.c.h.b16 %v632
      %v1304 = vunpack.c.l.b16 %v633
      %v1305 = vunpack.c.h.b16 %v633
      %v1306 = vunpack.c.l.b16 %v634
      %v1307 = vunpack.c.h.b16 %v634
      %v1308 = vunpack.c.l.b16 %v635
      %v1309 = vunpack.c.h.b16 %v635
      %v1310 = vunpack.c.l.b16 %v636
      %v1311 = vunpack.c.h.b16 %v636
      %v1312 = vunpack.c.l.b16 %v637
      %v1313 = vunpack.c.h.b16 %v637
      %v1314 = vunpack.c.l.b16 %v638
      %v1315 = vunpack.c.h.b16 %v638
      %v1316 = vunpack.c.l.b16 %v639
      %v1317 = vunpack.c.h.b16 %v639
      %v1318 = vunpack.c.l.b16 %v640
      %v1319 = vunpack.c.h.b16 %v640
      %v1320 = vunpack.c.l.b16 %v641
      %v1321 = vunpack.c.h.b16 %v641
      %v1322 = vunpack.c.l.b16 %v642
      %v1323 = vunpack.c.h.b16 %v642
      %v1324 = vunpack.c.l.b16 %v643
      %v1325 = vunpack.c.h.b16 %v643
      %v1326 = vunpack.c.l.b16 %v644
      %v1327 = vunpack.c.h.b16 %v644
      %v1328 = vunpack.c.l.b16 %v645
      %v1329 = vunpack.c.h.b16 %v645
      %v1330 = vunpack.c.l.b16 %v646
      %v1331 = vunpack.c.h.b16 %v646
      %v1332 = vunpack.c.l.b16 %v647
      %v1333 = vunpack.c.h.b16 %v647
      %v1334 = vunpack.c.l.b16 %v648
      %v1335 = vunpack.c.h.b16 %v648
      %v1336 = vunpack.c.l.b16 %v649
      %v1337 = vunpack.c.h.b16 %v649
      %v1338 = vunpack.c.l.b16 %v650
      %v1339 = vunpack.c.h.b16 %v650
      %v1340 = vunpack.c.l.b16 %v651
      %v1341 = vunpack.c.h.b16 %v651
      %v1342 = vunpack.c.l.b16 %v652
      %v1343 = vunpack.c.h.b16 %v652
      %v1344 = vunpack.c.l.b16 %v653
      %v1345 = vunpack.c.h.b16 %v653
      %v1346 = vunpack.c.l.b16 %v654
      %v1347 = vunpack.c.h.b16 %v654
      %v1348 = vunpack.c.l.b16 %v655
      %v1349 = vunpack.c.h.b16 %v655
      %v1350 = vunpack.c.l.b16 %v656
      %v1351 = vunpack.c.h.b16 %v656
      %v1352 = vunpack.c.l.b16 %v657
      %v1353 = vunpack.c.h.b16 %v657
      %v1354 = vunpack.c.l.b16 %v658
      %v1355 = vunpack.c.h.b16 %v658
      %v1356 = vunpack.c.l.b16 %v659
      %v1357 = vunpack.c.h.b16 %v659
      %v1358 = vunpack.c.l.b16 %v660
      %v1359 = vunpack.c.h.b16 %v660
      %v1360 = vunpack.c.l.b16 %v661
      %v1361 = vunpack.c.h.b16 %v661
      %v1362 = vunpack.c.l.b16 %v662
      %v1363 = vunpack.c.h.b16 %v662
      %v1364 = vunpack.c.l.b16 %v663
      %v1365 = vunpack.c.h.b16 %v663
      %v1366 = vunpack.c.l.b16 %v664
      %v1367 = vunpack.c.h.b16 %v664
      %v1368 = vunpack.c.l.b16 %v665
      %v1369 = vunpack.c.h.b16 %v665
      %v1370 = vunpack.c.l.b16 %v666
      %v1371 = vunpack.c.h.b16 %v666
      %v1372 = vunpack.c.l.b16 %v667
      %v1373 = vunpack.c.h.b16 %v667
      %v1374 = vunpack.c.l.b16 %v668
      %v1375 = vunpack.c.h.b16 %v668
      %v1376 = vunpack.c.l.b16 %v669
      %v1377 = vunpack.c.h.b16 %v669
      %v1378 = vunpack.c.l.b16 %v670
      %v1379 = vunpack.c.h.b16 %v670
      %v1380 = vunpack.c.l.b16 %v671
      %v1381 = vunpack.c.h.b16 %v671
      %v1382 = vunpack.c.l.b16 %v672
      %v1383 = vunpack.c.h.b16 %v672
      %v1384 = vunpack.c.l.b16 %v673
      %v1385 = vunpack.c.h.b16 %v673
      %v1386 = vunpack.c.l.b16 %v674
      %v1387 = vunpack.c.h.b16 %v674
      %v1388 = vunpack.c.l.b16 %v675
      %v1389 = vunpack.c.h.b16 %v675
      %v1390 = vunpack.c.l.b16 %v676
      %v1391 = vunpack.c.h.b16 %v676
      %v1392 = vunpack.c.l.b16 %v677
      %v1393 = vunpack.c.h.b16 %v677
      %v1394 = vunpack.c.l.b16 %v678
      %v1395 = vunpack.c.h.b16 %v678
      %v1396 = vunpack.c.l.b16 %v679
      %v1397 = vunpack.c.h.b16 %v679
      %v1398 = vunpack.c.l.b16 %v680
      %v1399 = vunpack.c.h.b16 %v680
      %v1400 = vunpack.c.l.b16 %v681
      %v1401 = vunpack.c.h.b16 %v681
      %v1402 = vunpack.c.l.b16 %v682
      %v1403 = vunpack.c.h.b16 %v682
      %v1404 = vunpack.c.l.b16 %v683
      %v1405 = vunpack.c.h.b16 %v683
      %v1406 = vunpack.c.l.b16 %v684
      %v1407 = vunpack.c.h.b16 %v684
      %v1408 = vunpack.c.l.b16 %v685
      %v1409 = vunpack.c.h.b16 %v685
      %v1410 = vunpack.c.l.b16 %v686
      %v1411 = vunpack.c.h.b16 %v686
      %v1412 = vunpack.c.l.b16 %v687
      %v1413 = vunpack.c.h.b16 %v687
      %v1414 = vunpack.c.l.b16 %v688
      %v1415 = vunpack.c.h.b16 %v688
      %v1416 = vunpack.c.l.b16 %v689
      %v1417 = vunpack.c.h.b16 %v689
      %v1418 = vunpack.c.l.b16 %v690
      %v1419 = vunpack.c.h.b16 %v690
      %v1420 = vunpack.c.l.b16 %v691
      %v1421 = vunpack.c.h.b16 %v691
      %v1422 = vunpack.c.l.b16 %v692
      %v1423 = vunpack.c.h.b16 %v692
      %v1424 = vunpack.c.l.b16 %v693
      %v1425 = vunpack.c.h.b16 %v693
      %v1426 = vunpack.c.l.b16 %v694
      %v1427 = vunpack.c.h.b16 %v694
      %v1428 = vunpack.c.l.b16 %v695
      %v1429 = vunpack.c.h.b16 %v695
      %v1430 = vunpack.c.l.b16 %v696
      %v1431 = vunpack.c.h.b16 %v696
      %v1432 = vunpack.c.l.b16 %v697
      %v1433 = vunpack.c.h.b16 %v697
      %v1434 = vunpack.c.l.b16 %v698
      %v1435 = vunpack.c.h.b16 %v698
      %v1436 = vunpack.c.l.b16 %v699
      %v1437 = vunpack.c.h.b16 %v699
      %v1438 = vunpack.c.l.b16 %v700
      %v1439 = vunpack.c.h.b16 %v700
      %v1440 = vunpack.c.l.b16 %v701
      %v1441 = vunpack.c.h.b16 %v701
      %v1442 = vunpack.c.l.b16 %v702
      %v1443 = vunpack.c.h.b16 %v702
      %v1444 = vunpack.c.l.b16 %v703
      %v1445 = vunpack.c.h.b16 %v703
      %v1446 = vunpack.c.l.b16 %v704
      %v1447 = vunpack.c.h.b16 %v704
      %v1448 = vunpack.c.l.b16 %v705
      %v1449 = vunpack.c.h.b16 %v705
      %v1450 = vunpack.c.l.b16 %v706
      %v1451 = vunpack.c.h.b16 %v706
      %v1452 = vunpack.c.l.b16 %v707
      %v1453 = vunpack.c.h.b16 %v707
      %v1454 = vunpack.c.l.b16 %v708
      %v1455 = vunpack.c.h.b16 %v708
      %v1456 = vunpack.c.l.b16 %v709
      %v1457 = vunpack.c.h.b16 %v709
      %v1458 = vunpack.c.l.b16 %v710
      %v1459 = vunpack.c.h.b16 %v710
      %v1460 = vunpack.c.l.b16 %v711
      %v1461 = vunpack.c.h.b16 %v711
      %v1462 = vunpack.c.l.b16 %v712
      %v1463 = vunpack.c.h.b16 %v712
      %v1464 = vunpack.c.l.b16 %v713
      %v1465 = vunpack.c.h.b16 %v713
      %v1466 = vunpack.c.l.b16 %v714
      %v1467 = vunpack.c.h.b16 %v714
      %v1468 = vunpack.c.l.b16 %v715
      %v1469 = vunpack.c.h.b16 %v715
      %v1470 = vunpack.c.l.b16 %v716
      %v1471 = vunpack.c.h.b16 %v716
      %v1472 = vunpack.c.l.b16 %v717
      %v1473 = vunpack.c.h.b16 %v717
      %v1474 = vunpack.c.l.b16 %v718
      %v1475 = vunpack.c.h.b16 %v718
      %v1476 = vunpack.c.l.b16 %v719
      %v1477 = vunpack.c.h.b16 %v719
      %v1478 = vunpack.c.l.b16 %v720
      %v1479 = vunpack.c.h.b16 %v720
      %v1480 = vunpack.c.l.b16 %v721
      %v1481 = vunpack.c.h.b16 %v721
      %v1482 = vunpack.c.l.b16 %v722
      %v1483 = vunpack.c.h.b16 %v722
      %v1484 = vunpack.c.l.b16 %v723
      %v1485 = vunpack.c.h.b16 %v723
      %v1486 = vunpack.c.l.b16 %v724
      %v1487 = vunpack.c.h.b16 %v724
      %v1488 = vunpack.c.l.b16 %v725
      %v1489 = vunpack.c.h.b16 %v725
      %v1490 = vunpack.c.l.b16 %v726
      %v1491 = vunpack.c.h.b16 %v726
      %v1492 = vunpack.c.l.b16 %v727
      %v1493 = vunpack.c.h.b16 %v727
      %v1494 = vunpack.c.l.b16 %v728
      %v1495 = vunpack.c.h.b16 %v728
      %v1496 = vunpack.c.l.b16 %v729
      %v1497 = vunpack.c.h.b16 %v729
      %v1498 = vpack.c.b16 %v994, %v986
      %v1499 = vpack.c.b16 %v995, %v987
      %v1500 = vpack.c.b16 %v996, %v988
      %v1501 = vpack.c.b16 %v997, %v989
      %v1502 = vpack.c.b16 %v998, %v990
      %v1503 = vpack.c.b16 %v999, %v991
      %v1504 = vpack.c.b16 %v1000, %v992
      %v1505 = vpack.c.b16 %v1001, %v993
      %v1506 = vpack.c.b16 %v1010, %v1002
      %v1507 = vpack.c.b16 %v1011, %v1003
      %v1508 = vpack.c.b16 %v1012, %v1004
      %v1509 = vpack.c.b16 %v1013, %v1005
      %v1510 = vpack.c.b16 %v1014, %v1006
      %v1511 = vpack.c.b16 %v1015, %v1007
      %v1512 = vpack.c.b16 %v1016, %v1008
      %v1513 = vpack.c.b16 %v1017, %v1009
      %v1514 = vpack.c.b16 %v1026, %v1018
      %v1515 = vpack.c.b16 %v1027, %v1019
      %v1516 = vpack.c.b16 %v1028, %v1020
      %v1517 = vpack.c.b16 %v1029, %v1021
      %v1518 = vpack.c.b16 %v1030, %v1022
      %v1519 = vpack.c.b16 %v1031, %v1023
      %v1520 = vpack.c.b16 %v1032, %v1024
      %v1521 = vpack.c.b16 %v1033, %v1025
      %v1522 = vpack.c.b16 %v1042, %v1034
      %v1523 = vpack.c.b16 %v1043, %v1035
      %v1524 = vpack.c.b16 %v1044, %v1036
      %v1525 = vpack.c.b16 %v1045, %v1037
      %v1526 = vpack.c.b16 %v1046, %v1038
      %v1527 = vpack.c.b16 %v1047, %v1039
      %v1528 = vpack.c.b16 %v1048, %v1040
      %v1529 = vpack.c.b16 %v1049, %v1041
      %v1530 = vpack.c.b16 %v1058, %v1050
      %v1531 = vpack.c.b16 %v1059, %v1051
      %v1532 = vpack.c.b16 %v1060, %v1052
      %v1533 = vpack.c.b16 %v1061, %v1053
      %v1534 = vpack.c.b16 %v1062, %v1054
      %v1535 = vpack.c.b16 %v1063, %v1055
      %v1536 = vpack.c.b16 %v1064, %v1056
      %v1537 = vpack.c.b16 %v1065, %v1057
      %v1538 = vpack.c.b16 %v1074, %v1066
      %v1539 = vpack.c.b16 %v1075, %v1067
      %v1540 = vpack.c.b16 %v1076, %v1068
      %v1541 = vpack.c.b16 %v1077, %v1069
      %v1542 = vpack.c.b16 %v1078, %v1070
      %v1543 = vpack.c.b16 %v1079, %v1071
      %v1544 = vpack.c.b16 %v1080, %v1072
      %v1545 = vpack.c.b16 %v1081, %v1073
      %v1546 = vpack.c.b16 %v1090, %v1082
      %v1547 = vpack.c.b16 %v1091, %v1083
      %v1548 = vpack.c.b16 %v1092, %v1084
      %v1549 = vpack.c.b16 %v1093, %v1085
      %v1550 = vpack.c.b16 %v1094, %v1086
      %v1551 = vpack.c.b16 %v1095, %v1087
      %v1552 = vpack.c.b16 %v1096, %v1088
      %v1553 = vpack.c.b16 %v1097, %v1089
      %v1554 = vpack.c.b16 %v1106, %v1098
      %v1555 = vpack.c.b16 %v1107, %v1099
      %v1556 = vpack.c.b16 %v1108, %v1100
      %v1557 = vpack.c.b16 %v1109, %v1101
      %v1558 = vpack.c.b16 %v1110, %v1102
      %v1559 = vpack.c.b16 %v1111, %v1103
      %v1560 = vpack.c.b16 %v1112, %v1104
      %v1561 = vpack.c.b16 %v1113, %v1105
      %v1562 = vpack.c.b16 %v1122, %v1114
      %v1563 = vpack.c.b16 %v1123, %v1115
      %v1564 = vpack.c.b16 %v1124, %v1116
      %v1565 = vpack.c.b16 %v1125, %v1117
      %v1566 = vpack.c.b16 %v1126, %v1118
      %v1567 = vpack.c.b16 %v1127, %v1119
      %v1568 = vpack.c.b16 %v1128, %v1120
      %v1569 = vpack.c.b16 %v1129, %v1121
      %v1570 = vpack.c.b16 %v1138, %v1130
      %v1571 = vpack.c.b16 %v1139, %v1131
      %v1572 = vpack.c.b16 %v1140, %v1132
      %v1573 = vpack.c.b16 %v1141, %v1133
      %v1574 = vpack.c.b16 %v1142, %v1134
      %v1575 = vpack.c.b16 %v1143, %v1135
      %v1576 = vpack.c.b16 %v1144, %v1136
      %v1577 = vpack.c.b16 %v1145, %v1137
      %v1578 = vpack.c.b16 %v1154, %v1146
      %v1579 = vpack.c.b16 %v1155, %v1147
      %v1580 = vpack.c.b16 %v1156, %v1148
      %v1581 = vpack.c.b16 %v1157, %v1149
      %v1582 = vpack.c.b16 %v1158, %v1150
      %v1583 = vpack.c.b16 %v1159, %v1151
      %v1584 = vpack.c.b16 %v1160, %v1152
      %v1585 = vpack.c.b16 %v1161, %v1153
      %v1586 = vpack.c.b16 %v1170, %v1162
      %v1587 = vpack.c.b16 %v1171, %v1163
      %v1588 = vpack.c.b16 %v1172, %v1164
      %v1589 = vpack.c.b16 %v1173, %v1165
      %v1590 = vpack.c.b16 %v1174, %v1166
      %v1591 = vpack.c.b16 %v1175, %v1167
      %v1592 = vpack.c.b16 %v1176, %v1168
      %v1593 = vpack.c.b16 %v1177, %v1169
      %v1594 = vpack.c.b16 %v1186, %v1178
      %v1595 = vpack.c.b16 %v1187, %v1179
      %v1596 = vpack.c.b16 %v1188, %v1180
      %v1597 = vpack.c.b16 %v1189, %v1181
      %v1598 = vpack.c.b16 %v1190, %v1182
      %v1599 = vpack.c.b16 %v1191, %v1183
      %v1600 = vpack.c.b16 %v1192, %v1184
      %v1601 = vpack.c.b16 %v1193, %v1185
      %v1602 = vpack.c.b16 %v1202, %v1194
      %v1603 = vpack.c.b16 %v1203, %v1195
      %v1604 = vpack.c.b16 %v1204, %v1196
      %v1605 = vpack.c.b16 %v1205, %v1197
      %v1606 = vpack.c.b16 %v1206, %v1198
      %v1607 = vpack.c.b16 %v1207, %v1199
      %v1608 = vpack.c.b16 %v1208, %v1200
      %v1609 = vpack.c.b16 %v1209, %v1201
      %v1610 = vpack.c.b16 %v1218, %v1210
      %v1611 = vpack.c.b16 %v1219, %v1211
      %v1612 = vpack.c.b16 %v1220, %v1212
      %v1613 = vpack.c.b16 %v1221, %v1213
      %v1614 = vpack.c.b16 %v1222, %v1214
      %v1615 = vpack.c.b16 %v1223, %v1215
      %v1616 = vpack.c.b16 %v1224, %v1216
      %v1617 = vpack.c.b16 %v1225, %v1217
      %v1618 = vpack.c.b16 %v1234, %v1226
      %v1619 = vpack.c.b16 %v1235, %v1227
      %v1620 = vpack.c.b16 %v1236, %v1228
      %v1621 = vpack.c.b16 %v1237, %v1229
      %v1622 = vpack.c.b16 %v1238, %v1230
      %v1623 = vpack.c.b16 %v1239, %v1231
      %v1624 = vpack.c.b16 %v1240, %v1232
      %v1625 = vpack.c.b16 %v1241, %v1233
      %v1626 = vpack.c.b16 %v1250, %v1242
      %v1627 = vpack.c.b16 %v1251, %v1243
      %v1628 = vpack.c.b16 %v1252, %v1244
      %v1629 = vpack.c.b16 %v1253, %v1245
      %v1630 = vpack.c.b16 %v1254, %v1246
      %v1631 = vpack.c.b16 %v1255, %v1247
      %v1632 = vpack.c.b16 %v1256, %v1248
      %v1633 = vpack.c.b16 %v1257, %v1249
      %v1634 = vpack.c.b16 %v1266, %v1258
      %v1635 = vpack.c.b16 %v1267, %v1259
      %v1636 = vpack.c.b16 %v1268, %v1260
      %v1637 = vpack.c.b16 %v1269, %v1261
      %v1638 = vpack.c.b16 %v1270, %v1262
      %v1639 = vpack.c.b16 %v1271, %v1263
      %v1640 = vpack.c.b16 %v1272, %v1264
      %v1641 = vpack.c.b16 %v1273, %v1265
      %v1642 = vpack.c.b16 %v1282, %v1274
      %v1643 = vpack.c.b16 %v1283, %v1275
      %v1644 = vpack.c.b16 %v1284, %v1276
      %v1645 = vpack.c.b16 %v1285, %v1277
      %v1646 = vpack.c.b16 %v1286, %v1278
      %v1647 = vpack.c.b16 %v1287, %v1279
      %v1648 = vpack.c.b16 %v1288, %v1280
      %v1649 = vpack.c.b16 %v1289, %v1281
      %v1650 = vpack.c.b16 %v1298, %v1290
      %v1651 = vpack.c.b16 %v1299, %v1291
      %v1652 = vpack.c.b16 %v1300, %v1292
      %v1653 = vpack.c.b16 %v1301, %v1293
      %v1654 = vpack.c.b16 %v1302, %v1294
      %v1655 = vpack.c.b16 %v1303, %v1295
      %v1656 = vpack.c.b16 %v1304, %v1296
      %v1657 = vpack.c.b16 %v1305, %v1297
      %v1658 = vpack.c.b16 %v1314, %v1306
      %v1659 = vpack.c.b16 %v1315, %v1307
      %v1660 = vpack.c.b16 %v1316, %v1308
      %v1661 = vpack.c.b16 %v1317, %v1309
      %v1662 = vpack.c.b16 %v1318, %v1310
      %v1663 = vpack.c.b16 %v1319, %v1311
      %v1664 = vpack.c.b16 %v1320, %v1312
      %v1665 = vpack.c.b16 %v1321, %v1313
      %v1666 = vpack.c.b16 %v1330, %v1322
      %v1667 = vpack.c.b16 %v1331, %v1323
      %v1668 = vpack.c.b16 %v1332, %v1324
      %v1669 = vpack.c.b16 %v1333, %v1325
      %v1670 = vpack.c.b16 %v1334, %v1326
      %v1671 = vpack.c.b16 %v1335, %v1327
      %v1672 = vpack.c.b16 %v1336, %v1328
      %v1673 = vpack.c.b16 %v1337, %v1329
      %v1674 = vpack.c.b16 %v1346, %v1338
      %v1675 = vpack.c.b16 %v1347, %v1339
      %v1676 = vpack.c.b16 %v1348, %v1340
      %v1677 = vpack.c.b16 %v1349, %v1341
      %v1678 = vpack.c.b16 %v1350, %v1342
      %v1679 = vpack.c.b16 %v1351, %v1343
      %v1680 = vpack.c.b16 %v1352, %v1344
      %v1681 = vpack.c.b16 %v1353, %v1345
      %v1682 = vpack.c.b16 %v1362, %v1354
      %v1683 = vpack.c.b16 %v1363, %v1355
      %v1684 = vpack.c.b16 %v1364, %v1356
      %v1685 = vpack.c.b16 %v1365, %v1357
      %v1686 = vpack.c.b16 %v1366, %v1358
      %v1687 = vpack.c.b16 %v1367, %v1359
      %v1688 = vpack.c.b16 %v1368, %v1360
      %v1689 = vpack.c.b16 %v1369, %v1361
      %v1690 = vpack.c.b16 %v1378, %v1370
      %v1691 = vpack.c.b16 %v1379, %v1371
      %v1692 = vpack.c.b16 %v1380, %v1372
      %v1693 = vpack.c.b16 %v1381, %v1373
      %v1694 = vpack.c.b16 %v1382, %v1374
      %v1695 = vpack.c.b16 %v1383, %v1375
      %v1696 = vpack.c.b16 %v1384, %v1376
      %v1697 = vpack.c.b16 %v1385, %v1377
      %v1698 = vpack.c.b16 %v1394, %v1386
      %v1699 = vpack.c.b16 %v1395, %v1387
      %v1700 = vpack.c.b16 %v1396, %v1388
      %v1701 = vpack.c.b16 %v1397, %v1389
      %v1702 = vpack.c.b16 %v1398, %v1390
      %v1703 = vpack.c.b16 %v1399, %v1391
      %v1704 = vpack.c.b16 %v1400, %v1392
      %v1705 = vpack.c.b16 %v1401, %v1393
      %v1706 = vpack.c.b16 %v1410, %v1402
      %v1707 = vpack.c.b16 %v1411, %v1403
      %v1708 = vpack.c.b16 %v1412, %v1404
      %v1709 = vpack.c.b16 %v1413, %v1405
      %v1710 = vpack.c.b16 %v1414, %v1406
      %v1711 = vpack.c.b16 %v1415, %v1407
      %v1712 = vpack.c.b16 %v1416, %v1408
      %v1713 = vpack.c.b16 %v1417, %v1409
      %v1714 = vpack.c.b16 %v1426, %v1418
      %v1715 = vpack.c.b16 %v1427, %v1419
      %v1716 = vpack.c.b16 %v1428, %v1420
      %v1717 = vpack.c.b16 %v1429, %v1421
      %v1718 = vpack.c.b16 %v1430, %v1422
      %v1719 = vpack.c.b16 %v1431, %v1423
      %v1720 = vpack.c.b16 %v1432, %v1424
      %v1721 = vpack.c.b16 %v1433, %v1425
      %v1722 = vpack.c.b16 %v1442, %v1434
      %v1723 = vpack.c.b16 %v1443, %v1435
      %v1724 = vpack.c.b16 %v1444, %v1436
      %v1725 = vpack.c.b16 %v1445, %v1437
      %v1726 = vpack.c.b16 %v1446, %v1438
      %v1727 = vpack.c.b16 %v1447, %v1439
      %v1728 = vpack.c.b16 %v1448, %v1440
      %v1729 = vpack.c.b16 %v1449, %v1441
      %v1730 = vpack.c.b16 %v1458, %v1450
      %v1731 = vpack.c.b16 %v1459, %v1451
      %v1732 = vpack.c.b16 %v1460, %v1452
      %v1733 = vpack.c.b16 %v1461, %v1453
      %v1734 = vpack.c.b16 %v1462, %v1454
      %v1735 = vpack.c.b16 %v1463, %v1455
      %v1736 = vpack.c.b16 %v1464, %v1456
      %v1737 = vpack.c.b16 %v1465, %v1457
      %v1738 = vpack.c.b16 %v1474, %v1466
      %v1739 = vpack.c.b16 %v1475, %v1467
      %v1740 = vpack.c.b16 %v1476, %v1468
      %v1741 = vpack.c.b16 %v1477, %v1469
      %v1742 = vpack.c.b16 %v1478, %v1470
      %v1743 = vpack.c.b16 %v1479, %v1471
      %v1744 = vpack.c.b16 %v1480, %v1472
      %v1745 = vpack.c.b16 %v1481, %v1473
      %v1746 = vpack.c.b16 %v1490, %v1482
      %v1747 = vpack.c.b16 %v1491, %v1483
      %v1748 = vpack.c.b16 %v1492, %v1484
      %v1749 = vpack.c.b16 %v1493, %v1485
      %v1750 = vpack.c.b16 %v1494, %v1486
      %v1751 = vpack.c.b16 %v1495, %v1487
      %v1752 = vpack.c.b16 %v1496, %v1488
      %v1753 = vpack.c.b16 %v1497, %v1489
      %2010 = vmatprep.subr.bf16.mxu0 0
      %2011 = vmatpush1.bf16.msra.mxu0 %v410
      %2012 = vmatprep.subr.bf16.mxu0 0
      %2013 = vmatpush1.bf16.msra.mxu0 %v411
      %2014 = vmatprep.subr.bf16.mxu0 0
      %2015 = vmatpush1.bf16.msra.mxu0 %v412
      %2016 = vmatprep.subr.bf16.mxu0 0
      %2017 = vmatpush1.bf16.msra.mxu0 %v413
      %2018 = vmatprep.subr.bf16.mxu0 0
      %2019 = vmatpush1.bf16.msra.mxu0 %v414
      %2020 = vmatprep.subr.bf16.mxu0 0
      %2021 = vmatpush1.bf16.msra.mxu0 %v415
      %2022 = vmatprep.subr.bf16.mxu0 0
      %2023 = vmatpush1.bf16.msra.mxu0 %v416
      %2024 = vmatprep.subr.bf16.mxu0 0
      %2025 = vmatpush1.bf16.msra.mxu0 %v417
      %2026 = vmatprep.subr.bf16.mxu0 0
      %2027 = vmatpush1.bf16.msra.mxu0 %v418
      %2028 = vmatprep.subr.bf16.mxu0 0
      %2029 = vmatpush1.bf16.msra.mxu0 %v419
      %2030 = vmatprep.subr.bf16.mxu0 0
      %2031 = vmatpush1.bf16.msra.mxu0 %v420
      %2032 = vmatprep.subr.bf16.mxu0 0
      %2033 = vmatpush1.bf16.msra.mxu0 %v421
      %2034 = vmatprep.subr.bf16.mxu0 0
      %2035 = vmatpush1.bf16.msra.mxu0 %v422
      %2036 = vmatprep.subr.bf16.mxu0 0
      %2037 = vmatpush1.bf16.msra.mxu0 %v423
      %2038 = vmatprep.subr.bf16.mxu0 0
      %2039 = vmatpush1.bf16.msra.mxu0 %v424
      %2040 = vmatprep.subr.bf16.mxu0 0
      %2041 = vmatpush1.bf16.msra.mxu0 %v425
      %2042 = vmatprep.mubr.bf16.mxu0 %v1499
      %2043 = vmatmul.mubr.bf16.gmra.mrb[0].mxu0 %v1498
      %v2044 = vpop.f32.mrb[0].mxu0
      %v2045 = vadd.f32 0.0, %v2044
      %v2046 = vpop.f32.mrb[0].mxu0
      %v2047 = vpop.f32.mrb[0].mxu0
      %v2048 = vadd.f32 0.0, %v2047
      %v2049 = vpop.f32.mrb[0].mxu0
      %2050 = vmatprep.mubr.bf16.mxu0 %v1507
      %2051 = vmatmul.mubr.bf16.gmra.mrb[0].mxu0 %v1506
      %v2052 = vpop.f32.mrb[0].mxu0
      %v2053 = vadd.f32 0.0, %v2052
      %v2054 = vpop.f32.mrb[0].mxu0
      %v2055 = vpop.f32.mrb[0].mxu0
      %v2056 = vadd.f32 0.0, %v2055
      %v2057 = vpop.f32.mrb[0].mxu0
      %2058 = vmatprep.mubr.bf16.mxu0 %v1515
      %2059 = vmatmul.mubr.bf16.gmra.mrb[0].mxu0 %v1514
      %v2060 = vpop.f32.mrb[0].mxu0
      %v2061 = vadd.f32 0.0, %v2060
      %v2062 = vpop.f32.mrb[0].mxu0
      %v2063 = vpop.f32.mrb[0].mxu0
      %v2064 = vadd.f32 0.0, %v2063
      %v2065 = vpop.f32.mrb[0].mxu0
      %2066 = vmatprep.mubr.bf16.mxu0 %v1523
      %2067 = vmatmul.mubr.bf16.gmra.mrb[0].mxu0 %v1522
      %v2068 = vpop.f32.mrb[0].mxu0
      %v2069 = vadd.f32 0.0, %v2068
      %v2070 = vpop.f32.mrb[0].mxu0
      %v2071 = vpop.f32.mrb[0].mxu0
      %v2072 = vadd.f32 0.0, %v2071
      %v2073 = vpop.f32.mrb[0].mxu0
      %2074 = vmatprep.mubr.bf16.mxu0 %v1531
      %2075 = vmatmul.mubr.bf16.gmra.mrb[0].mxu0 %v1530
      %v2076 = vpop.f32.mrb[0].mxu0
      %v2077 = vadd.f32 0.0, %v2076
      %v2078 = vpop.f32.mrb[0].mxu0
      %v2079 = vpop.f32.mrb[0].mxu0
      %v2080 = vadd.f32 0.0, %v2079
      %v2081 = vpop.f32.mrb[0].mxu0
      %2082 = vmatprep.mubr.bf16.mxu0 %v1539
      %2083 = vmatmul.mubr.bf16.gmra.mrb[0].mxu0 %v1538
      %v2084 = vpop.f32.mrb[0].mxu0
      %v2085 = vadd.f32 0.0, %v2084
      %v2086 = vpop.f32.mrb[0].mxu0
      %v2087 = vpop.f32.mrb[0].mxu0
      %v2088 = vadd.f32 0.0, %v2087
      %v2089 = vpop.f32.mrb[0].mxu0
      %2090 = vmatprep.mubr.bf16.mxu0 %v1547
      %2091 = vmatmul.mubr.bf16.gmra.mrb[0].mxu0 %v1546
      %v2092 = vpop.f32.mrb[0].mxu0
      %v2093 = vadd.f32 0.0, %v2092
      %v2094 = vpop.f32.mrb[0].mxu0
      %v2095 = vpop.f32.mrb[0].mxu0
      %v2096 = vadd.f32 0.0, %v2095
      %v2097 = vpop.f32.mrb[0].mxu0
      %2098 = vmatprep.mubr.bf16.mxu0 %v1555
      %2099 = vmatmul.mubr.bf16.gmra.mrb[0].mxu0 %v1554
      %v2100 = vpop.f32.mrb[0].mxu0
      %v2101 = vadd.f32 0.0, %v2100
      %v2102 = vpop.f32.mrb[0].mxu0
      %v2103 = vpop.f32.mrb[0].mxu0
      %v2104 = vadd.f32 0.0, %v2103
      %v2105 = vpop.f32.mrb[0].mxu0
      %2106 = vmatprep.mubr.bf16.mxu0 %v1563
      %2107 = vmatmul.mubr.bf16.gmra.mrb[0].mxu0 %v1562
      %v2108 = vpop.f32.mrb[0].mxu0
      %v2109 = vadd.f32 0.0, %v2108
      %v2110 = vpop.f32.mrb[0].mxu0
      %v2111 = vpop.f32.mrb[0].mxu0
      %v2112 = vadd.f32 0.0, %v2111
      %v2113 = vpop.f32.mrb[0].mxu0
      %2114 = vmatprep.mubr.bf16.mxu0 %v1571
      %2115 = vmatmul.mubr.bf16.gmra.mrb[0].mxu0 %v1570
      %v2116 = vpop.f32.mrb[0].mxu0
      %v2117 = vadd.f32 0.0, %v2116
      %v2118 = vpop.f32.mrb[0].mxu0
      %v2119 = vpop.f32.mrb[0].mxu0
      %v2120 = vadd.f32 0.0, %v2119
      %v2121 = vpop.f32.mrb[0].mxu0
      %2122 = vmatprep.mubr.bf16.mxu0 %v1579
      %2123 = vmatmul.mubr.bf16.gmra.mrb[0].mxu0 %v1578
      %v2124 = vpop.f32.mrb[0].mxu0
      %v2125 = vadd.f32 0.0, %v2124
      %v2126 = vpop.f32.mrb[0].mxu0
      %v2127 = vpop.f32.mrb[0].mxu0
      %v2128 = vadd.f32 0.0, %v2127
      %v2129 = vpop.f32.mrb[0].mxu0
      %2130 = vmatprep.mubr.bf16.mxu0 %v1587
      %2131 = vmatmul.mubr.bf16.gmra.mrb[0].mxu0 %v1586
      %v2132 = vpop.f32.mrb[0].mxu0
      %v2133 = vadd.f32 0.0, %v2132
      %v2134 = vpop.f32.mrb[0].mxu0
      %v2135 = vpop.f32.mrb[0].mxu0
      %v2136 = vadd.f32 0.0, %v2135
      %v2137 = vpop.f32.mrb[0].mxu0
      %2138 = vmatprep.mubr.bf16.mxu0 %v1595
      %2139 = vmatmul.mubr.bf16.gmra.mrb[0].mxu0 %v1594
      %v2140 = vpop.f32.mrb[0].mxu0
      %v2141 = vadd.f32 0.0, %v2140
      %v2142 = vpop.f32.mrb[0].mxu0
      %v2143 = vpop.f32.mrb[0].mxu0
      %v2144 = vadd.f32 0.0, %v2143
      %v2145 = vpop.f32.mrb[0].mxu0
      %2146 = vmatprep.mubr.bf16.mxu0 %v1603
      %2147 = vmatmul.mubr.bf16.gmra.mrb[0].mxu0 %v1602
      %v2148 = vpop.f32.mrb[0].mxu0
      %v2149 = vadd.f32 0.0, %v2148
      %v2150 = vpop.f32.mrb[0].mxu0
      %v2151 = vpop.f32.mrb[0].mxu0
      %v2152 = vadd.f32 0.0, %v2151
      %v2153 = vpop.f32.mrb[0].mxu0
      %2154 = vmatprep.mubr.bf16.mxu0 %v1611
      %2155 = vmatmul.mubr.bf16.gmra.mrb[0].mxu0 %v1610
      %v2156 = vpop.f32.mrb[0].mxu0
      %v2157 = vadd.f32 0.0, %v2156
      %v2158 = vpop.f32.mrb[0].mxu0
      %v2159 = vpop.f32.mrb[0].mxu0
      %v2160 = vadd.f32 0.0, %v2159
      %v2161 = vpop.f32.mrb[0].mxu0
      %2162 = vmatprep.mubr.bf16.mxu0 %v1619
      %2163 = vmatmul.mubr.bf16.gmra.mrb[0].mxu0 %v1618
      %v2164 = vpop.f32.mrb[0].mxu0
      %v2165 = vadd.f32 0.0, %v2164
      %v2166 = vpop.f32.mrb[0].mxu0
      %v2167 = vpop.f32.mrb[0].mxu0
      %v2168 = vadd.f32 0.0, %v2167
      %v2169 = vpop.f32.mrb[0].mxu0
      %2170 = vmatprep.mubr.bf16.mxu0 %v1627
      %2171 = vmatmul.mubr.bf16.gmra.mrb[0].mxu0 %v1626
      %v2172 = vpop.f32.mrb[0].mxu0
      %v2173 = vadd.f32 0.0, %v2172
      %v2174 = vpop.f32.mrb[0].mxu0
      %v2175 = vpop.f32.mrb[0].mxu0
      %v2176 = vadd.f32 0.0, %v2175
      %v2177 = vpop.f32.mrb[0].mxu0
      %2178 = vmatprep.mubr.bf16.mxu0 %v1635
      %2179 = vmatmul.mubr.bf16.gmra.mrb[0].mxu0 %v1634
      %v2180 = vpop.f32.mrb[0].mxu0
      %v2181 = vadd.f32 0.0, %v2180
      %v2182 = vpop.f32.mrb[0].mxu0
      %v2183 = vpop.f32.mrb[0].mxu0
      %v2184 = vadd.f32 0.0, %v2183
      %v2185 = vpop.f32.mrb[0].mxu0
      %2186 = vmatprep.mubr.bf16.mxu0 %v1643
      %2187 = vmatmul.mubr.bf16.gmra.mrb[0].mxu0 %v1642
      %v2188 = vpop.f32.mrb[0].mxu0
      %v2189 = vadd.f32 0.0, %v2188
      %v2190 = vpop.f32.mrb[0].mxu0
      %v2191 = vpop.f32.mrb[0].mxu0
      %v2192 = vadd.f32 0.0, %v2191
      %v2193 = vpop.f32.mrb[0].mxu0
      %2194 = vmatprep.mubr.bf16.mxu0 %v1651
      %2195 = vmatmul.mubr.bf16.gmra.mrb[0].mxu0 %v1650
      %v2196 = vpop.f32.mrb[0].mxu0
      %v2197 = vadd.f32 0.0, %v2196
      %v2198 = vpop.f32.mrb[0].mxu0
      %v2199 = vpop.f32.mrb[0].mxu0
      %v2200 = vadd.f32 0.0, %v2199
      %v2201 = vpop.f32.mrb[0].mxu0
      %2202 = vmatprep.mubr.bf16.mxu0 %v1659
      %2203 = vmatmul.mubr.bf16.gmra.mrb[0].mxu0 %v1658
      %v2204 = vpop.f32.mrb[0].mxu0
      %v2205 = vadd.f32 0.0, %v2204
      %v2206 = vpop.f32.mrb[0].mxu0
      %v2207 = vpop.f32.mrb[0].mxu0
      %v2208 = vadd.f32 0.0, %v2207
      %v2209 = vpop.f32.mrb[0].mxu0
      %2210 = vmatprep.mubr.bf16.mxu0 %v1667
      %2211 = vmatmul.mubr.bf16.gmra.mrb[0].mxu0 %v1666
      %v2212 = vpop.f32.mrb[0].mxu0
      %v2213 = vadd.f32 0.0, %v2212
      %v2214 = vpop.f32.mrb[0].mxu0
      %v2215 = vpop.f32.mrb[0].mxu0
      %v2216 = vadd.f32 0.0, %v2215
      %v2217 = vpop.f32.mrb[0].mxu0
      %2218 = vmatprep.mubr.bf16.mxu0 %v1675
      %2219 = vmatmul.mubr.bf16.gmra.mrb[0].mxu0 %v1674
      %v2220 = vpop.f32.mrb[0].mxu0
      %v2221 = vadd.f32 0.0, %v2220
      %v2222 = vpop.f32.mrb[0].mxu0
      %v2223 = vpop.f32.mrb[0].mxu0
      %v2224 = vadd.f32 0.0, %v2223
      %v2225 = vpop.f32.mrb[0].mxu0
      %2226 = vmatprep.mubr.bf16.mxu0 %v1683
      %2227 = vmatmul.mubr.bf16.gmra.mrb[0].mxu0 %v1682
      %v2228 = vpop.f32.mrb[0].mxu0
      %v2229 = vadd.f32 0.0, %v2228
      %v2230 = vpop.f32.mrb[0].mxu0
      %v2231 = vpop.f32.mrb[0].mxu0
      %v2232 = vadd.f32 0.0, %v2231
      %v2233 = vpop.f32.mrb[0].mxu0
      %2234 = vmatprep.mubr.bf16.mxu0 %v1691
      %2235 = vmatmul.mubr.bf16.gmra.mrb[0].mxu0 %v1690
      %v2236 = vpop.f32.mrb[0].mxu0
      %v2237 = vadd.f32 0.0, %v2236
      %v2238 = vpop.f32.mrb[0].mxu0
      %v2239 = vpop.f32.mrb[0].mxu0
      %v2240 = vadd.f32 0.0, %v2239
      %v2241 = vpop.f32.mrb[0].mxu0
      %2242 = vmatprep.mubr.bf16.mxu0 %v1699
      %2243 = vmatmul.mubr.bf16.gmra.mrb[0].mxu0 %v1698
      %v2244 = vpop.f32.mrb[0].mxu0
      %v2245 = vadd.f32 0.0, %v2244
      %v2246 = vpop.f32.mrb[0].mxu0
      %v2247 = vpop.f32.mrb[0].mxu0
      %v2248 = vadd.f32 0.0, %v2247
      %v2249 = vpop.f32.mrb[0].mxu0
      %2250 = vmatprep.mubr.bf16.mxu0 %v1707
      %2251 = vmatmul.mubr.bf16.gmra.mrb[0].mxu0 %v1706
      %v2252 = vpop.f32.mrb[0].mxu0
      %v2253 = vadd.f32 0.0, %v2252
      %v2254 = vpop.f32.mrb[0].mxu0
      %v2255 = vpop.f32.mrb[0].mxu0
      %v2256 = vadd.f32 0.0, %v2255
      %v2257 = vpop.f32.mrb[0].mxu0
      %2258 = vmatprep.mubr.bf16.mxu0 %v1715
      %2259 = vmatmul.mubr.bf16.gmra.mrb[0].mxu0 %v1714
      %v2260 = vpop.f32.mrb[0].mxu0
      %v2261 = vadd.f32 0.0, %v2260
      %v2262 = vpop.f32.mrb[0].mxu0
      %v2263 = vpop.f32.mrb[0].mxu0
      %v2264 = vadd.f32 0.0, %v2263
      %v2265 = vpop.f32.mrb[0].mxu0
      %2266 = vmatprep.mubr.bf16.mxu0 %v1723
      %2267 = vmatmul.mubr.bf16.gmra.mrb[0].mxu0 %v1722
      %v2268 = vpop.f32.mrb[0].mxu0
      %v2269 = vadd.f32 0.0, %v2268
      %v2270 = vpop.f32.mrb[0].mxu0
      %v2271 = vpop.f32.mrb[0].mxu0
      %v2272 = vadd.f32 0.0, %v2271
      %v2273 = vpop.f32.mrb[0].mxu0
      %2274 = vmatprep.mubr.bf16.mxu0 %v1731
      %2275 = vmatmul.mubr.bf16.gmra.mrb[0].mxu0 %v1730
      %v2276 = vpop.f32.mrb[0].mxu0
      %v2277 = vadd.f32 0.0, %v2276
      %v2278 = vpop.f32.mrb[0].mxu0
      %v2279 = vpop.f32.mrb[0].mxu0
      %v2280 = vadd.f32 0.0, %v2279
      %v2281 = vpop.f32.mrb[0].mxu0
      %2282 = vmatprep.mubr.bf16.mxu0 %v1739
      %2283 = vmatmul.mubr.bf16.gmra.mrb[0].mxu0 %v1738
      %v2284 = vpop.f32.mrb[0].mxu0
      %v2285 = vadd.f32 0.0, %v2284
      %v2286 = vpop.f32.mrb[0].mxu0
      %v2287 = vpop.f32.mrb[0].mxu0
      %v2288 = vadd.f32 0.0, %v2287
      %v2289 = vpop.f32.mrb[0].mxu0
      %2290 = vmatprep.mubr.bf16.mxu0 %v1747
      %2291 = vmatmul.mubr.bf16.gmra.mrb[0].mxu0 %v1746
      %v2292 = vpop.f32.mrb[0].mxu0
      %v2293 = vadd.f32 0.0, %v2292
      %v2294 = vpop.f32.mrb[0].mxu0
      %v2295 = vpop.f32.mrb[0].mxu0
      %v2296 = vadd.f32 0.0, %v2295
      %v2297 = vpop.f32.mrb[0].mxu0
      %2298 = vdwg.mxu0
      %2299 = vmatprep.subr.bf16.mxu0 0
      %2300 = vmatpush1.bf16.msra.mxu0 %v426
      %2301 = vmatprep.subr.bf16.mxu0 0
      %2302 = vmatpush1.bf16.msra.mxu0 %v427
      %2303 = vmatprep.subr.bf16.mxu0 0
      %2304 = vmatpush1.bf16.msra.mxu0 %v428
      %2305 = vmatprep.subr.bf16.mxu0 0
      %2306 = vmatpush1.bf16.msra.mxu0 %v429
      %2307 = vmatprep.subr.bf16.mxu0 0
      %2308 = vmatpush1.bf16.msra.mxu0 %v430
      %2309 = vmatprep.subr.bf16.mxu0 0
      %2310 = vmatpush1.bf16.msra.mxu0 %v431
      %2311 = vmatprep.subr.bf16.mxu0 0
      %2312 = vmatpush1.bf16.msra.mxu0 %v432
      %2313 = vmatprep.subr.bf16.mxu0 0
      %2314 = vmatpush1.bf16.msra.mxu0 %v433
      %2315 = vmatprep.subr.bf16.mxu0 0
      %2316 = vmatpush1.bf16.msra.mxu0 %v434
      %2317 = vmatprep.subr.bf16.mxu0 0
      %2318 = vmatpush1.bf16.msra.mxu0 %v435
      %2319 = vmatprep.subr.bf16.mxu0 0
      %2320 = vmatpush1.bf16.msra.mxu0 %v436
      %2321 = vmatprep.subr.bf16.mxu0 0
      %2322 = vmatpush1.bf16.msra.mxu0 %v437
      %2323 = vmatprep.subr.bf16.mxu0 0
      %2324 = vmatpush1.bf16.msra.mxu0 %v438
      %2325 = vmatprep.subr.bf16.mxu0 0
      %2326 = vmatpush1.bf16.msra.mxu0 %v439
      %2327 = vmatprep.subr.bf16.mxu0 0
      %2328 = vmatpush1.bf16.msra.mxu0 %v440
      %2329 = vmatprep.subr.bf16.mxu0 0
      %2330 = vmatpush1.bf16.msra.mxu0 %v441
      %2331 = vmatprep.mubr.bf16.mxu0 %v1501
      %2332 = vmatmul.mubr.bf16.gmra.mrb[0].mxu0 %v1500
      %v2333 = vpop.f32.mrb[0].mxu0
      %v2334 = vadd.f32 %v2045, %v2333
      %v2335 = vpop.f32.mrb[0].mxu0
      %v2336 = vpop.f32.mrb[0].mxu0
      %v2337 = vadd.f32 %v2048, %v2336
      %v2338 = vpop.f32.mrb[0].mxu0
      %2339 = vmatprep.mubr.bf16.mxu0 %v1509
      %2340 = vmatmul.mubr.bf16.gmra.mrb[0].mxu0 %v1508
      %v2341 = vpop.f32.mrb[0].mxu0
      %v2342 = vadd.f32 %v2053, %v2341
      %v2343 = vpop.f32.mrb[0].mxu0
      %v2344 = vpop.f32.mrb[0].mxu0
      %v2345 = vadd.f32 %v2056, %v2344
      %v2346 = vpop.f32.mrb[0].mxu0
      %2347 = vmatprep.mubr.bf16.mxu0 %v1517
      %2348 = vmatmul.mubr.bf16.gmra.mrb[0].mxu0 %v1516
      %v2349 = vpop.f32.mrb[0].mxu0
      %v2350 = vadd.f32 %v2061, %v2349
      %v2351 = vpop.f32.mrb[0].mxu0
      %v2352 = vpop.f32.mrb[0].mxu0
      %v2353 = vadd.f32 %v2064, %v2352
      %v2354 = vpop.f32.mrb[0].mxu0
      %2355 = vmatprep.mubr.bf16.mxu0 %v1525
      %2356 = vmatmul.mubr.bf16.gmra.mrb[0].mxu0 %v1524
      %v2357 = vpop.f32.mrb[0].mxu0
      %v2358 = vadd.f32 %v2069, %v2357
      %v2359 = vpop.f32.mrb[0].mxu0
      %v2360 = vpop.f32.mrb[0].mxu0
      %v2361 = vadd.f32 %v2072, %v2360
      %v2362 = vpop.f32.mrb[0].mxu0
      %2363 = vmatprep.mubr.bf16.mxu0 %v1533
      %2364 = vmatmul.mubr.bf16.gmra.mrb[0].mxu0 %v1532
      %v2365 = vpop.f32.mrb[0].mxu0
      %v2366 = vadd.f32 %v2077, %v2365
      %v2367 = vpop.f32.mrb[0].mxu0
      %v2368 = vpop.f32.mrb[0].mxu0
      %v2369 = vadd.f32 %v2080, %v2368
      %v2370 = vpop.f32.mrb[0].mxu0
      %2371 = vmatprep.mubr.bf16.mxu0 %v1541
      %2372 = vmatmul.mubr.bf16.gmra.mrb[0].mxu0 %v1540
      %v2373 = vpop.f32.mrb[0].mxu0
      %v2374 = vadd.f32 %v2085, %v2373
      %v2375 = vpop.f32.mrb[0].mxu0
      %v2376 = vpop.f32.mrb[0].mxu0
      %v2377 = vadd.f32 %v2088, %v2376
      %v2378 = vpop.f32.mrb[0].mxu0
      %2379 = vmatprep.mubr.bf16.mxu0 %v1549
      %2380 = vmatmul.mubr.bf16.gmra.mrb[0].mxu0 %v1548
      %v2381 = vpop.f32.mrb[0].mxu0
      %v2382 = vadd.f32 %v2093, %v2381
      %v2383 = vpop.f32.mrb[0].mxu0
      %v2384 = vpop.f32.mrb[0].mxu0
      %v2385 = vadd.f32 %v2096, %v2384
      %v2386 = vpop.f32.mrb[0].mxu0
      %2387 = vmatprep.mubr.bf16.mxu0 %v1557
      %2388 = vmatmul.mubr.bf16.gmra.mrb[0].mxu0 %v1556
      %v2389 = vpop.f32.mrb[0].mxu0
      %v2390 = vadd.f32 %v2101, %v2389
      %v2391 = vpop.f32.mrb[0].mxu0
      %v2392 = vpop.f32.mrb[0].mxu0
      %v2393 = vadd.f32 %v2104, %v2392
      %v2394 = vpop.f32.mrb[0].mxu0
      %2395 = vmatprep.mubr.bf16.mxu0 %v1565
      %2396 = vmatmul.mubr.bf16.gmra.mrb[0].mxu0 %v1564
      %v2397 = vpop.f32.mrb[0].mxu0
      %v2398 = vadd.f32 %v2109, %v2397
      %v2399 = vpop.f32.mrb[0].mxu0
      %v2400 = vpop.f32.mrb[0].mxu0
      %v2401 = vadd.f32 %v2112, %v2400
      %v2402 = vpop.f32.mrb[0].mxu0
      %2403 = vmatprep.mubr.bf16.mxu0 %v1573
      %2404 = vmatmul.mubr.bf16.gmra.mrb[0].mxu0 %v1572
      %v2405 = vpop.f32.mrb[0].mxu0
      %v2406 = vadd.f32 %v2117, %v2405
      %v2407 = vpop.f32.mrb[0].mxu0
      %v2408 = vpop.f32.mrb[0].mxu0
      %v2409 = vadd.f32 %v2120, %v2408
      %v2410 = vpop.f32.mrb[0].mxu0
      %2411 = vmatprep.mubr.bf16.mxu0 %v1581
      %2412 = vmatmul.mubr.bf16.gmra.mrb[0].mxu0 %v1580
      %v2413 = vpop.f32.mrb[0].mxu0
      %v2414 = vadd.f32 %v2125, %v2413
      %v2415 = vpop.f32.mrb[0].mxu0
      %v2416 = vpop.f32.mrb[0].mxu0
      %v2417 = vadd.f32 %v2128, %v2416
      %v2418 = vpop.f32.mrb[0].mxu0
      %2419 = vmatprep.mubr.bf16.mxu0 %v1589
      %2420 = vmatmul.mubr.bf16.gmra.mrb[0].mxu0 %v1588
      %v2421 = vpop.f32.mrb[0].mxu0
      %v2422 = vadd.f32 %v2133, %v2421
      %v2423 = vpop.f32.mrb[0].mxu0
      %v2424 = vpop.f32.mrb[0].mxu0
      %v2425 = vadd.f32 %v2136, %v2424
      %v2426 = vpop.f32.mrb[0].mxu0
      %2427 = vmatprep.mubr.bf16.mxu0 %v1597
      %2428 = vmatmul.mubr.bf16.gmra.mrb[0].mxu0 %v1596
      %v2429 = vpop.f32.mrb[0].mxu0
      %v2430 = vadd.f32 %v2141, %v2429
      %v2431 = vpop.f32.mrb[0].mxu0
      %v2432 = vpop.f32.mrb[0].mxu0
      %v2433 = vadd.f32 %v2144, %v2432
      %v2434 = vpop.f32.mrb[0].mxu0
      %2435 = vmatprep.mubr.bf16.mxu0 %v1605
      %2436 = vmatmul.mubr.bf16.gmra.mrb[0].mxu0 %v1604
      %v2437 = vpop.f32.mrb[0].mxu0
      %v2438 = vadd.f32 %v2149, %v2437
      %v2439 = vpop.f32.mrb[0].mxu0
      %v2440 = vpop.f32.mrb[0].mxu0
      %v2441 = vadd.f32 %v2152, %v2440
      %v2442 = vpop.f32.mrb[0].mxu0
      %2443 = vmatprep.mubr.bf16.mxu0 %v1613
      %2444 = vmatmul.mubr.bf16.gmra.mrb[0].mxu0 %v1612
      %v2445 = vpop.f32.mrb[0].mxu0
      %v2446 = vadd.f32 %v2157, %v2445
      %v2447 = vpop.f32.mrb[0].mxu0
      %v2448 = vpop.f32.mrb[0].mxu0
      %v2449 = vadd.f32 %v2160, %v2448
      %v2450 = vpop.f32.mrb[0].mxu0
      %2451 = vmatprep.mubr.bf16.mxu0 %v1621
      %2452 = vmatmul.mubr.bf16.gmra.mrb[0].mxu0 %v1620
      %v2453 = vpop.f32.mrb[0].mxu0
      %v2454 = vadd.f32 %v2165, %v2453
      %v2455 = vpop.f32.mrb[0].mxu0
      %v2456 = vpop.f32.mrb[0].mxu0
      %v2457 = vadd.f32 %v2168, %v2456
      %v2458 = vpop.f32.mrb[0].mxu0
      %2459 = vmatprep.mubr.bf16.mxu0 %v1629
      %2460 = vmatmul.mubr.bf16.gmra.mrb[0].mxu0 %v1628
      %v2461 = vpop.f32.mrb[0].mxu0
      %v2462 = vadd.f32 %v2173, %v2461
      %v2463 = vpop.f32.mrb[0].mxu0
      %v2464 = vpop.f32.mrb[0].mxu0
      %v2465 = vadd.f32 %v2176, %v2464
      %v2466 = vpop.f32.mrb[0].mxu0
      %2467 = vmatprep.mubr.bf16.mxu0 %v1637
      %2468 = vmatmul.mubr.bf16.gmra.mrb[0].mxu0 %v1636
      %v2469 = vpop.f32.mrb[0].mxu0
      %v2470 = vadd.f32 %v2181, %v2469
      %v2471 = vpop.f32.mrb[0].mxu0
      %v2472 = vpop.f32.mrb[0].mxu0
      %v2473 = vadd.f32 %v2184, %v2472
      %v2474 = vpop.f32.mrb[0].mxu0
      %2475 = vmatprep.mubr.bf16.mxu0 %v1645
      %2476 = vmatmul.mubr.bf16.gmra.mrb[0].mxu0 %v1644
      %v2477 = vpop.f32.mrb[0].mxu0
      %v2478 = vadd.f32 %v2189, %v2477
      %v2479 = vpop.f32.mrb[0].mxu0
      %v2480 = vpop.f32.mrb[0].mxu0
      %v2481 = vadd.f32 %v2192, %v2480
      %v2482 = vpop.f32.mrb[0].mxu0
      %2483 = vmatprep.mubr.bf16.mxu0 %v1653
      %2484 = vmatmul.mubr.bf16.gmra.mrb[0].mxu0 %v1652
      %v2485 = vpop.f32.mrb[0].mxu0
      %v2486 = vadd.f32 %v2197, %v2485
      %v2487 = vpop.f32.mrb[0].mxu0
      %v2488 = vpop.f32.mrb[0].mxu0
      %v2489 = vadd.f32 %v2200, %v2488
      %v2490 = vpop.f32.mrb[0].mxu0
      %2491 = vmatprep.mubr.bf16.mxu0 %v1661
      %2492 = vmatmul.mubr.bf16.gmra.mrb[0].mxu0 %v1660
      %v2493 = vpop.f32.mrb[0].mxu0
      %v2494 = vadd.f32 %v2205, %v2493
      %v2495 = vpop.f32.mrb[0].mxu0
      %v2496 = vpop.f32.mrb[0].mxu0
      %v2497 = vadd.f32 %v2208, %v2496
      %v2498 = vpop.f32.mrb[0].mxu0
      %2499 = vmatprep.mubr.bf16.mxu0 %v1669
      %2500 = vmatmul.mubr.bf16.gmra.mrb[0].mxu0 %v1668
      %v2501 = vpop.f32.mrb[0].mxu0
      %v2502 = vadd.f32 %v2213, %v2501
      %v2503 = vpop.f32.mrb[0].mxu0
      %v2504 = vpop.f32.mrb[0].mxu0
      %v2505 = vadd.f32 %v2216, %v2504
      %v2506 = vpop.f32.mrb[0].mxu0
      %2507 = vmatprep.mubr.bf16.mxu0 %v1677
      %2508 = vmatmul.mubr.bf16.gmra.mrb[0].mxu0 %v1676
      %v2509 = vpop.f32.mrb[0].mxu0
      %v2510 = vadd.f32 %v2221, %v2509
      %v2511 = vpop.f32.mrb[0].mxu0
      %v2512 = vpop.f32.mrb[0].mxu0
      %v2513 = vadd.f32 %v2224, %v2512
      %v2514 = vpop.f32.mrb[0].mxu0
      %2515 = vmatprep.mubr.bf16.mxu0 %v1685
      %2516 = vmatmul.mubr.bf16.gmra.mrb[0].mxu0 %v1684
      %v2517 = vpop.f32.mrb[0].mxu0
      %v2518 = vadd.f32 %v2229, %v2517
      %v2519 = vpop.f32.mrb[0].mxu0
      %v2520 = vpop.f32.mrb[0].mxu0
      %v2521 = vadd.f32 %v2232, %v2520
      %v2522 = vpop.f32.mrb[0].mxu0
      %2523 = vmatprep.mubr.bf16.mxu0 %v1693
      %2524 = vmatmul.mubr.bf16.gmra.mrb[0].mxu0 %v1692
      %v2525 = vpop.f32.mrb[0].mxu0
      %v2526 = vadd.f32 %v2237, %v2525
      %v2527 = vpop.f32.mrb[0].mxu0
      %v2528 = vpop.f32.mrb[0].mxu0
      %v2529 = vadd.f32 %v2240, %v2528
      %v2530 = vpop.f32.mrb[0].mxu0
      %2531 = vmatprep.mubr.bf16.mxu0 %v1701
      %2532 = vmatmul.mubr.bf16.gmra.mrb[0].mxu0 %v1700
      %v2533 = vpop.f32.mrb[0].mxu0
      %v2534 = vadd.f32 %v2245, %v2533
      %v2535 = vpop.f32.mrb[0].mxu0
      %v2536 = vpop.f32.mrb[0].mxu0
      %v2537 = vadd.f32 %v2248, %v2536
      %v2538 = vpop.f32.mrb[0].mxu0
      %2539 = vmatprep.mubr.bf16.mxu0 %v1709
      %2540 = vmatmul.mubr.bf16.gmra.mrb[0].mxu0 %v1708
      %v2541 = vpop.f32.mrb[0].mxu0
      %v2542 = vadd.f32 %v2253, %v2541
      %v2543 = vpop.f32.mrb[0].mxu0
      %v2544 = vpop.f32.mrb[0].mxu0
      %v2545 = vadd.f32 %v2256, %v2544
      %v2546 = vpop.f32.mrb[0].mxu0
      %2547 = vmatprep.mubr.bf16.mxu0 %v1717
      %2548 = vmatmul.mubr.bf16.gmra.mrb[0].mxu0 %v1716
      %v2549 = vpop.f32.mrb[0].mxu0
      %v2550 = vadd.f32 %v2261, %v2549
      %v2551 = vpop.f32.mrb[0].mxu0
      %v2552 = vpop.f32.mrb[0].mxu0
      %v2553 = vadd.f32 %v2264, %v2552
      %v2554 = vpop.f32.mrb[0].mxu0
      %2555 = vmatprep.mubr.bf16.mxu0 %v1725
      %2556 = vmatmul.mubr.bf16.gmra.mrb[0].mxu0 %v1724
      %v2557 = vpop.f32.mrb[0].mxu0
      %v2558 = vadd.f32 %v2269, %v2557
      %v2559 = vpop.f32.mrb[0].mxu0
      %v2560 = vpop.f32.mrb[0].mxu0
      %v2561 = vadd.f32 %v2272, %v2560
      %v2562 = vpop.f32.mrb[0].mxu0
      %2563 = vmatprep.mubr.bf16.mxu0 %v1733
      %2564 = vmatmul.mubr.bf16.gmra.mrb[0].mxu0 %v1732
      %v2565 = vpop.f32.mrb[0].mxu0
      %v2566 = vadd.f32 %v2277, %v2565
      %v2567 = vpop.f32.mrb[0].mxu0
      %v2568 = vpop.f32.mrb[0].mxu0
      %v2569 = vadd.f32 %v2280, %v2568
      %v2570 = vpop.f32.mrb[0].mxu0
      %2571 = vmatprep.mubr.bf16.mxu0 %v1741
      %2572 = vmatmul.mubr.bf16.gmra.mrb[0].mxu0 %v1740
      %v2573 = vpop.f32.mrb[0].mxu0
      %v2574 = vadd.f32 %v2285, %v2573
      %v2575 = vpop.f32.mrb[0].mxu0
      %v2576 = vpop.f32.mrb[0].mxu0
      %v2577 = vadd.f32 %v2288, %v2576
      %v2578 = vpop.f32.mrb[0].mxu0
      %2579 = vmatprep.mubr.bf16.mxu0 %v1749
      %2580 = vmatmul.mubr.bf16.gmra.mrb[0].mxu0 %v1748
      %v2581 = vpop.f32.mrb[0].mxu0
      %v2582 = vadd.f32 %v2293, %v2581
      %v2583 = vpop.f32.mrb[0].mxu0
      %v2584 = vpop.f32.mrb[0].mxu0
      %v2585 = vadd.f32 %v2296, %v2584
      %v2586 = vpop.f32.mrb[0].mxu0
      %2587 = vdwg.mxu0
      %2588 = vmatprep.subr.bf16.mxu0 0
      %2589 = vmatpush1.bf16.msra.mxu0 %v442
      %2590 = vmatprep.subr.bf16.mxu0 0
      %2591 = vmatpush1.bf16.msra.mxu0 %v443
      %2592 = vmatprep.subr.bf16.mxu0 0
      %2593 = vmatpush1.bf16.msra.mxu0 %v444
      %2594 = vmatprep.subr.bf16.mxu0 0
      %2595 = vmatpush1.bf16.msra.mxu0 %v445
      %2596 = vmatprep.subr.bf16.mxu0 0
      %2597 = vmatpush1.bf16.msra.mxu0 %v446
      %2598 = vmatprep.subr.bf16.mxu0 0
      %2599 = vmatpush1.bf16.msra.mxu0 %v447
      %2600 = vmatprep.subr.bf16.mxu0 0
      %2601 = vmatpush1.bf16.msra.mxu0 %v448
      %2602 = vmatprep.subr.bf16.mxu0 0
      %2603 = vmatpush1.bf16.msra.mxu0 %v449
      %2604 = vmatprep.subr.bf16.mxu0 0
      %2605 = vmatpush1.bf16.msra.mxu0 %v450
      %2606 = vmatprep.subr.bf16.mxu0 0
      %2607 = vmatpush1.bf16.msra.mxu0 %v451
      %2608 = vmatprep.subr.bf16.mxu0 0
      %2609 = vmatpush1.bf16.msra.mxu0 %v452
      %2610 = vmatprep.subr.bf16.mxu0 0
      %2611 = vmatpush1.bf16.msra.mxu0 %v453
      %2612 = vmatprep.subr.bf16.mxu0 0
      %2613 = vmatpush1.bf16.msra.mxu0 %v454
      %2614 = vmatprep.subr.bf16.mxu0 0
      %2615 = vmatpush1.bf16.msra.mxu0 %v455
      %2616 = vmatprep.subr.bf16.mxu0 0
      %2617 = vmatpush1.bf16.msra.mxu0 %v456
      %2618 = vmatprep.subr.bf16.mxu0 0
      %2619 = vmatpush1.bf16.msra.mxu0 %v457
      %2620 = vmatprep.mubr.bf16.mxu0 %v1503
      %2621 = vmatmul.mubr.bf16.gmra.mrb[0].mxu0 %v1502
      %v2622 = vpop.f32.mrb[0].mxu0
      %v2623 = vadd.f32 %v2334, %v2622
      %v2624 = vpop.f32.mrb[0].mxu0
      %v2625 = vpop.f32.mrb[0].mxu0
      %v2626 = vadd.f32 %v2337, %v2625
      %v2627 = vpop.f32.mrb[0].mxu0
      %2628 = vmatprep.mubr.bf16.mxu0 %v1511
      %2629 = vmatmul.mubr.bf16.gmra.mrb[0].mxu0 %v1510
      %v2630 = vpop.f32.mrb[0].mxu0
      %v2631 = vadd.f32 %v2342, %v2630
      %v2632 = vpop.f32.mrb[0].mxu0
      %v2633 = vpop.f32.mrb[0].mxu0
      %v2634 = vadd.f32 %v2345, %v2633
      %v2635 = vpop.f32.mrb[0].mxu0
      %2636 = vmatprep.mubr.bf16.mxu0 %v1519
      %2637 = vmatmul.mubr.bf16.gmra.mrb[0].mxu0 %v1518
      %v2638 = vpop.f32.mrb[0].mxu0
      %v2639 = vadd.f32 %v2350, %v2638
      %v2640 = vpop.f32.mrb[0].mxu0
      %v2641 = vpop.f32.mrb[0].mxu0
      %v2642 = vadd.f32 %v2353, %v2641
      %v2643 = vpop.f32.mrb[0].mxu0
      %2644 = vmatprep.mubr.bf16.mxu0 %v1527
      %2645 = vmatmul.mubr.bf16.gmra.mrb[0].mxu0 %v1526
      %v2646 = vpop.f32.mrb[0].mxu0
      %v2647 = vadd.f32 %v2358, %v2646
      %v2648 = vpop.f32.mrb[0].mxu0
      %v2649 = vpop.f32.mrb[0].mxu0
      %v2650 = vadd.f32 %v2361, %v2649
      %v2651 = vpop.f32.mrb[0].mxu0
      %2652 = vmatprep.mubr.bf16.mxu0 %v1535
      %2653 = vmatmul.mubr.bf16.gmra.mrb[0].mxu0 %v1534
      %v2654 = vpop.f32.mrb[0].mxu0
      %v2655 = vadd.f32 %v2366, %v2654
      %v2656 = vpop.f32.mrb[0].mxu0
      %v2657 = vpop.f32.mrb[0].mxu0
      %v2658 = vadd.f32 %v2369, %v2657
      %v2659 = vpop.f32.mrb[0].mxu0
      %2660 = vmatprep.mubr.bf16.mxu0 %v1543
      %2661 = vmatmul.mubr.bf16.gmra.mrb[0].mxu0 %v1542
      %v2662 = vpop.f32.mrb[0].mxu0
      %v2663 = vadd.f32 %v2374, %v2662
      %v2664 = vpop.f32.mrb[0].mxu0
      %v2665 = vpop.f32.mrb[0].mxu0
      %v2666 = vadd.f32 %v2377, %v2665
      %v2667 = vpop.f32.mrb[0].mxu0
      %2668 = vmatprep.mubr.bf16.mxu0 %v1551
      %2669 = vmatmul.mubr.bf16.gmra.mrb[0].mxu0 %v1550
      %v2670 = vpop.f32.mrb[0].mxu0
      %v2671 = vadd.f32 %v2382, %v2670
      %v2672 = vpop.f32.mrb[0].mxu0
      %v2673 = vpop.f32.mrb[0].mxu0
      %v2674 = vadd.f32 %v2385, %v2673
      %v2675 = vpop.f32.mrb[0].mxu0
      %2676 = vmatprep.mubr.bf16.mxu0 %v1559
      %2677 = vmatmul.mubr.bf16.gmra.mrb[0].mxu0 %v1558
      %v2678 = vpop.f32.mrb[0].mxu0
      %v2679 = vadd.f32 %v2390, %v2678
      %v2680 = vpop.f32.mrb[0].mxu0
      %v2681 = vpop.f32.mrb[0].mxu0
      %v2682 = vadd.f32 %v2393, %v2681
      %v2683 = vpop.f32.mrb[0].mxu0
      %2684 = vmatprep.mubr.bf16.mxu0 %v1567
      %2685 = vmatmul.mubr.bf16.gmra.mrb[0].mxu0 %v1566
      %v2686 = vpop.f32.mrb[0].mxu0
      %v2687 = vadd.f32 %v2398, %v2686
      %v2688 = vpop.f32.mrb[0].mxu0
      %v2689 = vpop.f32.mrb[0].mxu0
      %v2690 = vadd.f32 %v2401, %v2689
      %v2691 = vpop.f32.mrb[0].mxu0
      %2692 = vmatprep.mubr.bf16.mxu0 %v1575
      %2693 = vmatmul.mubr.bf16.gmra.mrb[0].mxu0 %v1574
      %v2694 = vpop.f32.mrb[0].mxu0
      %v2695 = vadd.f32 %v2406, %v2694
      %v2696 = vpop.f32.mrb[0].mxu0
      %v2697 = vpop.f32.mrb[0].mxu0
      %v2698 = vadd.f32 %v2409, %v2697
      %v2699 = vpop.f32.mrb[0].mxu0
      %2700 = vmatprep.mubr.bf16.mxu0 %v1583
      %2701 = vmatmul.mubr.bf16.gmra.mrb[0].mxu0 %v1582
      %v2702 = vpop.f32.mrb[0].mxu0
      %v2703 = vadd.f32 %v2414, %v2702
      %v2704 = vpop.f32.mrb[0].mxu0
      %v2705 = vpop.f32.mrb[0].mxu0
      %v2706 = vadd.f32 %v2417, %v2705
      %v2707 = vpop.f32.mrb[0].mxu0
      %2708 = vmatprep.mubr.bf16.mxu0 %v1591
      %2709 = vmatmul.mubr.bf16.gmra.mrb[0].mxu0 %v1590
      %v2710 = vpop.f32.mrb[0].mxu0
      %v2711 = vadd.f32 %v2422, %v2710
      %v2712 = vpop.f32.mrb[0].mxu0
      %v2713 = vpop.f32.mrb[0].mxu0
      %v2714 = vadd.f32 %v2425, %v2713
      %v2715 = vpop.f32.mrb[0].mxu0
      %2716 = vmatprep.mubr.bf16.mxu0 %v1599
      %2717 = vmatmul.mubr.bf16.gmra.mrb[0].mxu0 %v1598
      %v2718 = vpop.f32.mrb[0].mxu0
      %v2719 = vadd.f32 %v2430, %v2718
      %v2720 = vpop.f32.mrb[0].mxu0
      %v2721 = vpop.f32.mrb[0].mxu0
      %v2722 = vadd.f32 %v2433, %v2721
      %v2723 = vpop.f32.mrb[0].mxu0
      %2724 = vmatprep.mubr.bf16.mxu0 %v1607
      %2725 = vmatmul.mubr.bf16.gmra.mrb[0].mxu0 %v1606
      %v2726 = vpop.f32.mrb[0].mxu0
      %v2727 = vadd.f32 %v2438, %v2726
      %v2728 = vpop.f32.mrb[0].mxu0
      %v2729 = vpop.f32.mrb[0].mxu0
      %v2730 = vadd.f32 %v2441, %v2729
      %v2731 = vpop.f32.mrb[0].mxu0
      %2732 = vmatprep.mubr.bf16.mxu0 %v1615
      %2733 = vmatmul.mubr.bf16.gmra.mrb[0].mxu0 %v1614
      %v2734 = vpop.f32.mrb[0].mxu0
      %v2735 = vadd.f32 %v2446, %v2734
      %v2736 = vpop.f32.mrb[0].mxu0
      %v2737 = vpop.f32.mrb[0].mxu0
      %v2738 = vadd.f32 %v2449, %v2737
      %v2739 = vpop.f32.mrb[0].mxu0
      %2740 = vmatprep.mubr.bf16.mxu0 %v1623
      %2741 = vmatmul.mubr.bf16.gmra.mrb[0].mxu0 %v1622
      %v2742 = vpop.f32.mrb[0].mxu0
      %v2743 = vadd.f32 %v2454, %v2742
      %v2744 = vpop.f32.mrb[0].mxu0
      %v2745 = vpop.f32.mrb[0].mxu0
      %v2746 = vadd.f32 %v2457, %v2745
      %v2747 = vpop.f32.mrb[0].mxu0
      %2748 = vmatprep.mubr.bf16.mxu0 %v1631
      %2749 = vmatmul.mubr.bf16.gmra.mrb[0].mxu0 %v1630
      %v2750 = vpop.f32.mrb[0].mxu0
      %v2751 = vadd.f32 %v2462, %v2750
      %v2752 = vpop.f32.mrb[0].mxu0
      %v2753 = vpop.f32.mrb[0].mxu0
      %v2754 = vadd.f32 %v2465, %v2753
      %v2755 = vpop.f32.mrb[0].mxu0
      %2756 = vmatprep.mubr.bf16.mxu0 %v1639
      %2757 = vmatmul.mubr.bf16.gmra.mrb[0].mxu0 %v1638
      %v2758 = vpop.f32.mrb[0].mxu0
      %v2759 = vadd.f32 %v2470, %v2758
      %v2760 = vpop.f32.mrb[0].mxu0
      %v2761 = vpop.f32.mrb[0].mxu0
      %v2762 = vadd.f32 %v2473, %v2761
      %v2763 = vpop.f32.mrb[0].mxu0
      %2764 = vmatprep.mubr.bf16.mxu0 %v1647
      %2765 = vmatmul.mubr.bf16.gmra.mrb[0].mxu0 %v1646
      %v2766 = vpop.f32.mrb[0].mxu0
      %v2767 = vadd.f32 %v2478, %v2766
      %v2768 = vpop.f32.mrb[0].mxu0
      %v2769 = vpop.f32.mrb[0].mxu0
      %v2770 = vadd.f32 %v2481, %v2769
      %v2771 = vpop.f32.mrb[0].mxu0
      %2772 = vmatprep.mubr.bf16.mxu0 %v1655
      %2773 = vmatmul.mubr.bf16.gmra.mrb[0].mxu0 %v1654
      %v2774 = vpop.f32.mrb[0].mxu0
      %v2775 = vadd.f32 %v2486, %v2774
      %v2776 = vpop.f32.mrb[0].mxu0
      %v2777 = vpop.f32.mrb[0].mxu0
      %v2778 = vadd.f32 %v2489, %v2777
      %v2779 = vpop.f32.mrb[0].mxu0
      %2780 = vmatprep.mubr.bf16.mxu0 %v1663
      %2781 = vmatmul.mubr.bf16.gmra.mrb[0].mxu0 %v1662
      %v2782 = vpop.f32.mrb[0].mxu0
      %v2783 = vadd.f32 %v2494, %v2782
      %v2784 = vpop.f32.mrb[0].mxu0
      %v2785 = vpop.f32.mrb[0].mxu0
      %v2786 = vadd.f32 %v2497, %v2785
      %v2787 = vpop.f32.mrb[0].mxu0
      %2788 = vmatprep.mubr.bf16.mxu0 %v1671
      %2789 = vmatmul.mubr.bf16.gmra.mrb[0].mxu0 %v1670
      %v2790 = vpop.f32.mrb[0].mxu0
      %v2791 = vadd.f32 %v2502, %v2790
      %v2792 = vpop.f32.mrb[0].mxu0
      %v2793 = vpop.f32.mrb[0].mxu0
      %v2794 = vadd.f32 %v2505, %v2793
      %v2795 = vpop.f32.mrb[0].mxu0
      %2796 = vmatprep.mubr.bf16.mxu0 %v1679
      %2797 = vmatmul.mubr.bf16.gmra.mrb[0].mxu0 %v1678
      %v2798 = vpop.f32.mrb[0].mxu0
      %v2799 = vadd.f32 %v2510, %v2798
      %v2800 = vpop.f32.mrb[0].mxu0
      %v2801 = vpop.f32.mrb[0].mxu0
      %v2802 = vadd.f32 %v2513, %v2801
      %v2803 = vpop.f32.mrb[0].mxu0
      %2804 = vmatprep.mubr.bf16.mxu0 %v1687
      %2805 = vmatmul.mubr.bf16.gmra.mrb[0].mxu0 %v1686
      %v2806 = vpop.f32.mrb[0].mxu0
      %v2807 = vadd.f32 %v2518, %v2806
      %v2808 = vpop.f32.mrb[0].mxu0
      %v2809 = vpop.f32.mrb[0].mxu0
      %v2810 = vadd.f32 %v2521, %v2809
      %v2811 = vpop.f32.mrb[0].mxu0
      %2812 = vmatprep.mubr.bf16.mxu0 %v1695
      %2813 = vmatmul.mubr.bf16.gmra.mrb[0].mxu0 %v1694
      %v2814 = vpop.f32.mrb[0].mxu0
      %v2815 = vadd.f32 %v2526, %v2814
      %v2816 = vpop.f32.mrb[0].mxu0
      %v2817 = vpop.f32.mrb[0].mxu0
      %v2818 = vadd.f32 %v2529, %v2817
      %v2819 = vpop.f32.mrb[0].mxu0
      %2820 = vmatprep.mubr.bf16.mxu0 %v1703
      %2821 = vmatmul.mubr.bf16.gmra.mrb[0].mxu0 %v1702
      %v2822 = vpop.f32.mrb[0].mxu0
      %v2823 = vadd.f32 %v2534, %v2822
      %v2824 = vpop.f32.mrb[0].mxu0
      %v2825 = vpop.f32.mrb[0].mxu0
      %v2826 = vadd.f32 %v2537, %v2825
      %v2827 = vpop.f32.mrb[0].mxu0
      %2828 = vmatprep.mubr.bf16.mxu0 %v1711
      %2829 = vmatmul.mubr.bf16.gmra.mrb[0].mxu0 %v1710
      %v2830 = vpop.f32.mrb[0].mxu0
      %v2831 = vadd.f32 %v2542, %v2830
      %v2832 = vpop.f32.mrb[0].mxu0
      %v2833 = vpop.f32.mrb[0].mxu0
      %v2834 = vadd.f32 %v2545, %v2833
      %v2835 = vpop.f32.mrb[0].mxu0
      %2836 = vmatprep.mubr.bf16.mxu0 %v1719
      %2837 = vmatmul.mubr.bf16.gmra.mrb[0].mxu0 %v1718
      %v2838 = vpop.f32.mrb[0].mxu0
      %v2839 = vadd.f32 %v2550, %v2838
      %v2840 = vpop.f32.mrb[0].mxu0
      %v2841 = vpop.f32.mrb[0].mxu0
      %v2842 = vadd.f32 %v2553, %v2841
      %v2843 = vpop.f32.mrb[0].mxu0
      %2844 = vmatprep.mubr.bf16.mxu0 %v1727
      %2845 = vmatmul.mubr.bf16.gmra.mrb[0].mxu0 %v1726
      %v2846 = vpop.f32.mrb[0].mxu0
      %v2847 = vadd.f32 %v2558, %v2846
      %v2848 = vpop.f32.mrb[0].mxu0
      %v2849 = vpop.f32.mrb[0].mxu0
      %v2850 = vadd.f32 %v2561, %v2849
      %v2851 = vpop.f32.mrb[0].mxu0
      %2852 = vmatprep.mubr.bf16.mxu0 %v1735
      %2853 = vmatmul.mubr.bf16.gmra.mrb[0].mxu0 %v1734
      %v2854 = vpop.f32.mrb[0].mxu0
      %v2855 = vadd.f32 %v2566, %v2854
      %v2856 = vpop.f32.mrb[0].mxu0
      %v2857 = vpop.f32.mrb[0].mxu0
      %v2858 = vadd.f32 %v2569, %v2857
      %v2859 = vpop.f32.mrb[0].mxu0
      %2860 = vmatprep.mubr.bf16.mxu0 %v1743
      %2861 = vmatmul.mubr.bf16.gmra.mrb[0].mxu0 %v1742
      %v2862 = vpop.f32.mrb[0].mxu0
      %v2863 = vadd.f32 %v2574, %v2862
      %v2864 = vpop.f32.mrb[0].mxu0
      %v2865 = vpop.f32.mrb[0].mxu0
      %v2866 = vadd.f32 %v2577, %v2865
      %v2867 = vpop.f32.mrb[0].mxu0
      %2868 = vmatprep.mubr.bf16.mxu0 %v1751
      %2869 = vmatmul.mubr.bf16.gmra.mrb[0].mxu0 %v1750
      %v2870 = vpop.f32.mrb[0].mxu0
      %v2871 = vadd.f32 %v2582, %v2870
      %v2872 = vpop.f32.mrb[0].mxu0
      %v2873 = vpop.f32.mrb[0].mxu0
      %v2874 = vadd.f32 %v2585, %v2873
      %v2875 = vpop.f32.mrb[0].mxu0
      %2876 = vdwg.mxu0
      %2877 = vmatprep.subr.bf16.mxu0 0
      %2878 = vmatpush1.bf16.msra.mxu0 %v458
      %2879 = vmatprep.subr.bf16.mxu0 0
      %2880 = vmatpush1.bf16.msra.mxu0 %v459
      %2881 = vmatprep.subr.bf16.mxu0 0
      %2882 = vmatpush1.bf16.msra.mxu0 %v460
      %2883 = vmatprep.subr.bf16.mxu0 0
      %2884 = vmatpush1.bf16.msra.mxu0 %v461
      %2885 = vmatprep.subr.bf16.mxu0 0
      %2886 = vmatpush1.bf16.msra.mxu0 %v462
      %2887 = vmatprep.subr.bf16.mxu0 0
      %2888 = vmatpush1.bf16.msra.mxu0 %v463
      %2889 = vmatprep.subr.bf16.mxu0 0
      %2890 = vmatpush1.bf16.msra.mxu0 %v464
      %2891 = vmatprep.subr.bf16.mxu0 0
      %2892 = vmatpush1.bf16.msra.mxu0 %v465
      %2893 = vmatprep.subr.bf16.mxu0 0
      %2894 = vmatpush1.bf16.msra.mxu0 %v466
      %2895 = vmatprep.subr.bf16.mxu0 0
      %2896 = vmatpush1.bf16.msra.mxu0 %v467
      %2897 = vmatprep.subr.bf16.mxu0 0
      %2898 = vmatpush1.bf16.msra.mxu0 %v468
      %2899 = vmatprep.subr.bf16.mxu0 0
      %2900 = vmatpush1.bf16.msra.mxu0 %v469
      %2901 = vmatprep.subr.bf16.mxu0 0
      %2902 = vmatpush1.bf16.msra.mxu0 %v470
      %2903 = vmatprep.subr.bf16.mxu0 0
      %2904 = vmatpush1.bf16.msra.mxu0 %v471
      %2905 = vmatprep.subr.bf16.mxu0 0
      %2906 = vmatpush1.bf16.msra.mxu0 %v472
      %2907 = vmatprep.subr.bf16.mxu0 0
      %2908 = vmatpush1.bf16.msra.mxu0 %v473
      %2909 = vmatprep.mubr.bf16.mxu0 %v1505
      %2910 = vmatmul.mubr.bf16.gmra.mrb[0].mxu0 %v1504
      %v2911 = vpop.f32.mrb[0].mxu0
      %v2912 = vadd.f32 %v2623, %v2911
      %v2913 = vpop.f32.mrb[0].mxu0
      %v2914 = vpop.f32.mrb[0].mxu0
      %v2915 = vadd.f32 %v2626, %v2914
      %v2916 = vpop.f32.mrb[0].mxu0
      %2917 = vmatprep.mubr.bf16.mxu0 %v1513
      %2918 = vmatmul.mubr.bf16.gmra.mrb[0].mxu0 %v1512
      %v2919 = vpop.f32.mrb[0].mxu0
      %v2920 = vadd.f32 %v2631, %v2919
      %v2921 = vpop.f32.mrb[0].mxu0
      %v2922 = vpop.f32.mrb[0].mxu0
      %v2923 = vadd.f32 %v2634, %v2922
      %v2924 = vpop.f32.mrb[0].mxu0
      %2925 = vmatprep.mubr.bf16.mxu0 %v1521
      %2926 = vmatmul.mubr.bf16.gmra.mrb[0].mxu0 %v1520
      %v2927 = vpop.f32.mrb[0].mxu0
      %v2928 = vadd.f32 %v2639, %v2927
      %v2929 = vpop.f32.mrb[0].mxu0
      %v2930 = vpop.f32.mrb[0].mxu0
      %v2931 = vadd.f32 %v2642, %v2930
      %v2932 = vpop.f32.mrb[0].mxu0
      %2933 = vmatprep.mubr.bf16.mxu0 %v1529
      %2934 = vmatmul.mubr.bf16.gmra.mrb[0].mxu0 %v1528
      %v2935 = vpop.f32.mrb[0].mxu0
      %v2936 = vadd.f32 %v2647, %v2935
      %v2937 = vpop.f32.mrb[0].mxu0
      %v2938 = vpop.f32.mrb[0].mxu0
      %v2939 = vadd.f32 %v2650, %v2938
      %v2940 = vpop.f32.mrb[0].mxu0
      %2941 = vmatprep.mubr.bf16.mxu0 %v1537
      %2942 = vmatmul.mubr.bf16.gmra.mrb[0].mxu0 %v1536
      %v2943 = vpop.f32.mrb[0].mxu0
      %v2944 = vadd.f32 %v2655, %v2943
      %v2945 = vpop.f32.mrb[0].mxu0
      %v2946 = vpop.f32.mrb[0].mxu0
      %v2947 = vadd.f32 %v2658, %v2946
      %v2948 = vpop.f32.mrb[0].mxu0
      %2949 = vmatprep.mubr.bf16.mxu0 %v1545
      %2950 = vmatmul.mubr.bf16.gmra.mrb[0].mxu0 %v1544
      %v2951 = vpop.f32.mrb[0].mxu0
      %v2952 = vadd.f32 %v2663, %v2951
      %v2953 = vpop.f32.mrb[0].mxu0
      %v2954 = vpop.f32.mrb[0].mxu0
      %v2955 = vadd.f32 %v2666, %v2954
      %v2956 = vpop.f32.mrb[0].mxu0
      %2957 = vmatprep.mubr.bf16.mxu0 %v1553
      %2958 = vmatmul.mubr.bf16.gmra.mrb[0].mxu0 %v1552
      %v2959 = vpop.f32.mrb[0].mxu0
      %v2960 = vadd.f32 %v2671, %v2959
      %v2961 = vpop.f32.mrb[0].mxu0
      %v2962 = vpop.f32.mrb[0].mxu0
      %v2963 = vadd.f32 %v2674, %v2962
      %v2964 = vpop.f32.mrb[0].mxu0
      %2965 = vmatprep.mubr.bf16.mxu0 %v1561
      %2966 = vmatmul.mubr.bf16.gmra.mrb[0].mxu0 %v1560
      %v2967 = vpop.f32.mrb[0].mxu0
      %v2968 = vadd.f32 %v2679, %v2967
      %v2969 = vpop.f32.mrb[0].mxu0
      %v2970 = vpop.f32.mrb[0].mxu0
      %v2971 = vadd.f32 %v2682, %v2970
      %v2972 = vpop.f32.mrb[0].mxu0
      %2973 = vmatprep.mubr.bf16.mxu0 %v1569
      %2974 = vmatmul.mubr.bf16.gmra.mrb[0].mxu0 %v1568
      %v2975 = vpop.f32.mrb[0].mxu0
      %v2976 = vadd.f32 %v2687, %v2975
      %v2977 = vpop.f32.mrb[0].mxu0
      %v2978 = vpop.f32.mrb[0].mxu0
      %v2979 = vadd.f32 %v2690, %v2978
      %v2980 = vpop.f32.mrb[0].mxu0
      %2981 = vmatprep.mubr.bf16.mxu0 %v1577
      %2982 = vmatmul.mubr.bf16.gmra.mrb[0].mxu0 %v1576
      %v2983 = vpop.f32.mrb[0].mxu0
      %v2984 = vadd.f32 %v2695, %v2983
      %v2985 = vpop.f32.mrb[0].mxu0
      %v2986 = vpop.f32.mrb[0].mxu0
      %v2987 = vadd.f32 %v2698, %v2986
      %v2988 = vpop.f32.mrb[0].mxu0
      %2989 = vmatprep.mubr.bf16.mxu0 %v1585
      %2990 = vmatmul.mubr.bf16.gmra.mrb[0].mxu0 %v1584
      %v2991 = vpop.f32.mrb[0].mxu0
      %v2992 = vadd.f32 %v2703, %v2991
      %v2993 = vpop.f32.mrb[0].mxu0
      %v2994 = vpop.f32.mrb[0].mxu0
      %v2995 = vadd.f32 %v2706, %v2994
      %v2996 = vpop.f32.mrb[0].mxu0
      %2997 = vmatprep.mubr.bf16.mxu0 %v1593
      %2998 = vmatmul.mubr.bf16.gmra.mrb[0].mxu0 %v1592
      %v2999 = vpop.f32.mrb[0].mxu0
      %v3000 = vadd.f32 %v2711, %v2999
      %v3001 = vpop.f32.mrb[0].mxu0
      %v3002 = vpop.f32.mrb[0].mxu0
      %v3003 = vadd.f32 %v2714, %v3002
      %v3004 = vpop.f32.mrb[0].mxu0
      %3005 = vmatprep.mubr.bf16.mxu0 %v1601
      %3006 = vmatmul.mubr.bf16.gmra.mrb[0].mxu0 %v1600
      %v3007 = vpop.f32.mrb[0].mxu0
      %v3008 = vadd.f32 %v2719, %v3007
      %v3009 = vpop.f32.mrb[0].mxu0
      %v3010 = vpop.f32.mrb[0].mxu0
      %v3011 = vadd.f32 %v2722, %v3010
      %v3012 = vpop.f32.mrb[0].mxu0
      %3013 = vmatprep.mubr.bf16.mxu0 %v1609
      %3014 = vmatmul.mubr.bf16.gmra.mrb[0].mxu0 %v1608
      %v3015 = vpop.f32.mrb[0].mxu0
      %v3016 = vadd.f32 %v2727, %v3015
      %v3017 = vpop.f32.mrb[0].mxu0
      %v3018 = vpop.f32.mrb[0].mxu0
      %v3019 = vadd.f32 %v2730, %v3018
      %v3020 = vpop.f32.mrb[0].mxu0
      %3021 = vmatprep.mubr.bf16.mxu0 %v1617
      %3022 = vmatmul.mubr.bf16.gmra.mrb[0].mxu0 %v1616
      %v3023 = vpop.f32.mrb[0].mxu0
      %v3024 = vadd.f32 %v2735, %v3023
      %v3025 = vpop.f32.mrb[0].mxu0
      %v3026 = vpop.f32.mrb[0].mxu0
      %v3027 = vadd.f32 %v2738, %v3026
      %v3028 = vpop.f32.mrb[0].mxu0
      %3029 = vmatprep.mubr.bf16.mxu0 %v1625
      %3030 = vmatmul.mubr.bf16.gmra.mrb[0].mxu0 %v1624
      %v3031 = vpop.f32.mrb[0].mxu0
      %v3032 = vadd.f32 %v2743, %v3031
      %v3033 = vpop.f32.mrb[0].mxu0
      %v3034 = vpop.f32.mrb[0].mxu0
      %v3035 = vadd.f32 %v2746, %v3034
      %v3036 = vpop.f32.mrb[0].mxu0
      %3037 = vmatprep.mubr.bf16.mxu0 %v1633
      %3038 = vmatmul.mubr.bf16.gmra.mrb[0].mxu0 %v1632
      %v3039 = vpop.f32.mrb[0].mxu0
      %v3040 = vadd.f32 %v2751, %v3039
      %v3041 = vpop.f32.mrb[0].mxu0
      %v3042 = vpop.f32.mrb[0].mxu0
      %v3043 = vadd.f32 %v2754, %v3042
      %v3044 = vpop.f32.mrb[0].mxu0
      %3045 = vmatprep.mubr.bf16.mxu0 %v1641
      %3046 = vmatmul.mubr.bf16.gmra.mrb[0].mxu0 %v1640
      %v3047 = vpop.f32.mrb[0].mxu0
      %v3048 = vadd.f32 %v2759, %v3047
      %v3049 = vpop.f32.mrb[0].mxu0
      %v3050 = vpop.f32.mrb[0].mxu0
      %v3051 = vadd.f32 %v2762, %v3050
      %v3052 = vpop.f32.mrb[0].mxu0
      %3053 = vmatprep.mubr.bf16.mxu0 %v1649
      %3054 = vmatmul.mubr.bf16.gmra.mrb[0].mxu0 %v1648
      %v3055 = vpop.f32.mrb[0].mxu0
      %v3056 = vadd.f32 %v2767, %v3055
      %v3057 = vpop.f32.mrb[0].mxu0
      %v3058 = vpop.f32.mrb[0].mxu0
      %v3059 = vadd.f32 %v2770, %v3058
      %v3060 = vpop.f32.mrb[0].mxu0
      %3061 = vmatprep.mubr.bf16.mxu0 %v1657
      %3062 = vmatmul.mubr.bf16.gmra.mrb[0].mxu0 %v1656
      %v3063 = vpop.f32.mrb[0].mxu0
      %v3064 = vadd.f32 %v2775, %v3063
      %v3065 = vpop.f32.mrb[0].mxu0
      %v3066 = vpop.f32.mrb[0].mxu0
      %v3067 = vadd.f32 %v2778, %v3066
      %v3068 = vpop.f32.mrb[0].mxu0
      %3069 = vmatprep.mubr.bf16.mxu0 %v1665
      %3070 = vmatmul.mubr.bf16.gmra.mrb[0].mxu0 %v1664
      %v3071 = vpop.f32.mrb[0].mxu0
      %v3072 = vadd.f32 %v2783, %v3071
      %v3073 = vpop.f32.mrb[0].mxu0
      %v3074 = vpop.f32.mrb[0].mxu0
      %v3075 = vadd.f32 %v2786, %v3074
      %v3076 = vpop.f32.mrb[0].mxu0
      %3077 = vmatprep.mubr.bf16.mxu0 %v1673
      %3078 = vmatmul.mubr.bf16.gmra.mrb[0].mxu0 %v1672
      %v3079 = vpop.f32.mrb[0].mxu0
      %v3080 = vadd.f32 %v2791, %v3079
      %v3081 = vpop.f32.mrb[0].mxu0
      %v3082 = vpop.f32.mrb[0].mxu0
      %v3083 = vadd.f32 %v2794, %v3082
      %v3084 = vpop.f32.mrb[0].mxu0
      %3085 = vmatprep.mubr.bf16.mxu0 %v1681
      %3086 = vmatmul.mubr.bf16.gmra.mrb[0].mxu0 %v1680
      %v3087 = vpop.f32.mrb[0].mxu0
      %v3088 = vadd.f32 %v2799, %v3087
      %v3089 = vpop.f32.mrb[0].mxu0
      %v3090 = vpop.f32.mrb[0].mxu0
      %v3091 = vadd.f32 %v2802, %v3090
      %v3092 = vpop.f32.mrb[0].mxu0
      %3093 = vmatprep.mubr.bf16.mxu0 %v1689
      %3094 = vmatmul.mubr.bf16.gmra.mrb[0].mxu0 %v1688
      %v3095 = vpop.f32.mrb[0].mxu0
      %v3096 = vadd.f32 %v2807, %v3095
      %v3097 = vpop.f32.mrb[0].mxu0
      %v3098 = vpop.f32.mrb[0].mxu0
      %v3099 = vadd.f32 %v2810, %v3098
      %v3100 = vpop.f32.mrb[0].mxu0
      %3101 = vmatprep.mubr.bf16.mxu0 %v1697
      %3102 = vmatmul.mubr.bf16.gmra.mrb[0].mxu0 %v1696
      %v3103 = vpop.f32.mrb[0].mxu0
      %v3104 = vadd.f32 %v2815, %v3103
      %v3105 = vpop.f32.mrb[0].mxu0
      %v3106 = vpop.f32.mrb[0].mxu0
      %v3107 = vadd.f32 %v2818, %v3106
      %v3108 = vpop.f32.mrb[0].mxu0
      %3109 = vmatprep.mubr.bf16.mxu0 %v1705
      %3110 = vmatmul.mubr.bf16.gmra.mrb[0].mxu0 %v1704
      %v3111 = vpop.f32.mrb[0].mxu0
      %v3112 = vadd.f32 %v2823, %v3111
      %v3113 = vpop.f32.mrb[0].mxu0
      %v3114 = vpop.f32.mrb[0].mxu0
      %v3115 = vadd.f32 %v2826, %v3114
      %v3116 = vpop.f32.mrb[0].mxu0
      %3117 = vmatprep.mubr.bf16.mxu0 %v1713
      %3118 = vmatmul.mubr.bf16.gmra.mrb[0].mxu0 %v1712
      %v3119 = vpop.f32.mrb[0].mxu0
      %v3120 = vadd.f32 %v2831, %v3119
      %v3121 = vpop.f32.mrb[0].mxu0
      %v3122 = vpop.f32.mrb[0].mxu0
      %v3123 = vadd.f32 %v2834, %v3122
      %v3124 = vpop.f32.mrb[0].mxu0
      %3125 = vmatprep.mubr.bf16.mxu0 %v1721
      %3126 = vmatmul.mubr.bf16.gmra.mrb[0].mxu0 %v1720
      %v3127 = vpop.f32.mrb[0].mxu0
      %v3128 = vadd.f32 %v2839, %v3127
      %v3129 = vpop.f32.mrb[0].mxu0
      %v3130 = vpop.f32.mrb[0].mxu0
      %v3131 = vadd.f32 %v2842, %v3130
      %v3132 = vpop.f32.mrb[0].mxu0
      %3133 = vmatprep.mubr.bf16.mxu0 %v1729
      %3134 = vmatmul.mubr.bf16.gmra.mrb[0].mxu0 %v1728
      %v3135 = vpop.f32.mrb[0].mxu0
      %v3136 = vadd.f32 %v2847, %v3135
      %v3137 = vpop.f32.mrb[0].mxu0
      %v3138 = vpop.f32.mrb[0].mxu0
      %v3139 = vadd.f32 %v2850, %v3138
      %v3140 = vpop.f32.mrb[0].mxu0
      %3141 = vmatprep.mubr.bf16.mxu0 %v1737
      %3142 = vmatmul.mubr.bf16.gmra.mrb[0].mxu0 %v1736
      %v3143 = vpop.f32.mrb[0].mxu0
      %v3144 = vadd.f32 %v2855, %v3143
      %v3145 = vpop.f32.mrb[0].mxu0
      %v3146 = vpop.f32.mrb[0].mxu0
      %v3147 = vadd.f32 %v2858, %v3146
      %v3148 = vpop.f32.mrb[0].mxu0
      %3149 = vmatprep.mubr.bf16.mxu0 %v1745
      %3150 = vmatmul.mubr.bf16.gmra.mrb[0].mxu0 %v1744
      %v3151 = vpop.f32.mrb[0].mxu0
      %v3152 = vadd.f32 %v2863, %v3151
      %v3153 = vpop.f32.mrb[0].mxu0
      %v3154 = vpop.f32.mrb[0].mxu0
      %v3155 = vadd.f32 %v2866, %v3154
      %v3156 = vpop.f32.mrb[0].mxu0
      %3157 = vmatprep.mubr.bf16.mxu0 %v1753
      %3158 = vmatmul.mubr.bf16.gmra.mrb[0].mxu0 %v1752
      %v3159 = vpop.f32.mrb[0].mxu0
      %v3160 = vadd.f32 %v2871, %v3159
      %v3161 = vpop.f32.mrb[0].mxu0
      %v3162 = vpop.f32.mrb[0].mxu0
      %v3163 = vadd.f32 %v2874, %v3162
      %v3164 = vpop.f32.mrb[0].mxu0
      %3165 = vdwg.mxu0
      %v3166 = vld [vmem:[%s2] sm:$0xff]
      %v3167 = vld [vmem:[%s2 + $0x8] sm:$0xff]
      %v3168 = vld [vmem:[%s2 + $0x10] sm:$0xff]
      %v3169 = vld [vmem:[%s2 + $0x18] sm:$0xff]
      %v3170 = vld [vmem:[%s2 + $0x20] sm:$0xff]
      %v3171 = vld [vmem:[%s2 + $0x28] sm:$0xff]
      %v3172 = vld [vmem:[%s2 + $0x30] sm:$0xff]
      %v3173 = vld [vmem:[%s2 + $0x38] sm:$0xff]
      %v3174 = vld [vmem:[%s2 + $0x40] sm:$0xff]
      %v3175 = vld [vmem:[%s2 + $0x48] sm:$0xff]
      %v3176 = vld [vmem:[%s2 + $0x50] sm:$0xff]
      %v3177 = vld [vmem:[%s2 + $0x58] sm:$0xff]
      %v3178 = vld [vmem:[%s2 + $0x60] sm:$0xff]
      %v3179 = vld [vmem:[%s2 + $0x68] sm:$0xff]
      %v3180 = vld [vmem:[%s2 + $0x70] sm:$0xff]
      %v3181 = vld [vmem:[%s2 + $0x78] sm:$0xff]
      %v3182 = vld [vmem:[%s2 + $0x80] sm:$0xff]
      %v3183 = vld [vmem:[%s2 + $0x88] sm:$0xff]
      %v3184 = vld [vmem:[%s2 + $0x90] sm:$0xff]
      %v3185 = vld [vmem:[%s2 + $0x98] sm:$0xff]
      %v3186 = vld [vmem:[%s2 + $0xa0] sm:$0xff]
      %v3187 = vld [vmem:[%s2 + $0xa8] sm:$0xff]
      %v3188 = vld [vmem:[%s2 + $0xb0] sm:$0xff]
      %v3189 = vld [vmem:[%s2 + $0xb8] sm:$0xff]
      %v3190 = vld [vmem:[%s2 + $0xc0] sm:$0xff]
      %v3191 = vld [vmem:[%s2 + $0xc8] sm:$0xff]
      %v3192 = vld [vmem:[%s2 + $0xd0] sm:$0xff]
      %v3193 = vld [vmem:[%s2 + $0xd8] sm:$0xff]
      %v3194 = vld [vmem:[%s2 + $0xe0] sm:$0xff]
      %v3195 = vld [vmem:[%s2 + $0xe8] sm:$0xff]
      %v3196 = vld [vmem:[%s2 + $0xf0] sm:$0xff]
      %v3197 = vld [vmem:[%s2 + $0xf8] sm:$0xff]
      %v3198 = vld [vmem:[%s2 + $0x100] sm:$0xff]
      %v3199 = vld [vmem:[%s2 + $0x108] sm:$0xff]
      %v3200 = vld [vmem:[%s2 + $0x110] sm:$0xff]
      %v3201 = vld [vmem:[%s2 + $0x118] sm:$0xff]
      %v3202 = vld [vmem:[%s2 + $0x120] sm:$0xff]
      %v3203 = vld [vmem:[%s2 + $0x128] sm:$0xff]
      %v3204 = vld [vmem:[%s2 + $0x130] sm:$0xff]
      %v3205 = vld [vmem:[%s2 + $0x138] sm:$0xff]
      %v3206 = vld [vmem:[%s2 + $0x140] sm:$0xff]
      %v3207 = vld [vmem:[%s2 + $0x148] sm:$0xff]
      %v3208 = vld [vmem:[%s2 + $0x150] sm:$0xff]
      %v3209 = vld [vmem:[%s2 + $0x158] sm:$0xff]
      %v3210 = vld [vmem:[%s2 + $0x160] sm:$0xff]
      %v3211 = vld [vmem:[%s2 + $0x168] sm:$0xff]
      %v3212 = vld [vmem:[%s2 + $0x170] sm:$0xff]
      %v3213 = vld [vmem:[%s2 + $0x178] sm:$0xff]
      %v3214 = vld [vmem:[%s2 + $0x180] sm:$0xff]
      %v3215 = vld [vmem:[%s2 + $0x188] sm:$0xff]
      %v3216 = vld [vmem:[%s2 + $0x190] sm:$0xff]
      %v3217 = vld [vmem:[%s2 + $0x198] sm:$0xff]
      %v3218 = vld [vmem:[%s2 + $0x1a0] sm:$0xff]
      %v3219 = vld [vmem:[%s2 + $0x1a8] sm:$0xff]
      %v3220 = vld [vmem:[%s2 + $0x1b0] sm:$0xff]
      %v3221 = vld [vmem:[%s2 + $0x1b8] sm:$0xff]
      %v3222 = vld [vmem:[%s2 + $0x1c0] sm:$0xff]
      %v3223 = vld [vmem:[%s2 + $0x1c8] sm:$0xff]
      %v3224 = vld [vmem:[%s2 + $0x1d0] sm:$0xff]
      %v3225 = vld [vmem:[%s2 + $0x1d8] sm:$0xff]
      %v3226 = vld [vmem:[%s2 + $0x1e0] sm:$0xff]
      %v3227 = vld [vmem:[%s2 + $0x1e8] sm:$0xff]
      %v3228 = vld [vmem:[%s2 + $0x1f0] sm:$0xff]
      %v3229 = vld [vmem:[%s2 + $0x1f8] sm:$0xff]
      %3231 = vset.pattern.permute.xlu0 0
      %3232 = vperm.xlu0 %3231, %v3166
      %v3233 = vpop.permute.xlu0 %3232
      %3236 = vset.pattern.permute.xlu0 0
      %3237 = vperm.xlu0 %3236, %v3167
      %v3238 = vpop.permute.xlu0 %3237
      %3241 = vset.pattern.permute.xlu0 0
      %3242 = vperm.xlu0 %3241, %v3168
      %v3243 = vpop.permute.xlu0 %3242
      %3246 = vset.pattern.permute.xlu0 0
      %3247 = vperm.xlu0 %3246, %v3169
      %v3248 = vpop.permute.xlu0 %3247
      %3251 = vset.pattern.permute.xlu0 0
      %3252 = vperm.xlu0 %3251, %v3170
      %v3253 = vpop.permute.xlu0 %3252
      %3256 = vset.pattern.permute.xlu0 0
      %3257 = vperm.xlu0 %3256, %v3171
      %v3258 = vpop.permute.xlu0 %3257
      %3261 = vset.pattern.permute.xlu0 0
      %3262 = vperm.xlu0 %3261, %v3172
      %v3263 = vpop.permute.xlu0 %3262
      %3266 = vset.pattern.permute.xlu0 0
      %3267 = vperm.xlu0 %3266, %v3173
      %v3268 = vpop.permute.xlu0 %3267
      %3271 = vset.pattern.permute.xlu0 0
      %3272 = vperm.xlu0 %3271, %v3174
      %v3273 = vpop.permute.xlu0 %3272
      %3276 = vset.pattern.permute.xlu0 0
      %3277 = vperm.xlu0 %3276, %v3175
      %v3278 = vpop.permute.xlu0 %3277
      %3281 = vset.pattern.permute.xlu0 0
      %3282 = vperm.xlu0 %3281, %v3176
      %v3283 = vpop.permute.xlu0 %3282
      %3286 = vset.pattern.permute.xlu0 0
      %3287 = vperm.xlu0 %3286, %v3177
      %v3288 = vpop.permute.xlu0 %3287
      %3291 = vset.pattern.permute.xlu0 0
      %3292 = vperm.xlu0 %3291, %v3178
      %v3293 = vpop.permute.xlu0 %3292
      %3296 = vset.pattern.permute.xlu0 0
      %3297 = vperm.xlu0 %3296, %v3179
      %v3298 = vpop.permute.xlu0 %3297
      %3301 = vset.pattern.permute.xlu0 0
      %3302 = vperm.xlu0 %3301, %v3180
      %v3303 = vpop.permute.xlu0 %3302
      %3306 = vset.pattern.permute.xlu0 0
      %3307 = vperm.xlu0 %3306, %v3181
      %v3308 = vpop.permute.xlu0 %3307
      %3311 = vset.pattern.permute.xlu0 0
      %3312 = vperm.xlu0 %3311, %v3182
      %v3313 = vpop.permute.xlu0 %3312
      %3316 = vset.pattern.permute.xlu0 0
      %3317 = vperm.xlu0 %3316, %v3183
      %v3318 = vpop.permute.xlu0 %3317
      %3321 = vset.pattern.permute.xlu0 0
      %3322 = vperm.xlu0 %3321, %v3184
      %v3323 = vpop.permute.xlu0 %3322
      %3326 = vset.pattern.permute.xlu0 0
      %3327 = vperm.xlu0 %3326, %v3185
      %v3328 = vpop.permute.xlu0 %3327
      %3331 = vset.pattern.permute.xlu0 0
      %3332 = vperm.xlu0 %3331, %v3186
      %v3333 = vpop.permute.xlu0 %3332
      %3336 = vset.pattern.permute.xlu0 0
      %3337 = vperm.xlu0 %3336, %v3187
      %v3338 = vpop.permute.xlu0 %3337
      %3341 = vset.pattern.permute.xlu0 0
      %3342 = vperm.xlu0 %3341, %v3188
      %v3343 = vpop.permute.xlu0 %3342
      %3346 = vset.pattern.permute.xlu0 0
      %3347 = vperm.xlu0 %3346, %v3189
      %v3348 = vpop.permute.xlu0 %3347
      %3351 = vset.pattern.permute.xlu0 0
      %3352 = vperm.xlu0 %3351, %v3190
      %v3353 = vpop.permute.xlu0 %3352
      %3356 = vset.pattern.permute.xlu0 0
      %3357 = vperm.xlu0 %3356, %v3191
      %v3358 = vpop.permute.xlu0 %3357
      %3361 = vset.pattern.permute.xlu0 0
      %3362 = vperm.xlu0 %3361, %v3192
      %v3363 = vpop.permute.xlu0 %3362
      %3366 = vset.pattern.permute.xlu0 0
      %3367 = vperm.xlu0 %3366, %v3193
      %v3368 = vpop.permute.xlu0 %3367
      %3371 = vset.pattern.permute.xlu0 0
      %3372 = vperm.xlu0 %3371, %v3194
      %v3373 = vpop.permute.xlu0 %3372
      %3376 = vset.pattern.permute.xlu0 0
      %3377 = vperm.xlu0 %3376, %v3195
      %v3378 = vpop.permute.xlu0 %3377
      %3381 = vset.pattern.permute.xlu0 0
      %3382 = vperm.xlu0 %3381, %v3196
      %v3383 = vpop.permute.xlu0 %3382
      %3386 = vset.pattern.permute.xlu0 0
      %3387 = vperm.xlu0 %3386, %v3197
      %v3388 = vpop.permute.xlu0 %3387
      %3391 = vset.pattern.permute.xlu0 0
      %3392 = vperm.xlu0 %3391, %v3198
      %v3393 = vpop.permute.xlu0 %3392
      %3396 = vset.pattern.permute.xlu0 0
      %3397 = vperm.xlu0 %3396, %v3199
      %v3398 = vpop.permute.xlu0 %3397
      %3401 = vset.pattern.permute.xlu0 0
      %3402 = vperm.xlu0 %3401, %v3200
      %v3403 = vpop.permute.xlu0 %3402
      %3406 = vset.pattern.permute.xlu0 0
      %3407 = vperm.xlu0 %3406, %v3201
      %v3408 = vpop.permute.xlu0 %3407
      %3411 = vset.pattern.permute.xlu0 0
      %3412 = vperm.xlu0 %3411, %v3202
      %v3413 = vpop.permute.xlu0 %3412
      %3416 = vset.pattern.permute.xlu0 0
      %3417 = vperm.xlu0 %3416, %v3203
      %v3418 = vpop.permute.xlu0 %3417
      %3421 = vset.pattern.permute.xlu0 0
      %3422 = vperm.xlu0 %3421, %v3204
      %v3423 = vpop.permute.xlu0 %3422
      %3426 = vset.pattern.permute.xlu0 0
      %3427 = vperm.xlu0 %3426, %v3205
      %v3428 = vpop.permute.xlu0 %3427
      %3431 = vset.pattern.permute.xlu0 0
      %3432 = vperm.xlu0 %3431, %v3206
      %v3433 = vpop.permute.xlu0 %3432
      %3436 = vset.pattern.permute.xlu0 0
      %3437 = vperm.xlu0 %3436, %v3207
      %v3438 = vpop.permute.xlu0 %3437
      %3441 = vset.pattern.permute.xlu0 0
      %3442 = vperm.xlu0 %3441, %v3208
      %v3443 = vpop.permute.xlu0 %3442
      %3446 = vset.pattern.permute.xlu0 0
      %3447 = vperm.xlu0 %3446, %v3209
      %v3448 = vpop.permute.xlu0 %3447
      %3451 = vset.pattern.permute.xlu0 0
      %3452 = vperm.xlu0 %3451, %v3210
      %v3453 = vpop.permute.xlu0 %3452
      %3456 = vset.pattern.permute.xlu0 0
      %3457 = vperm.xlu0 %3456, %v3211
      %v3458 = vpop.permute.xlu0 %3457
      %3461 = vset.pattern.permute.xlu0 0
      %3462 = vperm.xlu0 %3461, %v3212
      %v3463 = vpop.permute.xlu0 %3462
      %3466 = vset.pattern.permute.xlu0 0
      %3467 = vperm.xlu0 %3466, %v3213
      %v3468 = vpop.permute.xlu0 %3467
      %3471 = vset.pattern.permute.xlu0 0
      %3472 = vperm.xlu0 %3471, %v3214
      %v3473 = vpop.permute.xlu0 %3472
      %3476 = vset.pattern.permute.xlu0 0
      %3477 = vperm.xlu0 %3476, %v3215
      %v3478 = vpop.permute.xlu0 %3477
      %3481 = vset.pattern.permute.xlu0 0
      %3482 = vperm.xlu0 %3481, %v3216
      %v3483 = vpop.permute.xlu0 %3482
      %3486 = vset.pattern.permute.xlu0 0
      %3487 = vperm.xlu0 %3486, %v3217
      %v3488 = vpop.permute.xlu0 %3487
      %3491 = vset.pattern.permute.xlu0 0
      %3492 = vperm.xlu0 %3491, %v3218
      %v3493 = vpop.permute.xlu0 %3492
      %3496 = vset.pattern.permute.xlu0 0
      %3497 = vperm.xlu0 %3496, %v3219
      %v3498 = vpop.permute.xlu0 %3497
      %3501 = vset.pattern.permute.xlu0 0
      %3502 = vperm.xlu0 %3501, %v3220
      %v3503 = vpop.permute.xlu0 %3502
      %3506 = vset.pattern.permute.xlu0 0
      %3507 = vperm.xlu0 %3506, %v3221
      %v3508 = vpop.permute.xlu0 %3507
      %3511 = vset.pattern.permute.xlu0 0
      %3512 = vperm.xlu0 %3511, %v3222
      %v3513 = vpop.permute.xlu0 %3512
      %3516 = vset.pattern.permute.xlu0 0
      %3517 = vperm.xlu0 %3516, %v3223
      %v3518 = vpop.permute.xlu0 %3517
      %3521 = vset.pattern.permute.xlu0 0
      %3522 = vperm.xlu0 %3521, %v3224
      %v3523 = vpop.permute.xlu0 %3522
      %3526 = vset.pattern.permute.xlu0 0
      %3527 = vperm.xlu0 %3526, %v3225
      %v3528 = vpop.permute.xlu0 %3527
      %3531 = vset.pattern.permute.xlu0 0
      %3532 = vperm.xlu0 %3531, %v3226
      %v3533 = vpop.permute.xlu0 %3532
      %3536 = vset.pattern.permute.xlu0 0
      %3537 = vperm.xlu0 %3536, %v3227
      %v3538 = vpop.permute.xlu0 %3537
      %3541 = vset.pattern.permute.xlu0 0
      %3542 = vperm.xlu0 %3541, %v3228
      %v3543 = vpop.permute.xlu0 %3542
      %3546 = vset.pattern.permute.xlu0 0
      %3547 = vperm.xlu0 %3546, %v3229
      %v3548 = vpop.permute.xlu0 %3547
      %v3550 = vmul.f32 %v2912, %v3233
      %v3551 = vmul.f32 %v2915, %v3238
      %v3552 = vmul.f32 %v2920, %v3243
      %v3553 = vmul.f32 %v2923, %v3248
      %v3554 = vmul.f32 %v2928, %v3253
      %v3555 = vmul.f32 %v2931, %v3258
      %v3556 = vmul.f32 %v2936, %v3263
      %v3557 = vmul.f32 %v2939, %v3268
      %v3558 = vmul.f32 %v2944, %v3273
      %v3559 = vmul.f32 %v2947, %v3278
      %v3560 = vmul.f32 %v2952, %v3283
      %v3561 = vmul.f32 %v2955, %v3288
      %v3562 = vmul.f32 %v2960, %v3293
      %v3563 = vmul.f32 %v2963, %v3298
      %v3564 = vmul.f32 %v2968, %v3303
      %v3565 = vmul.f32 %v2971, %v3308
      %v3566 = vmul.f32 %v2976, %v3313
      %v3567 = vmul.f32 %v2979, %v3318
      %v3568 = vmul.f32 %v2984, %v3323
      %v3569 = vmul.f32 %v2987, %v3328
      %v3570 = vmul.f32 %v2992, %v3333
      %v3571 = vmul.f32 %v2995, %v3338
      %v3572 = vmul.f32 %v3000, %v3343
      %v3573 = vmul.f32 %v3003, %v3348
      %v3574 = vmul.f32 %v3008, %v3353
      %v3575 = vmul.f32 %v3011, %v3358
      %v3576 = vmul.f32 %v3016, %v3363
      %v3577 = vmul.f32 %v3019, %v3368
      %v3578 = vmul.f32 %v3024, %v3373
      %v3579 = vmul.f32 %v3027, %v3378
      %v3580 = vmul.f32 %v3032, %v3383
      %v3581 = vmul.f32 %v3035, %v3388
      %v3582 = vmul.f32 %v3040, %v3393
      %v3583 = vmul.f32 %v3043, %v3398
      %v3584 = vmul.f32 %v3048, %v3403
      %v3585 = vmul.f32 %v3051, %v3408
      %v3586 = vmul.f32 %v3056, %v3413
      %v3587 = vmul.f32 %v3059, %v3418
      %v3588 = vmul.f32 %v3064, %v3423
      %v3589 = vmul.f32 %v3067, %v3428
      %v3590 = vmul.f32 %v3072, %v3433
      %v3591 = vmul.f32 %v3075, %v3438
      %v3592 = vmul.f32 %v3080, %v3443
      %v3593 = vmul.f32 %v3083, %v3448
      %v3594 = vmul.f32 %v3088, %v3453
      %v3595 = vmul.f32 %v3091, %v3458
      %v3596 = vmul.f32 %v3096, %v3463
      %v3597 = vmul.f32 %v3099, %v3468
      %v3598 = vmul.f32 %v3104, %v3473
      %v3599 = vmul.f32 %v3107, %v3478
      %v3600 = vmul.f32 %v3112, %v3483
      %v3601 = vmul.f32 %v3115, %v3488
      %v3602 = vmul.f32 %v3120, %v3493
      %v3603 = vmul.f32 %v3123, %v3498
      %v3604 = vmul.f32 %v3128, %v3503
      %v3605 = vmul.f32 %v3131, %v3508
      %v3606 = vmul.f32 %v3136, %v3513
      %v3607 = vmul.f32 %v3139, %v3518
      %v3608 = vmul.f32 %v3144, %v3523
      %v3609 = vmul.f32 %v3147, %v3528
      %v3610 = vmul.f32 %v3152, %v3533
      %v3611 = vmul.f32 %v3155, %v3538
      %v3612 = vmul.f32 %v3160, %v3543
      %v3613 = vmul.f32 %v3163, %v3548
      %v3614 = vld [vmem:[%s3] sm:$0xff]
      %v3615 = vld [vmem:[%s3 + $0x8] sm:$0xff]
      %v3616 = vld [vmem:[%s3 + $0x10] sm:$0xff]
      %v3617 = vld [vmem:[%s3 + $0x18] sm:$0xff]
      %v3618 = vld [vmem:[%s3 + $0x20] sm:$0xff]
      %v3619 = vld [vmem:[%s3 + $0x28] sm:$0xff]
      %v3620 = vld [vmem:[%s3 + $0x30] sm:$0xff]
      %v3621 = vld [vmem:[%s3 + $0x38] sm:$0xff]
      %v3622 = vld [vmem:[%s3 + $0x40] sm:$0xff]
      %v3623 = vld [vmem:[%s3 + $0x48] sm:$0xff]
      %v3624 = vld [vmem:[%s3 + $0x50] sm:$0xff]
      %v3625 = vld [vmem:[%s3 + $0x58] sm:$0xff]
      %v3626 = vld [vmem:[%s3 + $0x60] sm:$0xff]
      %v3627 = vld [vmem:[%s3 + $0x68] sm:$0xff]
      %v3628 = vld [vmem:[%s3 + $0x70] sm:$0xff]
      %v3629 = vld [vmem:[%s3 + $0x78] sm:$0xff]
      %v3630 = vld [vmem:[%s3 + $0x80] sm:$0xff]
      %v3631 = vld [vmem:[%s3 + $0x88] sm:$0xff]
      %v3632 = vld [vmem:[%s3 + $0x90] sm:$0xff]
      %v3633 = vld [vmem:[%s3 + $0x98] sm:$0xff]
      %v3634 = vld [vmem:[%s3 + $0xa0] sm:$0xff]
      %v3635 = vld [vmem:[%s3 + $0xa8] sm:$0xff]
      %v3636 = vld [vmem:[%s3 + $0xb0] sm:$0xff]
      %v3637 = vld [vmem:[%s3 + $0xb8] sm:$0xff]
      %v3638 = vld [vmem:[%s3 + $0xc0] sm:$0xff]
      %v3639 = vld [vmem:[%s3 + $0xc8] sm:$0xff]
      %v3640 = vld [vmem:[%s3 + $0xd0] sm:$0xff]
      %v3641 = vld [vmem:[%s3 + $0xd8] sm:$0xff]
      %v3642 = vld [vmem:[%s3 + $0xe0] sm:$0xff]
      %v3643 = vld [vmem:[%s3 + $0xe8] sm:$0xff]
      %v3644 = vld [vmem:[%s3 + $0xf0] sm:$0xff]
      %v3645 = vld [vmem:[%s3 + $0xf8] sm:$0xff]
      %v3646 = vld [vmem:[%s3 + $0x100] sm:$0xff]
      %v3647 = vld [vmem:[%s3 + $0x108] sm:$0xff]
      %v3648 = vld [vmem:[%s3 + $0x110] sm:$0xff]
      %v3649 = vld [vmem:[%s3 + $0x118] sm:$0xff]
      %v3650 = vld [vmem:[%s3 + $0x120] sm:$0xff]
      %v3651 = vld [vmem:[%s3 + $0x128] sm:$0xff]
      %v3652 = vld [vmem:[%s3 + $0x130] sm:$0xff]
      %v3653 = vld [vmem:[%s3 + $0x138] sm:$0xff]
      %v3654 = vld [vmem:[%s3 + $0x140] sm:$0xff]
      %v3655 = vld [vmem:[%s3 + $0x148] sm:$0xff]
      %v3656 = vld [vmem:[%s3 + $0x150] sm:$0xff]
      %v3657 = vld [vmem:[%s3 + $0x158] sm:$0xff]
      %v3658 = vld [vmem:[%s3 + $0x160] sm:$0xff]
      %v3659 = vld [vmem:[%s3 + $0x168] sm:$0xff]
      %v3660 = vld [vmem:[%s3 + $0x170] sm:$0xff]
      %v3661 = vld [vmem:[%s3 + $0x178] sm:$0xff]
      %v3662 = vld [vmem:[%s3 + $0x180] sm:$0xff]
      %v3663 = vld [vmem:[%s3 + $0x188] sm:$0xff]
      %v3664 = vld [vmem:[%s3 + $0x190] sm:$0xff]
      %v3665 = vld [vmem:[%s3 + $0x198] sm:$0xff]
      %v3666 = vld [vmem:[%s3 + $0x1a0] sm:$0xff]
      %v3667 = vld [vmem:[%s3 + $0x1a8] sm:$0xff]
      %v3668 = vld [vmem:[%s3 + $0x1b0] sm:$0xff]
      %v3669 = vld [vmem:[%s3 + $0x1b8] sm:$0xff]
      %v3670 = vld [vmem:[%s3 + $0x1c0] sm:$0xff]
      %v3671 = vld [vmem:[%s3 + $0x1c8] sm:$0xff]
      %v3672 = vld [vmem:[%s3 + $0x1d0] sm:$0xff]
      %v3673 = vld [vmem:[%s3 + $0x1d8] sm:$0xff]
      %v3674 = vld [vmem:[%s3 + $0x1e0] sm:$0xff]
      %v3675 = vld [vmem:[%s3 + $0x1e8] sm:$0xff]
      %v3676 = vld [vmem:[%s3 + $0x1f0] sm:$0xff]
      %v3677 = vld [vmem:[%s3 + $0x1f8] sm:$0xff]
      %3679 = vset.pattern.permute.xlu0 0
      %3680 = vperm.xlu0 %3679, %v3614
      %v3681 = vpop.permute.xlu0 %3680
      %3684 = vset.pattern.permute.xlu0 0
      %3685 = vperm.xlu0 %3684, %v3615
      %v3686 = vpop.permute.xlu0 %3685
      %3689 = vset.pattern.permute.xlu0 0
      %3690 = vperm.xlu0 %3689, %v3616
      %v3691 = vpop.permute.xlu0 %3690
      %3694 = vset.pattern.permute.xlu0 0
      %3695 = vperm.xlu0 %3694, %v3617
      %v3696 = vpop.permute.xlu0 %3695
      %3699 = vset.pattern.permute.xlu0 0
      %3700 = vperm.xlu0 %3699, %v3618
      %v3701 = vpop.permute.xlu0 %3700
      %3704 = vset.pattern.permute.xlu0 0
      %3705 = vperm.xlu0 %3704, %v3619
      %v3706 = vpop.permute.xlu0 %3705
      %3709 = vset.pattern.permute.xlu0 0
      %3710 = vperm.xlu0 %3709, %v3620
      %v3711 = vpop.permute.xlu0 %3710
      %3714 = vset.pattern.permute.xlu0 0
      %3715 = vperm.xlu0 %3714, %v3621
      %v3716 = vpop.permute.xlu0 %3715
      %3719 = vset.pattern.permute.xlu0 0
      %3720 = vperm.xlu0 %3719, %v3622
      %v3721 = vpop.permute.xlu0 %3720
      %3724 = vset.pattern.permute.xlu0 0
      %3725 = vperm.xlu0 %3724, %v3623
      %v3726 = vpop.permute.xlu0 %3725
      %3729 = vset.pattern.permute.xlu0 0
      %3730 = vperm.xlu0 %3729, %v3624
      %v3731 = vpop.permute.xlu0 %3730
      %3734 = vset.pattern.permute.xlu0 0
      %3735 = vperm.xlu0 %3734, %v3625
      %v3736 = vpop.permute.xlu0 %3735
      %3739 = vset.pattern.permute.xlu0 0
      %3740 = vperm.xlu0 %3739, %v3626
      %v3741 = vpop.permute.xlu0 %3740
      %3744 = vset.pattern.permute.xlu0 0
      %3745 = vperm.xlu0 %3744, %v3627
      %v3746 = vpop.permute.xlu0 %3745
      %3749 = vset.pattern.permute.xlu0 0
      %3750 = vperm.xlu0 %3749, %v3628
      %v3751 = vpop.permute.xlu0 %3750
      %3754 = vset.pattern.permute.xlu0 0
      %3755 = vperm.xlu0 %3754, %v3629
      %v3756 = vpop.permute.xlu0 %3755
      %3759 = vset.pattern.permute.xlu0 0
      %3760 = vperm.xlu0 %3759, %v3630
      %v3761 = vpop.permute.xlu0 %3760
      %3764 = vset.pattern.permute.xlu0 0
      %3765 = vperm.xlu0 %3764, %v3631
      %v3766 = vpop.permute.xlu0 %3765
      %3769 = vset.pattern.permute.xlu0 0
      %3770 = vperm.xlu0 %3769, %v3632
      %v3771 = vpop.permute.xlu0 %3770
      %3774 = vset.pattern.permute.xlu0 0
      %3775 = vperm.xlu0 %3774, %v3633
      %v3776 = vpop.permute.xlu0 %3775
      %3779 = vset.pattern.permute.xlu0 0
      %3780 = vperm.xlu0 %3779, %v3634
      %v3781 = vpop.permute.xlu0 %3780
      %3784 = vset.pattern.permute.xlu0 0
      %3785 = vperm.xlu0 %3784, %v3635
      %v3786 = vpop.permute.xlu0 %3785
      %3789 = vset.pattern.permute.xlu0 0
      %3790 = vperm.xlu0 %3789, %v3636
      %v3791 = vpop.permute.xlu0 %3790
      %3794 = vset.pattern.permute.xlu0 0
      %3795 = vperm.xlu0 %3794, %v3637
      %v3796 = vpop.permute.xlu0 %3795
      %3799 = vset.pattern.permute.xlu0 0
      %3800 = vperm.xlu0 %3799, %v3638
      %v3801 = vpop.permute.xlu0 %3800
      %3804 = vset.pattern.permute.xlu0 0
      %3805 = vperm.xlu0 %3804, %v3639
      %v3806 = vpop.permute.xlu0 %3805
      %3809 = vset.pattern.permute.xlu0 0
      %3810 = vperm.xlu0 %3809, %v3640
      %v3811 = vpop.permute.xlu0 %3810
      %3814 = vset.pattern.permute.xlu0 0
      %3815 = vperm.xlu0 %3814, %v3641
      %v3816 = vpop.permute.xlu0 %3815
      %3819 = vset.pattern.permute.xlu0 0
      %3820 = vperm.xlu0 %3819, %v3642
      %v3821 = vpop.permute.xlu0 %3820
      %3824 = vset.pattern.permute.xlu0 0
      %3825 = vperm.xlu0 %3824, %v3643
      %v3826 = vpop.permute.xlu0 %3825
      %3829 = vset.pattern.permute.xlu0 0
      %3830 = vperm.xlu0 %3829, %v3644
      %v3831 = vpop.permute.xlu0 %3830
      %3834 = vset.pattern.permute.xlu0 0
      %3835 = vperm.xlu0 %3834, %v3645
      %v3836 = vpop.permute.xlu0 %3835
      %3839 = vset.pattern.permute.xlu0 0
      %3840 = vperm.xlu0 %3839, %v3646
      %v3841 = vpop.permute.xlu0 %3840
      %3844 = vset.pattern.permute.xlu0 0
      %3845 = vperm.xlu0 %3844, %v3647
      %v3846 = vpop.permute.xlu0 %3845
      %3849 = vset.pattern.permute.xlu0 0
      %3850 = vperm.xlu0 %3849, %v3648
      %v3851 = vpop.permute.xlu0 %3850
      %3854 = vset.pattern.permute.xlu0 0
      %3855 = vperm.xlu0 %3854, %v3649
      %v3856 = vpop.permute.xlu0 %3855
      %3859 = vset.pattern.permute.xlu0 0
      %3860 = vperm.xlu0 %3859, %v3650
      %v3861 = vpop.permute.xlu0 %3860
      %3864 = vset.pattern.permute.xlu0 0
      %3865 = vperm.xlu0 %3864, %v3651
      %v3866 = vpop.permute.xlu0 %3865
      %3869 = vset.pattern.permute.xlu0 0
      %3870 = vperm.xlu0 %3869, %v3652
      %v3871 = vpop.permute.xlu0 %3870
      %3874 = vset.pattern.permute.xlu0 0
      %3875 = vperm.xlu0 %3874, %v3653
      %v3876 = vpop.permute.xlu0 %3875
      %3879 = vset.pattern.permute.xlu0 0
      %3880 = vperm.xlu0 %3879, %v3654
      %v3881 = vpop.permute.xlu0 %3880
      %3884 = vset.pattern.permute.xlu0 0
      %3885 = vperm.xlu0 %3884, %v3655
      %v3886 = vpop.permute.xlu0 %3885
      %3889 = vset.pattern.permute.xlu0 0
      %3890 = vperm.xlu0 %3889, %v3656
      %v3891 = vpop.permute.xlu0 %3890
      %3894 = vset.pattern.permute.xlu0 0
      %3895 = vperm.xlu0 %3894, %v3657
      %v3896 = vpop.permute.xlu0 %3895
      %3899 = vset.pattern.permute.xlu0 0
      %3900 = vperm.xlu0 %3899, %v3658
      %v3901 = vpop.permute.xlu0 %3900
      %3904 = vset.pattern.permute.xlu0 0
      %3905 = vperm.xlu0 %3904, %v3659
      %v3906 = vpop.permute.xlu0 %3905
      %3909 = vset.pattern.permute.xlu0 0
      %3910 = vperm.xlu0 %3909, %v3660
      %v3911 = vpop.permute.xlu0 %3910
      %3914 = vset.pattern.permute.xlu0 0
      %3915 = vperm.xlu0 %3914, %v3661
      %v3916 = vpop.permute.xlu0 %3915
      %3919 = vset.pattern.permute.xlu0 0
      %3920 = vperm.xlu0 %3919, %v3662
      %v3921 = vpop.permute.xlu0 %3920
      %3924 = vset.pattern.permute.xlu0 0
      %3925 = vperm.xlu0 %3924, %v3663
      %v3926 = vpop.permute.xlu0 %3925
      %3929 = vset.pattern.permute.xlu0 0
      %3930 = vperm.xlu0 %3929, %v3664
      %v3931 = vpop.permute.xlu0 %3930
      %3934 = vset.pattern.permute.xlu0 0
      %3935 = vperm.xlu0 %3934, %v3665
      %v3936 = vpop.permute.xlu0 %3935
      %3939 = vset.pattern.permute.xlu0 0
      %3940 = vperm.xlu0 %3939, %v3666
      %v3941 = vpop.permute.xlu0 %3940
      %3944 = vset.pattern.permute.xlu0 0
      %3945 = vperm.xlu0 %3944, %v3667
      %v3946 = vpop.permute.xlu0 %3945
      %3949 = vset.pattern.permute.xlu0 0
      %3950 = vperm.xlu0 %3949, %v3668
      %v3951 = vpop.permute.xlu0 %3950
      %3954 = vset.pattern.permute.xlu0 0
      %3955 = vperm.xlu0 %3954, %v3669
      %v3956 = vpop.permute.xlu0 %3955
      %3959 = vset.pattern.permute.xlu0 0
      %3960 = vperm.xlu0 %3959, %v3670
      %v3961 = vpop.permute.xlu0 %3960
      %3964 = vset.pattern.permute.xlu0 0
      %3965 = vperm.xlu0 %3964, %v3671
      %v3966 = vpop.permute.xlu0 %3965
      %3969 = vset.pattern.permute.xlu0 0
      %3970 = vperm.xlu0 %3969, %v3672
      %v3971 = vpop.permute.xlu0 %3970
      %3974 = vset.pattern.permute.xlu0 0
      %3975 = vperm.xlu0 %3974, %v3673
      %v3976 = vpop.permute.xlu0 %3975
      %3979 = vset.pattern.permute.xlu0 0
      %3980 = vperm.xlu0 %3979, %v3674
      %v3981 = vpop.permute.xlu0 %3980
      %3984 = vset.pattern.permute.xlu0 0
      %3985 = vperm.xlu0 %3984, %v3675
      %v3986 = vpop.permute.xlu0 %3985
      %3989 = vset.pattern.permute.xlu0 0
      %3990 = vperm.xlu0 %3989, %v3676
      %v3991 = vpop.permute.xlu0 %3990
      %3994 = vset.pattern.permute.xlu0 0
      %3995 = vperm.xlu0 %3994, %v3677
      %v3996 = vpop.permute.xlu0 %3995
      %v3998 = vadd.f32 %v3550, %v3681
      %v3999 = vadd.f32 %v3551, %v3686
      %v4000 = vadd.f32 %v3552, %v3691
      %v4001 = vadd.f32 %v3553, %v3696
      %v4002 = vadd.f32 %v3554, %v3701
      %v4003 = vadd.f32 %v3555, %v3706
      %v4004 = vadd.f32 %v3556, %v3711
      %v4005 = vadd.f32 %v3557, %v3716
      %v4006 = vadd.f32 %v3558, %v3721
      %v4007 = vadd.f32 %v3559, %v3726
      %v4008 = vadd.f32 %v3560, %v3731
      %v4009 = vadd.f32 %v3561, %v3736
      %v4010 = vadd.f32 %v3562, %v3741
      %v4011 = vadd.f32 %v3563, %v3746
      %v4012 = vadd.f32 %v3564, %v3751
      %v4013 = vadd.f32 %v3565, %v3756
      %v4014 = vadd.f32 %v3566, %v3761
      %v4015 = vadd.f32 %v3567, %v3766
      %v4016 = vadd.f32 %v3568, %v3771
      %v4017 = vadd.f32 %v3569, %v3776
      %v4018 = vadd.f32 %v3570, %v3781
      %v4019 = vadd.f32 %v3571, %v3786
      %v4020 = vadd.f32 %v3572, %v3791
      %v4021 = vadd.f32 %v3573, %v3796
      %v4022 = vadd.f32 %v3574, %v3801
      %v4023 = vadd.f32 %v3575, %v3806
      %v4024 = vadd.f32 %v3576, %v3811
      %v4025 = vadd.f32 %v3577, %v3816
      %v4026 = vadd.f32 %v3578, %v3821
      %v4027 = vadd.f32 %v3579, %v3826
      %v4028 = vadd.f32 %v3580, %v3831
      %v4029 = vadd.f32 %v3581, %v3836
      %v4030 = vadd.f32 %v3582, %v3841
      %v4031 = vadd.f32 %v3583, %v3846
      %v4032 = vadd.f32 %v3584, %v3851
      %v4033 = vadd.f32 %v3585, %v3856
      %v4034 = vadd.f32 %v3586, %v3861
      %v4035 = vadd.f32 %v3587, %v3866
      %v4036 = vadd.f32 %v3588, %v3871
      %v4037 = vadd.f32 %v3589, %v3876
      %v4038 = vadd.f32 %v3590, %v3881
      %v4039 = vadd.f32 %v3591, %v3886
      %v4040 = vadd.f32 %v3592, %v3891
      %v4041 = vadd.f32 %v3593, %v3896
      %v4042 = vadd.f32 %v3594, %v3901
      %v4043 = vadd.f32 %v3595, %v3906
      %v4044 = vadd.f32 %v3596, %v3911
      %v4045 = vadd.f32 %v3597, %v3916
      %v4046 = vadd.f32 %v3598, %v3921
      %v4047 = vadd.f32 %v3599, %v3926
      %v4048 = vadd.f32 %v3600, %v3931
      %v4049 = vadd.f32 %v3601, %v3936
      %v4050 = vadd.f32 %v3602, %v3941
      %v4051 = vadd.f32 %v3603, %v3946
      %v4052 = vadd.f32 %v3604, %v3951
      %v4053 = vadd.f32 %v3605, %v3956
      %v4054 = vadd.f32 %v3606, %v3961
      %v4055 = vadd.f32 %v3607, %v3966
      %v4056 = vadd.f32 %v3608, %v3971
      %v4057 = vadd.f32 %v3609, %v3976
      %v4058 = vadd.f32 %v3610, %v3981
      %v4059 = vadd.f32 %v3611, %v3986
      %v4060 = vadd.f32 %v3612, %v3991
      %v4061 = vadd.f32 %v3613, %v3996
      %v4062 = vmax.f32 %v3998, 0.0
      %v4063 = vmax.f32 %v3999, 0.0
      %v4064 = vmax.f32 %v4000, 0.0
      %v4065 = vmax.f32 %v4001, 0.0
      %v4066 = vmax.f32 %v4002, 0.0
      %v4067 = vmax.f32 %v4003, 0.0
      %v4068 = vmax.f32 %v4004, 0.0
      %v4069 = vmax.f32 %v4005, 0.0
      %v4070 = vmax.f32 %v4006, 0.0
      %v4071 = vmax.f32 %v4007, 0.0
      %v4072 = vmax.f32 %v4008, 0.0
      %v4073 = vmax.f32 %v4009, 0.0
      %v4074 = vmax.f32 %v4010, 0.0
      %v4075 = vmax.f32 %v4011, 0.0
      %v4076 = vmax.f32 %v4012, 0.0
      %v4077 = vmax.f32 %v4013, 0.0
      %v4078 = vmax.f32 %v4014, 0.0
      %v4079 = vmax.f32 %v4015, 0.0
      %v4080 = vmax.f32 %v4016, 0.0
      %v4081 = vmax.f32 %v4017, 0.0
      %v4082 = vmax.f32 %v4018, 0.0
      %v4083 = vmax.f32 %v4019, 0.0
      %v4084 = vmax.f32 %v4020, 0.0
      %v4085 = vmax.f32 %v4021, 0.0
      %v4086 = vmax.f32 %v4022, 0.0
      %v4087 = vmax.f32 %v4023, 0.0
      %v4088 = vmax.f32 %v4024, 0.0
      %v4089 = vmax.f32 %v4025, 0.0
      %v4090 = vmax.f32 %v4026, 0.0
      %v4091 = vmax.f32 %v4027, 0.0
      %v4092 = vmax.f32 %v4028, 0.0
      %v4093 = vmax.f32 %v4029, 0.0
      %v4094 = vmax.f32 %v4030, 0.0
      %v4095 = vmax.f32 %v4031, 0.0
      %v4096 = vmax.f32 %v4032, 0.0
      %v4097 = vmax.f32 %v4033, 0.0
      %v4098 = vmax.f32 %v4034, 0.0
      %v4099 = vmax.f32 %v4035, 0.0
      %v4100 = vmax.f32 %v4036, 0.0
      %v4101 = vmax.f32 %v4037, 0.0
      %v4102 = vmax.f32 %v4038, 0.0
      %v4103 = vmax.f32 %v4039, 0.0
      %v4104 = vmax.f32 %v4040, 0.0
      %v4105 = vmax.f32 %v4041, 0.0
      %v4106 = vmax.f32 %v4042, 0.0
      %v4107 = vmax.f32 %v4043, 0.0
      %v4108 = vmax.f32 %v4044, 0.0
      %v4109 = vmax.f32 %v4045, 0.0
      %v4110 = vmax.f32 %v4046, 0.0
      %v4111 = vmax.f32 %v4047, 0.0
      %v4112 = vmax.f32 %v4048, 0.0
      %v4113 = vmax.f32 %v4049, 0.0
      %v4114 = vmax.f32 %v4050, 0.0
      %v4115 = vmax.f32 %v4051, 0.0
      %v4116 = vmax.f32 %v4052, 0.0
      %v4117 = vmax.f32 %v4053, 0.0
      %v4118 = vmax.f32 %v4054, 0.0
      %v4119 = vmax.f32 %v4055, 0.0
      %v4120 = vmax.f32 %v4056, 0.0
      %v4121 = vmax.f32 %v4057, 0.0
      %v4122 = vmax.f32 %v4058, 0.0
      %v4123 = vmax.f32 %v4059, 0.0
      %v4124 = vmax.f32 %v4060, 0.0
      %v4125 = vmax.f32 %v4061, 0.0
      %v4126 = vld [vmem:[%s4] sm:$0xff]
      %v4127 = vld [vmem:[%s4 + $0x8] sm:$0xff]
      %v4128 = vpack.c.bf16 %v4063, %v4062
      %v4129 = vpack.c.bf16 %v4065, %v4064
      %v4130 = vpack.c.bf16 %v4067, %v4066
      %v4131 = vpack.c.bf16 %v4069, %v4068
      %v4132 = vpack.c.bf16 %v4071, %v4070
      %v4133 = vpack.c.bf16 %v4073, %v4072
      %v4134 = vpack.c.bf16 %v4075, %v4074
      %v4135 = vpack.c.bf16 %v4077, %v4076
      %v4136 = vpack.c.bf16 %v4079, %v4078
      %v4137 = vpack.c.bf16 %v4081, %v4080
      %v4138 = vpack.c.bf16 %v4083, %v4082
      %v4139 = vpack.c.bf16 %v4085, %v4084
      %v4140 = vpack.c.bf16 %v4087, %v4086
      %v4141 = vpack.c.bf16 %v4089, %v4088
      %v4142 = vpack.c.bf16 %v4091, %v4090
      %v4143 = vpack.c.bf16 %v4093, %v4092
      %v4144 = vpack.c.bf16 %v4095, %v4094
      %v4145 = vpack.c.bf16 %v4097, %v4096
      %v4146 = vpack.c.bf16 %v4099, %v4098
      %v4147 = vpack.c.bf16 %v4101, %v4100
      %v4148 = vpack.c.bf16 %v4103, %v4102
      %v4149 = vpack.c.bf16 %v4105, %v4104
      %v4150 = vpack.c.bf16 %v4107, %v4106
      %v4151 = vpack.c.bf16 %v4109, %v4108
      %v4152 = vpack.c.bf16 %v4111, %v4110
      %v4153 = vpack.c.bf16 %v4113, %v4112
      %v4154 = vpack.c.bf16 %v4115, %v4114
      %v4155 = vpack.c.bf16 %v4117, %v4116
      %v4156 = vpack.c.bf16 %v4119, %v4118
      %v4157 = vpack.c.bf16 %v4121, %v4120
      %v4158 = vpack.c.bf16 %v4123, %v4122
      %v4159 = vpack.c.bf16 %v4125, %v4124
      %v4162 = vunpack.c.l.b16 %v4126
      %v4163 = vunpack.c.h.b16 %v4126
      %v4164 = vunpack.c.l.b16 %v4127
      %v4165 = vunpack.c.h.b16 %v4127
      %v4166 = vpack.c.b16 %v4162, %v4162
      %v4167 = vpack.c.b16 %v4163, %v4163
      %v4168 = vpack.c.b16 %v4164, %v4164
      %v4169 = vpack.c.b16 %v4165, %v4165
      %4174 = vmatprep.subr.bf16.mxu0 0
      %4175 = vmatpush1.bf16.msra.mxu0 %v4128
      %4176 = vmatprep.subr.bf16.mxu0 0
      %4177 = vmatpush1.bf16.msra.mxu0 %v4129
      %4178 = vmatprep.subr.bf16.mxu0 0
      %4179 = vmatpush1.bf16.msra.mxu0 %v4130
      %4180 = vmatprep.subr.bf16.mxu0 0
      %4181 = vmatpush1.bf16.msra.mxu0 %v4131
      %4182 = vmatprep.subr.bf16.mxu0 0
      %4183 = vmatpush1.bf16.msra.mxu0 %v4132
      %4184 = vmatprep.subr.bf16.mxu0 0
      %4185 = vmatpush1.bf16.msra.mxu0 %v4133
      %4186 = vmatprep.subr.bf16.mxu0 0
      %4187 = vmatpush1.bf16.msra.mxu0 %v4134
      %4188 = vmatprep.subr.bf16.mxu0 0
      %4189 = vmatpush1.bf16.msra.mxu0 %v4135
      %4190 = vmatprep.subr.bf16.mxu0 0
      %4191 = vmatpush1.bf16.msra.mxu0 %v4136
      %4192 = vmatprep.subr.bf16.mxu0 0
      %4193 = vmatpush1.bf16.msra.mxu0 %v4137
      %4194 = vmatprep.subr.bf16.mxu0 0
      %4195 = vmatpush1.bf16.msra.mxu0 %v4138
      %4196 = vmatprep.subr.bf16.mxu0 0
      %4197 = vmatpush1.bf16.msra.mxu0 %v4139
      %4198 = vmatprep.subr.bf16.mxu0 0
      %4199 = vmatpush1.bf16.msra.mxu0 %v4140
      %4200 = vmatprep.subr.bf16.mxu0 0
      %4201 = vmatpush1.bf16.msra.mxu0 %v4141
      %4202 = vmatprep.subr.bf16.mxu0 0
      %4203 = vmatpush1.bf16.msra.mxu0 %v4142
      %4204 = vmatprep.subr.bf16.mxu0 0
      %4205 = vmatpush1.bf16.msra.mxu0 %v4143
      %4206 = vmatprep.mubr.bf16.mxu0 %v4167
      %4207 = vmatmul.mubr.bf16.gmra.mrb[0].mxu0 %v4166
      %v4208 = vpop.f32.mrb[0].mxu0
      %v4209 = vadd.f32 0.0, %v4208
      %v4210 = vpop.f32.mrb[0].mxu0
      %v4211 = vpop.f32.mrb[0].mxu0
      %v4212 = vpop.f32.mrb[0].mxu0
      %4213 = vdwg.mxu0
      %4214 = vmatprep.subr.bf16.mxu0 0
      %4215 = vmatpush1.bf16.msra.mxu0 %v4144
      %4216 = vmatprep.subr.bf16.mxu0 0
      %4217 = vmatpush1.bf16.msra.mxu0 %v4145
      %4218 = vmatprep.subr.bf16.mxu0 0
      %4219 = vmatpush1.bf16.msra.mxu0 %v4146
      %4220 = vmatprep.subr.bf16.mxu0 0
      %4221 = vmatpush1.bf16.msra.mxu0 %v4147
      %4222 = vmatprep.subr.bf16.mxu0 0
      %4223 = vmatpush1.bf16.msra.mxu0 %v4148
      %4224 = vmatprep.subr.bf16.mxu0 0
      %4225 = vmatpush1.bf16.msra.mxu0 %v4149
      %4226 = vmatprep.subr.bf16.mxu0 0
      %4227 = vmatpush1.bf16.msra.mxu0 %v4150
      %4228 = vmatprep.subr.bf16.mxu0 0
      %4229 = vmatpush1.bf16.msra.mxu0 %v4151
      %4230 = vmatprep.subr.bf16.mxu0 0
      %4231 = vmatpush1.bf16.msra.mxu0 %v4152
      %4232 = vmatprep.subr.bf16.mxu0 0
      %4233 = vmatpush1.bf16.msra.mxu0 %v4153
      %4234 = vmatprep.subr.bf16.mxu0 0
      %4235 = vmatpush1.bf16.msra.mxu0 %v4154
      %4236 = vmatprep.subr.bf16.mxu0 0
      %4237 = vmatpush1.bf16.msra.mxu0 %v4155
      %4238 = vmatprep.subr.bf16.mxu0 0
      %4239 = vmatpush1.bf16.msra.mxu0 %v4156
      %4240 = vmatprep.subr.bf16.mxu0 0
      %4241 = vmatpush1.bf16.msra.mxu0 %v4157
      %4242 = vmatprep.subr.bf16.mxu0 0
      %4243 = vmatpush1.bf16.msra.mxu0 %v4158
      %4244 = vmatprep.subr.bf16.mxu0 0
      %4245 = vmatpush1.bf16.msra.mxu0 %v4159
      %4246 = vmatprep.mubr.bf16.mxu0 %v4169
      %4247 = vmatmul.mubr.bf16.gmra.mrb[0].mxu0 %v4168
      %v4248 = vpop.f32.mrb[0].mxu0
      %v4249 = vadd.f32 %v4209, %v4248
      %v4250 = vpop.f32.mrb[0].mxu0
      %v4251 = vpop.f32.mrb[0].mxu0
      %v4252 = vpop.f32.mrb[0].mxu0
      %4253 = vdwg.mxu0
      %v4254 = vld [vmem:[%s5] sm:$0x7]
      %4256 = vset.pattern.permute.xlu0 0
      %4257 = vperm.xlu0 %4256, %v4254
      %v4258 = vpop.permute.xlu0 %4257
      %v4260 = vadd.f32 %v4249, %v4258
      %vm4261 = vcmask 518144
      %4262 = vst.msk [vmem:[%s280] sm:$0x7] %vm4261, %v4260
      %p4263 = scmp.lt.s32.totalorder %s21, 1
      %s4264 = scalar_select %p4263, %s21, 1
      %p4265 = scmp.lt.s32.totalorder %s22, 0
      %s4266 = scalar_select %p4265, %s22, 0
      %s4267 = sadd.s32 %s4266, %s4264
      %s4268 = smul.addr %s4267, 4
      %s4269 = scalar_lea.vmem %s6, %s4268
      // Predicated region
      $region45: #{yolov10_head.1} parent=43 // pred_check
        %p4270 = pneg %p182
      $region46: #{yolov10_head.1} parent=43 // pred_check_branch
        %4272 = sbr.rel (%p4270) target = $region48
      $region47: #{yolov10_head.1} parent=43 // pred_region
        _
      $region48: #{yolov10_head.1} parent=43 // pred_fallthru
        _
    $region44: #{yolov10_head.1} parent=5 // pred_fallthru
      _
    %p4273 = scmp.le.s32.totalorder 2, %s12
    // Predicated region
    $region49: #{yolov10_head.1} parent=5 // pred_check
      %p4274 = pneg %p4273
    $region50: #{yolov10_head.1} parent=5 // pred_check_branch
      %4276 = sbr.rel (%p4274) target = $region52
    $region51: #{yolov10_head.1} parent=5 // pred_region
      %s4277 = ssub.s32 %s12, 2
      // Predicated region
      $region53: #{yolov10_head.1} parent=51 // pred_check
        %p4278 = pneg %p188
      $region54: #{yolov10_head.1} parent=51 // pred_check_branch
        %4280 = sbr.rel (%p4278) target = $region56
      $region55: #{yolov10_head.1} parent=51 // pred_region
        %p4281 = scmp.lt.s32.totalorder %s23, 1
        %s4282 = scalar_select %p4281, %s23, 1
        %p4283 = scmp.lt.s32.totalorder %s24, 0
        %s4284 = scalar_select %p4283, %s24, 0
        %s4285 = sadd.s32 %s4284, %s4282
        %s4286 = smul.addr %s4285, 4
        %s4287 = scalar_lea.vmem %s6, %s4286
      $region56: #{yolov10_head.1} parent=51 // pred_fallthru
        _
    $region52: #{yolov10_head.1} parent=5 // pred_fallthru
      _
  $region6: #{yolov10_head.1} parent=0 // loop_footer
    %s16 = sadd.s32 1, %s12
  $region7: #{yolov10_head.1} parent=0 // loop_footer_branch
    %11 = sbr.rel target = $region3
  $region8: #{yolov10_head.1} parent=0 // loop_exit
    _

</llo_original>
